<compile_context>
chip_gen: v5e
topology: v5e:2x2
jax: 0.10.0
libtpu: 0.0.40
codegen_flags: <defaults>
</compile_context>

<pallas_src>
import functools

import numpy as np

import jax
import jax.numpy as jnp
from jax import lax
from jax.experimental import pallas as pl
from jax.experimental.pallas import tpu as pltpu

EXPANSION = 1
HALO_BLK = 8      # extra source grid-rows fetched below each row tile (one 8-row block)
GPAD = 16         # zero halo rows at each end of the conv1-output scratch (bf16 aligned)


def _round_up(x, m):
    return ((x + m - 1) // m) * m


def _pick_tile_rows(ho):
    """Output rows per tile (multiple of 8): bigger tiles amortize the halo re-read."""
    if ho <= 16:
        return 8
    if ho <= 32:
        return 16
    return 32


# ----------------------------------------------------------------------------
# Fused BasicBlock kernel (one row tile per grid step)
# ----------------------------------------------------------------------------
def _basic_block_kernel(*refs, taps, gw, m1t, mo, gpad, sc_phase, sc_off, has_proj):
    """One row-tile of the BasicBlock.

    refs (inputs, output, scratch):
      srcA : (S, TR*GW, Cin)   bf16  flattened source grid rows [r0, r0+TR)
      srcB : (S, 8*GW, Cin)    bf16  flattened source grid rows [r0+TR, r0+TR+8)
      w1   : (9, Cin, C1)      bf16  conv1 taps, BN1 scale folded in
      b1   : (1, C1)           f32   BN1 bias
      w2   : (9, C1, C2)       bf16  conv2 taps, BN2 scale folded in
      [ws] : (Cin, C2)         bf16  1x1 projection shortcut (only if has_proj)
      bout : (1, C2)           f32   BN2 bias (+ shortcut BN bias)
      mask : (M1t, 1)          f32   1.0 on valid conv1-output positions of this tile
      o_ref: (TR*GW, C2)       bf16  dense full-pitch tile output
      buf  : (S, (TR+8)*GW, Cin) bf16 scratch: contiguous source tile
      g    : (2*GPAD + M1t, C1) bf16 scratch: conv1 output with zero halos
    """
    if has_proj:
        (srcA, srcB, w1, b1, w2, ws, bout, mask, o_ref, buf, g) = refs
    else:
        (srcA, srcB, w1, b1, w2, bout, mask, o_ref, buf, g) = refs
        ws = None

    f32 = jnp.float32
    n_a = srcA.shape[1]

    # ---- stage 0: stitch the two row blocks into one contiguous source tile ----
    buf[:, 0:n_a, :] = srcA[...]
    buf[:, n_a:, :] = srcB[...]

    # ---- stage 1: conv1 (+ folded BN1 scale) as 9 shifted GEMMs ----------------
    acc1 = None
    for t, (ph, off) in enumerate(taps):
        lhs = buf[ph, off:off + m1t, :]
        d = jnp.dot(lhs, w1[t], preferred_element_type=f32)
        acc1 = d if acc1 is None else acc1 + d

    # BN1 bias + ReLU; masked invalid rows/cols become conv2's zero padding.
    gval = (jnp.maximum(acc1 + b1[...], 0.0) * mask[...]).astype(g.dtype)

    # Zero only the small head/tail halos of g; the body is fully overwritten.
    g[0:gpad, :] = jnp.zeros((gpad, g.shape[1]), g.dtype)
    g[gpad + m1t:, :] = jnp.zeros((g.shape[0] - gpad - m1t, g.shape[1]), g.dtype)
    g[gpad:gpad + m1t, :] = gval

    # ---- stage 2: conv2 (+ folded BN2 scale): taps at offsets i*GW + j - 1 ------
    acc2 = None
    for t in range(9):
        i, j = t // 3, t % 3
        off = gpad + i * gw + j - 1
        lhs = g[off:off + mo, :]
        d = jnp.dot(lhs, w2[t], preferred_element_type=f32)
        acc2 = d if acc2 is None else acc2 + d

    # ---- shortcut: identity add or 1x1 projection GEMM --------------------------
    sc_lhs = buf[sc_phase, sc_off:sc_off + mo, :]
    if has_proj:
        sc = jnp.dot(sc_lhs, ws[...], preferred_element_type=f32)
    else:
        sc = sc_lhs.astype(f32)

    # ---- residual add + bias + final ReLU: one dense full-pitch store -----------
    o_ref[...] = jnp.maximum(acc2 + sc + bout[...], 0.0).astype(o_ref.dtype)


# ----------------------------------------------------------------------------
# Parameter init (random, eval-mode BN stats) and one-time preparation
# ----------------------------------------------------------------------------
def init_basic_block(key, in_planes, planes, stride):
    ks = jax.random.split(key, 6)

    def bn_init(k, c):
        k1, k2, k3, k4 = jax.random.split(k, 4)
        return dict(
            gamma=jax.random.uniform(k1, (c,), jnp.float32, 0.5, 1.5),
            beta=jax.random.normal(k2, (c,), jnp.float32) * 0.1,
            mean=jax.random.normal(k3, (c,), jnp.float32) * 0.1,
            var=jax.random.uniform(k4, (c,), jnp.float32, 0.5, 1.5),
        )

    def conv_init(k, kk, cin, cout):
        fan_in = kk * kk * cin
        return jax.random.normal(k, (kk, kk, cin, cout), jnp.float32) * (2.0 / fan_in) ** 0.5

    raw = dict(
        stride=stride,
        w1=conv_init(ks[0], 3, in_planes, planes),
        bn1=bn_init(ks[1], planes),
        w2=conv_init(ks[2], 3, planes, planes),
        bn2=bn_init(ks[3], planes),
        shortcut=None,
    )
    if stride != 1 or in_planes != EXPANSION * planes:
        raw['shortcut'] = dict(
            w=conv_init(ks[4], 1, in_planes, planes)[0, 0],     # (Cin, Cout)
            bn=bn_init(ks[5], planes),
        )
    return raw


def prepare_basic_block(raw):
    """Fold eval-mode BN into the conv weights (in f32, cast last) and lay the taps
    out as (9, K, C) bf16.  No channel padding; done once outside the forward path."""
    eps = 1e-5

    def fold(w, bn):
        s = bn['gamma'] / jnp.sqrt(bn['var'] + eps)
        return w * s, bn['beta'] - bn['mean'] * s

    cin, planes = raw['w1'].shape[2], raw['w1'].shape[3]
    w1, b1 = fold(raw['w1'], raw['bn1'])
    w2, b2 = fold(raw['w2'], raw['bn2'])

    prep = dict(
        stride=raw['stride'], in_planes=cin, planes=planes,
        w1=w1.reshape(9, cin, planes).astype(jnp.bfloat16),
        b1=b1.reshape(1, planes).astype(jnp.float32),
        w2=w2.reshape(9, planes, planes).astype(jnp.bfloat16),
    )
    if raw['shortcut'] is not None:
        ws, bs = fold(raw['shortcut']['w'], raw['shortcut']['bn'])
        prep['ws'] = ws.astype(jnp.bfloat16)                     # (Cin, planes)
        prep['bout'] = (b2 + bs).reshape(1, planes).astype(jnp.float32)
    else:
        prep['ws'] = None                                        # identity shortcut
        prep['bout'] = b2.reshape(1, planes).astype(jnp.float32)
    return prep


# ----------------------------------------------------------------------------
# Forward wrapper
# ----------------------------------------------------------------------------
def basic_block_forward(prep, x_nchw):
    """Apply one prepared BasicBlock to an NCHW f32 input; returns NCHW f32."""
    N, Cin, H, W = x_nchw.shape
    stride = prep['stride']
    planes = prep['planes']
    has_proj = prep['ws'] is not None
    assert stride in (1, 2), "ResNet BasicBlock only uses stride 1 or 2"
    assert Cin == prep['in_planes']
    # TODO(synk): training-mode BatchNorm (batch statistics + running-stat updates)
    # is not implemented; this is the eval-mode forward with BN folded into weights.
    # TODO(synk): chaining blocks in NHWC/bf16 (skipping the NCHW f32 round trip per
    # block) would cut HBM traffic further; NCHW f32 I/O kept to match the module spec.

    x = jnp.transpose(x_nchw, (0, 2, 3, 1)).astype(jnp.bfloat16)    # NHWC, bf16

    if stride == 1:
        Ho, Wo = H, W
        GW = _round_up(W + 2, 2)                 # grid pitch (even, >= Wo + 2)
        tr = _pick_tile_rows(Ho)
        RB = pl.cdiv(Ho, tr)
        GH = RB * tr + HALO_BLK
        # top pad 2, left pad 1 so that tile rb's taps start exactly at grid row rb*tr
        xe = jnp.pad(x, ((0, 0), (2, GH - 2 - H), (1, GW - 1 - W), (0, 0)))
        src = xe.reshape(N, 1, GH * GW, Cin)
        S = 1
        taps = tuple((0, i * GW + j) for i in range(3) for j in range(3))
        sc_phase, sc_off = 0, 2 * GW + 1          # shortcut reads x at the centre tap
    else:
        Hp, Wp = H + 2, W + 2
        Ho, Wo = (Hp - 3) // 2 + 1, (Wp - 3) // 2 + 1
        GW = _round_up(Wo + 2, 2)
        tr = _pick_tile_rows(Ho)
        RB = pl.cdiv(Ho, tr)
        GH = RB * tr + HALO_BLK
        xp1 = jnp.pad(x, ((0, 0), (1, 1), (1, 1), (0, 0)))
        phases = []
        for pi in range(2):                       # stride-2 phase grids (done once)
            for pj in range(2):
                ph = xp1[:, pi::2, pj::2, :]
                phases.append(jnp.pad(
                    ph, ((0, 0), (1, GH - 1 - ph.shape[1]), (0, GW - ph.shape[2]), (0, 0))))
        src = jnp.stack(phases, axis=1).reshape(N, 4, GH * GW, Cin)
        S = 4
        taps = tuple(((i % 2) * 2 + (j % 2), (i // 2) * GW + (j // 2))
                     for i in range(3) for j in range(3))
        sc_phase, sc_off = 3, GW                  # x[n, 2h, 2w] == phase(1,1)[n, h, w]

    M1t = (tr + 2) * GW           # conv1 rows per tile (incl. the +/-1 halo rows)
    Mo = tr * GW                  # output rows stored per tile (full pitch)

    # Static per-tile validity mask (1.0 on real output positions) - trace-time numpy.
    mask_np = np.zeros((RB, M1t, 1), np.float32)
    for rb in range(RB):
        for t in range(tr + 2):
            ho = rb * tr - 1 + t
            if 0 <= ho < Ho:
                mask_np[rb, t * GW:t * GW + Wo, 0] = 1.0
    mask = jnp.asarray(mask_np)

    kernel = functools.partial(
        _basic_block_kernel, taps=taps, gw=GW, m1t=M1t, mo=Mo, gpad=GPAD,
        sc_phase=sc_phase, sc_off=sc_off, has_proj=has_proj)

    flops = 2 * N * Ho * Wo * (9 * Cin * planes + 9 * planes * planes
                               + (Cin * planes if has_proj else 0))
    bytes_accessed = int(src.size * 2 * (1 + HALO_BLK / tr)            # A + halo reads
                         + (prep['w1'].size + prep['w2'].size) * 2
                         + mask_np.size * 4
                         + N * RB * Mo * planes * 2)                   # bf16 output
    cost = pl.CostEstimate(flops=flops, transcendentals=0, bytes_accessed=bytes_accessed)

    in_specs = [
        # tile body: source grid rows [rb*tr, (rb+1)*tr)
        pl.BlockSpec((None, S, tr * GW, Cin), lambda n, rb: (n, 0, rb, 0)),
        # halo: the next 8 source grid rows (recomputed conv1 halo lives here)
        pl.BlockSpec((None, S, HALO_BLK * GW, Cin),
                     lambda n, rb: (n, 0, (rb + 1) * (tr // HALO_BLK), 0)),
        pl.BlockSpec((9, Cin, planes), lambda n, rb: (0, 0, 0)),
        pl.BlockSpec((1, planes), lambda n, rb: (0, 0)),
        pl.BlockSpec((9, planes, planes), lambda n, rb: (0, 0, 0)),
    ]
    operands = [src, src, prep['w1'], prep['b1'], prep['w2']]
    if has_proj:
        in_specs.append(pl.BlockSpec((Cin, planes), lambda n, rb: (0, 0)))
        operands.append(prep['ws'])
    in_specs += [
        pl.BlockSpec((1, planes), lambda n, rb: (0, 0)),
        pl.BlockSpec((None, M1t, 1), lambda n, rb: (rb, 0, 0)),
    ]
    operands += [prep['bout'], mask]

    out = pl.pallas_call(
        kernel,
        out_shape=jax.ShapeDtypeStruct((N, RB * Mo, planes), jnp.bfloat16),
        grid_spec=pltpu.PrefetchScalarGridSpec(
            num_scalar_prefetch=0,
            grid=(N, RB),
            in_specs=in_specs,
            out_specs=pl.BlockSpec((None, Mo, planes), lambda n, rb: (n, rb, 0)),
            scratch_shapes=[
                pltpu.VMEM((S, (tr + HALO_BLK) * GW, Cin), jnp.bfloat16),   # source tile
                pltpu.VMEM((2 * GPAD + M1t, planes), jnp.bfloat16),         # conv1 output
            ],
        ),
        compiler_params=pltpu.CompilerParams(
            dimension_semantics=("parallel", "parallel"),
            vmem_limit_bytes=32 * 1024 * 1024,
        ),
        cost_estimate=cost,
    )(*operands)

    # Slice valid rows/cols and convert to NCHW f32 (single fused XLA copy).
    out = out.reshape(N, RB * tr, GW, planes)[:, :Ho, :Wo, :]
    return jnp.transpose(out, (0, 3, 1, 2)).astype(jnp.float32)


# ----------------------------------------------------------------------------
# Pure-JAX f32 reference (eval-mode BN) for a numerical sanity check
# ----------------------------------------------------------------------------
def basic_block_reference(raw, x_nchw):
    eps = 1e-5
    x = jnp.transpose(x_nchw, (0, 2, 3, 1)).astype(jnp.float32)

    def conv(v, w, stride, pad):
        return lax.conv_general_dilated(
            v, w, (stride, stride), [(pad, pad), (pad, pad)],
            dimension_numbers=('NHWC', 'HWIO', 'NHWC'))

    def bn(v, p):
        s = p['gamma'] / jnp.sqrt(p['var'] + eps)
        return v * s + (p['beta'] - p['mean'] * s)

    out = jax.nn.relu(bn(conv(x, raw['w1'], raw['stride'], 1), raw['bn1']))
    out = bn(conv(out, raw['w2'], 1, 1), raw['bn2'])
    if raw['shortcut'] is not None:
        wsc = raw['shortcut']['w'][None, None]                 # (1,1,Cin,Cout)
        sc = bn(conv(x, wsc, raw['stride'], 0), raw['shortcut']['bn'])
    else:
        sc = x
    out = jax.nn.relu(out + sc)
    return jnp.transpose(out, (0, 3, 1, 2))


if __name__ == "__main__":
    key = jax.random.PRNGKey(0)
    k_x, k_b1, k_b2 = jax.random.split(key, 3)

    # Small CIFAR-ish shapes: batch=2, 64 channels, 16x16 spatial.
    x = jax.random.normal(k_x, (2, 64, 16, 16), jnp.float32)

    # Block 1: stride 1, identity shortcut (64 -> 64); exercises 2 row tiles per image.
    raw1 = init_basic_block(k_b1, 64, 64, stride=1)
    # Block 2: stride 2, 1x1 projection shortcut (64 -> 128).
    raw2 = init_basic_block(k_b2, 64, 128, stride=2)
    prep1 = prepare_basic_block(raw1)
    prep2 = prepare_basic_block(raw2)

    y1 = basic_block_forward(prep1, x)
    y2 = basic_block_forward(prep2, y1)
    jax.block_until_ready(y2)

    assert y1.shape == (2, 64, 16, 16) and y1.dtype == jnp.float32
    assert y2.shape == (2, 128, 8, 8) and y2.dtype == jnp.float32

    # Numerical sanity vs the f32 reference (kernel runs bf16 GEMMs / bf16 output).
    r1 = basic_block_reference(raw1, x)
    r2 = basic_block_reference(raw2, y1)
    e1 = float(jnp.max(jnp.abs(y1 - r1))) / (float(jnp.max(jnp.abs(r1))) + 1e-6)
    e2 = float(jnp.max(jnp.abs(y2 - r2))) / (float(jnp.max(jnp.abs(r2))) + 1e-6)
    assert e1 < 0.1 and e2 < 0.1, f"kernel/reference mismatch: {e1}, {e2}"

    print("KERNEL_OK")
</pallas_src>

<mosaic_0001>
module attributes {stable_mosaic.version = 11 : i64} {
  func.func @_basic_block_kernel(%arg0: i32, %arg1: i32, %arg2: memref<1x1x144x64xbf16, #tpu.memory_space<vmem>>, %arg3: memref<1x1x144x64xbf16, #tpu.memory_space<vmem>>, %arg4: memref<9x64x64xbf16, #tpu.memory_space<vmem>>, %arg5: memref<1x64xf32, #tpu.memory_space<vmem>>, %arg6: memref<9x64x64xbf16, #tpu.memory_space<vmem>>, %arg7: memref<1x64xf32, #tpu.memory_space<vmem>>, %arg8: memref<1x180x1xf32, #tpu.memory_space<vmem>>, %arg9: memref<1x144x64xbf16, #tpu.memory_space<vmem>>, %arg10: memref<1x288x64xbf16, #tpu.memory_space<vmem>>, %arg11: memref<212x64xbf16, #tpu.memory_space<vmem>>) attributes {dimension_semantics = [#tpu.dimension_semantics<parallel>, #tpu.dimension_semantics<parallel>], iteration_bounds = array<i64: 2, 2>, scalar_prefetch = 0 : i64, scratch_operands = 2 : i64, tpu.core_type = #tpu.core_type<tc>, window_params = [{transform_indices = @transform_0, window_bounds = array<i64: 1, 1, 144, 64>}, {transform_indices = @transform_1, window_bounds = array<i64: 1, 1, 144, 64>}, {pipeline_mode = #tpu.pipeline_mode<synchronous>, transform_indices = @transform_2, window_bounds = array<i64: 9, 64, 64>}, {pipeline_mode = #tpu.pipeline_mode<synchronous>, transform_indices = @transform_3, window_bounds = array<i64: 1, 64>}, {pipeline_mode = #tpu.pipeline_mode<synchronous>, transform_indices = @transform_4, window_bounds = array<i64: 9, 64, 64>}, {pipeline_mode = #tpu.pipeline_mode<synchronous>, transform_indices = @transform_5, window_bounds = array<i64: 1, 64>}, {transform_indices = @transform_6, window_bounds = array<i64: 1, 180, 1>}, {transform_indices = @transform_7, window_bounds = array<i64: 1, 144, 64>}]} {
    %c0 = arith.constant 0 : index
    %c0_0 = arith.constant 0 : index
    %c0_1 = arith.constant 0 : index
    %c0_2 = arith.constant 0 : index
    %0 = vector.load %arg2[%c0, %c0_0, %c0_1, %c0_2] : memref<1x1x144x64xbf16, #tpu.memory_space<vmem>>, vector<1x1x144x64xbf16>
    %1 = vector.shape_cast %0 : vector<1x1x144x64xbf16> to vector<1x144x64xbf16>
    %c0_3 = arith.constant 0 : index
    %c0_4 = arith.constant 0 : index
    %c0_5 = arith.constant 0 : index
    %2 = vector.load %arg10[%c0_3, %c0_4, %c0_5] : memref<1x288x64xbf16, #tpu.memory_space<vmem>>, vector<1x144x64xbf16>
    tpu.vector_store %arg10[%c0_3, %c0_4, %c0_5], %1 {strides = array<i32>} : memref<1x288x64xbf16, #tpu.memory_space<vmem>>, vector<1x144x64xbf16>,
    %c0_6 = arith.constant 0 : index
    %c0_7 = arith.constant 0 : index
    %c0_8 = arith.constant 0 : index
    %c0_9 = arith.constant 0 : index
    %3 = vector.load %arg3[%c0_6, %c0_7, %c0_8, %c0_9] : memref<1x1x144x64xbf16, #tpu.memory_space<vmem>>, vector<1x1x144x64xbf16>
    %4 = vector.shape_cast %3 : vector<1x1x144x64xbf16> to vector<1x144x64xbf16>
    %c0_10 = arith.constant 0 : index
    %c144 = arith.constant 144 : index
    %c0_11 = arith.constant 0 : index
    %5 = vector.load %arg10[%c0_10, %c144, %c0_11] : memref<1x288x64xbf16, #tpu.memory_space<vmem>>, vector<1x144x64xbf16>
    tpu.vector_store %arg10[%c0_10, %c144, %c0_11], %4 {strides = array<i32>} : memref<1x288x64xbf16, #tpu.memory_space<vmem>>, vector<1x144x64xbf16>,
    %c0_12 = arith.constant 0 : index
    %c0_13 = arith.constant 0 : index
    %c0_14 = arith.constant 0 : index
    %6 = vector.load %arg10[%c0_12, %c0_13, %c0_14] : memref<1x288x64xbf16, #tpu.memory_space<vmem>>, vector<1x180x64xbf16>
    %7 = vector.shape_cast %6 : vector<1x180x64xbf16> to vector<180x64xbf16>
    %c0_15 = arith.constant 0 : index
    %c0_16 = arith.constant 0 : index
    %c0_17 = arith.constant 0 : index
    %8 = vector.load %arg4[%c0_15, %c0_16, %c0_17] : memref<9x64x64xbf16, #tpu.memory_space<vmem>>, vector<1x64x64xbf16>
    %9 = vector.shape_cast %8 : vector<1x64x64xbf16> to vector<64x64xbf16>
    %cst = arith.constant dense<0.000000e+00> : vector<180x64xf32>
    %10 = tpu.matmul %7, %9, %cst {dimension_numbers = #tpu.dot_dimension_numbers<[1], [0], [0], [1], [0, 0, 1, 1], [], []>} : vector<180x64xbf16>, vector<64x64xbf16>, vector<180x64xf32> -> vector<180x64xf32>
    %c0_18 = arith.constant 0 : index
    %c1 = arith.constant 1 : index
    %c0_19 = arith.constant 0 : index
    %11 = vector.load %arg10[%c0_18, %c1, %c0_19] : memref<1x288x64xbf16, #tpu.memory_space<vmem>>, vector<1x180x64xbf16>
    %12 = vector.shape_cast %11 : vector<1x180x64xbf16> to vector<180x64xbf16>
    %c1_20 = arith.constant 1 : index
    %c0_21 = arith.constant 0 : index
    %c0_22 = arith.constant 0 : index
    %13 = vector.load %arg4[%c1_20, %c0_21, %c0_22] : memref<9x64x64xbf16, #tpu.memory_space<vmem>>, vector<1x64x64xbf16>
    %14 = vector.shape_cast %13 : vector<1x64x64xbf16> to vector<64x64xbf16>
    %cst_23 = arith.constant dense<0.000000e+00> : vector<180x64xf32>
    %15 = tpu.matmul %12, %14, %cst_23 {dimension_numbers = #tpu.dot_dimension_numbers<[1], [0], [0], [1], [0, 0, 1, 1], [], []>} : vector<180x64xbf16>, vector<64x64xbf16>, vector<180x64xf32> -> vector<180x64xf32>
    %16 = arith.addf %10, %15 : vector<180x64xf32>
    %c0_24 = arith.constant 0 : index
    %c2 = arith.constant 2 : index
    %c0_25 = arith.constant 0 : index
    %17 = vector.load %arg10[%c0_24, %c2, %c0_25] : memref<1x288x64xbf16, #tpu.memory_space<vmem>>, vector<1x180x64xbf16>
    %18 = vector.shape_cast %17 : vector<1x180x64xbf16> to vector<180x64xbf16>
    %c2_26 = arith.constant 2 : index
    %c0_27 = arith.constant 0 : index
    %c0_28 = arith.constant 0 : index
    %19 = vector.load %arg4[%c2_26, %c0_27, %c0_28] : memref<9x64x64xbf16, #tpu.memory_space<vmem>>, vector<1x64x64xbf16>
    %20 = vector.shape_cast %19 : vector<1x64x64xbf16> to vector<64x64xbf16>
    %cst_29 = arith.constant dense<0.000000e+00> : vector<180x64xf32>
    %21 = tpu.matmul %18, %20, %cst_29 {dimension_numbers = #tpu.dot_dimension_numbers<[1], [0], [0], [1], [0, 0, 1, 1], [], []>} : vector<180x64xbf16>, vector<64x64xbf16>, vector<180x64xf32> -> vector<180x64xf32>
    %22 = arith.addf %16, %21 : vector<180x64xf32>
    %c0_30 = arith.constant 0 : index
    %c18 = arith.constant 18 : index
    %c0_31 = arith.constant 0 : index
    %23 = vector.load %arg10[%c0_30, %c18, %c0_31] : memref<1x288x64xbf16, #tpu.memory_space<vmem>>, vector<1x180x64xbf16>
    %24 = vector.shape_cast %23 : vector<1x180x64xbf16> to vector<180x64xbf16>
    %c3 = arith.constant 3 : index
    %c0_32 = arith.constant 0 : index
    %c0_33 = arith.constant 0 : index
    %25 = vector.load %arg4[%c3, %c0_32, %c0_33] : memref<9x64x64xbf16, #tpu.memory_space<vmem>>, vector<1x64x64xbf16>
    %26 = vector.shape_cast %25 : vector<1x64x64xbf16> to vector<64x64xbf16>
    %cst_34 = arith.constant dense<0.000000e+00> : vector<180x64xf32>
    %27 = tpu.matmul %24, %26, %cst_34 {dimension_numbers = #tpu.dot_dimension_numbers<[1], [0], [0], [1], [0, 0, 1, 1], [], []>} : vector<180x64xbf16>, vector<64x64xbf16>, vector<180x64xf32> -> vector<180x64xf32>
    %28 = arith.addf %22, %27 : vector<180x64xf32>
    %c0_35 = arith.constant 0 : index
    %c19 = arith.constant 19 : index
    %c0_36 = arith.constant 0 : index
    %29 = vector.load %arg10[%c0_35, %c19, %c0_36] : memref<1x288x64xbf16, #tpu.memory_space<vmem>>, vector<1x180x64xbf16>
    %30 = vector.shape_cast %29 : vector<1x180x64xbf16> to vector<180x64xbf16>
    %c4 = arith.constant 4 : index
    %c0_37 = arith.constant 0 : index
    %c0_38 = arith.constant 0 : index
    %31 = vector.load %arg4[%c4, %c0_37, %c0_38] : memref<9x64x64xbf16, #tpu.memory_space<vmem>>, vector<1x64x64xbf16>
    %32 = vector.shape_cast %31 : vector<1x64x64xbf16> to vector<64x64xbf16>
    %cst_39 = arith.constant dense<0.000000e+00> : vector<180x64xf32>
    %33 = tpu.matmul %30, %32, %cst_39 {dimension_numbers = #tpu.dot_dimension_numbers<[1], [0], [0], [1], [0, 0, 1, 1], [], []>} : vector<180x64xbf16>, vector<64x64xbf16>, vector<180x64xf32> -> vector<180x64xf32>
    %34 = arith.addf %28, %33 : vector<180x64xf32>
    %c0_40 = arith.constant 0 : index
    %c20 = arith.constant 20 : index
    %c0_41 = arith.constant 0 : index
    %35 = vector.load %arg10[%c0_40, %c20, %c0_41] : memref<1x288x64xbf16, #tpu.memory_space<vmem>>, vector<1x180x64xbf16>
    %36 = vector.shape_cast %35 : vector<1x180x64xbf16> to vector<180x64xbf16>
    %c5 = arith.constant 5 : index
    %c0_42 = arith.constant 0 : index
    %c0_43 = arith.constant 0 : index
    %37 = vector.load %arg4[%c5, %c0_42, %c0_43] : memref<9x64x64xbf16, #tpu.memory_space<vmem>>, vector<1x64x64xbf16>
    %38 = vector.shape_cast %37 : vector<1x64x64xbf16> to vector<64x64xbf16>
    %cst_44 = arith.constant dense<0.000000e+00> : vector<180x64xf32>
    %39 = tpu.matmul %36, %38, %cst_44 {dimension_numbers = #tpu.dot_dimension_numbers<[1], [0], [0], [1], [0, 0, 1, 1], [], []>} : vector<180x64xbf16>, vector<64x64xbf16>, vector<180x64xf32> -> vector<180x64xf32>
    %40 = arith.addf %34, %39 : vector<180x64xf32>
    %c0_45 = arith.constant 0 : index
    %c36 = arith.constant 36 : index
    %c0_46 = arith.constant 0 : index
    %41 = vector.load %arg10[%c0_45, %c36, %c0_46] : memref<1x288x64xbf16, #tpu.memory_space<vmem>>, vector<1x180x64xbf16>
    %42 = vector.shape_cast %41 : vector<1x180x64xbf16> to vector<180x64xbf16>
    %c6 = arith.constant 6 : index
    %c0_47 = arith.constant 0 : index
    %c0_48 = arith.constant 0 : index
    %43 = vector.load %arg4[%c6, %c0_47, %c0_48] : memref<9x64x64xbf16, #tpu.memory_space<vmem>>, vector<1x64x64xbf16>
    %44 = vector.shape_cast %43 : vector<1x64x64xbf16> to vector<64x64xbf16>
    %cst_49 = arith.constant dense<0.000000e+00> : vector<180x64xf32>
    %45 = tpu.matmul %42, %44, %cst_49 {dimension_numbers = #tpu.dot_dimension_numbers<[1], [0], [0], [1], [0, 0, 1, 1], [], []>} : vector<180x64xbf16>, vector<64x64xbf16>, vector<180x64xf32> -> vector<180x64xf32>
    %46 = arith.addf %40, %45 : vector<180x64xf32>
    %c0_50 = arith.constant 0 : index
    %c37 = arith.constant 37 : index
    %c0_51 = arith.constant 0 : index
    %47 = vector.load %arg10[%c0_50, %c37, %c0_51] : memref<1x288x64xbf16, #tpu.memory_space<vmem>>, vector<1x180x64xbf16>
    %48 = vector.shape_cast %47 : vector<1x180x64xbf16> to vector<180x64xbf16>
    %c7 = arith.constant 7 : index
    %c0_52 = arith.constant 0 : index
    %c0_53 = arith.constant 0 : index
    %49 = vector.load %arg4[%c7, %c0_52, %c0_53] : memref<9x64x64xbf16, #tpu.memory_space<vmem>>, vector<1x64x64xbf16>
    %50 = vector.shape_cast %49 : vector<1x64x64xbf16> to vector<64x64xbf16>
    %cst_54 = arith.constant dense<0.000000e+00> : vector<180x64xf32>
    %51 = tpu.matmul %48, %50, %cst_54 {dimension_numbers = #tpu.dot_dimension_numbers<[1], [0], [0], [1], [0, 0, 1, 1], [], []>} : vector<180x64xbf16>, vector<64x64xbf16>, vector<180x64xf32> -> vector<180x64xf32>
    %52 = arith.addf %46, %51 : vector<180x64xf32>
    %c0_55 = arith.constant 0 : index
    %c38 = arith.constant 38 : index
    %c0_56 = arith.constant 0 : index
    %53 = vector.load %arg10[%c0_55, %c38, %c0_56] : memref<1x288x64xbf16, #tpu.memory_space<vmem>>, vector<1x180x64xbf16>
    %54 = vector.shape_cast %53 : vector<1x180x64xbf16> to vector<180x64xbf16>
    %c8 = arith.constant 8 : index
    %c0_57 = arith.constant 0 : index
    %c0_58 = arith.constant 0 : index
    %55 = vector.load %arg4[%c8, %c0_57, %c0_58] : memref<9x64x64xbf16, #tpu.memory_space<vmem>>, vector<1x64x64xbf16>
    %56 = vector.shape_cast %55 : vector<1x64x64xbf16> to vector<64x64xbf16>
    %cst_59 = arith.constant dense<0.000000e+00> : vector<180x64xf32>
    %57 = tpu.matmul %54, %56, %cst_59 {dimension_numbers = #tpu.dot_dimension_numbers<[1], [0], [0], [1], [0, 0, 1, 1], [], []>} : vector<180x64xbf16>, vector<64x64xbf16>, vector<180x64xf32> -> vector<180x64xf32>
    %58 = arith.addf %52, %57 : vector<180x64xf32>
    %c0_60 = arith.constant 0 : index
    %c0_61 = arith.constant 0 : index
    %59 = vector.load %arg5[%c0_60, %c0_61] : memref<1x64xf32, #tpu.memory_space<vmem>>, vector<1x64xf32>
    %60 = vector.broadcast %59 : vector<1x64xf32> to vector<180x64xf32>
    %61 = arith.addf %58, %60 : vector<180x64xf32>
    %cst_62 = arith.constant 0.000000e+00 : f32
    %62 = vector.broadcast %cst_62 : f32 to vector<180x64xf32>
    %63 = arith.maximumf %61, %62 : vector<180x64xf32>
    %c0_63 = arith.constant 0 : index
    %c0_64 = arith.constant 0 : index
    %c0_65 = arith.constant 0 : index
    %64 = vector.load %arg8[%c0_63, %c0_64, %c0_65] : memref<1x180x1xf32, #tpu.memory_space<vmem>>, vector<1x180x1xf32>
    %65 = vector.shape_cast %64 : vector<1x180x1xf32> to vector<180x1xf32>
    %66 = vector.broadcast %65 : vector<180x1xf32> to vector<180x64xf32>
    %67 = arith.mulf %63, %66 : vector<180x64xf32>
    %68 = arith.truncf %67 : vector<180x64xf32> to vector<180x64xbf16>
    %cst_66 = arith.constant 0.000000e+00 : bf16
    %69 = vector.broadcast %cst_66 : bf16 to vector<16x64xbf16>
    %c0_67 = arith.constant 0 : index
    %c0_68 = arith.constant 0 : index
    %70 = vector.load %arg11[%c0_67, %c0_68] : memref<212x64xbf16, #tpu.memory_space<vmem>>, vector<16x64xbf16>
    tpu.vector_store %arg11[%c0_67, %c0_68], %69 {strides = array<i32>} : memref<212x64xbf16, #tpu.memory_space<vmem>>, vector<16x64xbf16>,
    %cst_69 = arith.constant 0.000000e+00 : bf16
    %71 = vector.broadcast %cst_69 : bf16 to vector<16x64xbf16>
    %c196 = arith.constant 196 : index
    %c0_70 = arith.constant 0 : index
    %72 = vector.load %arg11[%c196, %c0_70] : memref<212x64xbf16, #tpu.memory_space<vmem>>, vector<16x64xbf16>
    tpu.vector_store %arg11[%c196, %c0_70], %71 {strides = array<i32>} : memref<212x64xbf16, #tpu.memory_space<vmem>>, vector<16x64xbf16>,
    %c16 = arith.constant 16 : index
    %c0_71 = arith.constant 0 : index
    %73 = vector.load %arg11[%c16, %c0_71] : memref<212x64xbf16, #tpu.memory_space<vmem>>, vector<180x64xbf16>
    tpu.vector_store %arg11[%c16, %c0_71], %68 {strides = array<i32>} : memref<212x64xbf16, #tpu.memory_space<vmem>>, vector<180x64xbf16>,
    %c15 = arith.constant 15 : index
    %c0_72 = arith.constant 0 : index
    %74 = vector.load %arg11[%c15, %c0_72] : memref<212x64xbf16, #tpu.memory_space<vmem>>, vector<144x64xbf16>
    %c0_73 = arith.constant 0 : index
    %c0_74 = arith.constant 0 : index
    %c0_75 = arith.constant 0 : index
    %75 = vector.load %arg6[%c0_73, %c0_74, %c0_75] : memref<9x64x64xbf16, #tpu.memory_space<vmem>>, vector<1x64x64xbf16>
    %76 = vector.shape_cast %75 : vector<1x64x64xbf16> to vector<64x64xbf16>
    %cst_76 = arith.constant dense<0.000000e+00> : vector<144x64xf32>
    %77 = tpu.matmul %74, %76, %cst_76 {dimension_numbers = #tpu.dot_dimension_numbers<[1], [0], [0], [1], [0, 0, 1, 1], [], []>} : vector<144x64xbf16>, vector<64x64xbf16>, vector<144x64xf32> -> vector<144x64xf32>
    %c16_77 = arith.constant 16 : index
    %c0_78 = arith.constant 0 : index
    %78 = vector.load %arg11[%c16_77, %c0_78] : memref<212x64xbf16, #tpu.memory_space<vmem>>, vector<144x64xbf16>
    %c1_79 = arith.constant 1 : index
    %c0_80 = arith.constant 0 : index
    %c0_81 = arith.constant 0 : index
    %79 = vector.load %arg6[%c1_79, %c0_80, %c0_81] : memref<9x64x64xbf16, #tpu.memory_space<vmem>>, vector<1x64x64xbf16>
    %80 = vector.shape_cast %79 : vector<1x64x64xbf16> to vector<64x64xbf16>
    %cst_82 = arith.constant dense<0.000000e+00> : vector<144x64xf32>
    %81 = tpu.matmul %78, %80, %cst_82 {dimension_numbers = #tpu.dot_dimension_numbers<[1], [0], [0], [1], [0, 0, 1, 1], [], []>} : vector<144x64xbf16>, vector<64x64xbf16>, vector<144x64xf32> -> vector<144x64xf32>
    %82 = arith.addf %77, %81 : vector<144x64xf32>
    %c17 = arith.constant 17 : index
    %c0_83 = arith.constant 0 : index
    %83 = vector.load %arg11[%c17, %c0_83] : memref<212x64xbf16, #tpu.memory_space<vmem>>, vector<144x64xbf16>
    %c2_84 = arith.constant 2 : index
    %c0_85 = arith.constant 0 : index
    %c0_86 = arith.constant 0 : index
    %84 = vector.load %arg6[%c2_84, %c0_85, %c0_86] : memref<9x64x64xbf16, #tpu.memory_space<vmem>>, vector<1x64x64xbf16>
    %85 = vector.shape_cast %84 : vector<1x64x64xbf16> to vector<64x64xbf16>
    %cst_87 = arith.constant dense<0.000000e+00> : vector<144x64xf32>
    %86 = tpu.matmul %83, %85, %cst_87 {dimension_numbers = #tpu.dot_dimension_numbers<[1], [0], [0], [1], [0, 0, 1, 1], [], []>} : vector<144x64xbf16>, vector<64x64xbf16>, vector<144x64xf32> -> vector<144x64xf32>
    %87 = arith.addf %82, %86 : vector<144x64xf32>
    %c33 = arith.constant 33 : index
    %c0_88 = arith.constant 0 : index
    %88 = vector.load %arg11[%c33, %c0_88] : memref<212x64xbf16, #tpu.memory_space<vmem>>, vector<144x64xbf16>
    %c3_89 = arith.constant 3 : index
    %c0_90 = arith.constant 0 : index
    %c0_91 = arith.constant 0 : index
    %89 = vector.load %arg6[%c3_89, %c0_90, %c0_91] : memref<9x64x64xbf16, #tpu.memory_space<vmem>>, vector<1x64x64xbf16>
    %90 = vector.shape_cast %89 : vector<1x64x64xbf16> to vector<64x64xbf16>
    %cst_92 = arith.constant dense<0.000000e+00> : vector<144x64xf32>
    %91 = tpu.matmul %88, %90, %cst_92 {dimension_numbers = #tpu.dot_dimension_numbers<[1], [0], [0], [1], [0, 0, 1, 1], [], []>} : vector<144x64xbf16>, vector<64x64xbf16>, vector<144x64xf32> -> vector<144x64xf32>
    %92 = arith.addf %87, %91 : vector<144x64xf32>
    %c34 = arith.constant 34 : index
    %c0_93 = arith.constant 0 : index
    %93 = vector.load %arg11[%c34, %c0_93] : memref<212x64xbf16, #tpu.memory_space<vmem>>, vector<144x64xbf16>
    %c4_94 = arith.constant 4 : index
    %c0_95 = arith.constant 0 : index
    %c0_96 = arith.constant 0 : index
    %94 = vector.load %arg6[%c4_94, %c0_95, %c0_96] : memref<9x64x64xbf16, #tpu.memory_space<vmem>>, vector<1x64x64xbf16>
    %95 = vector.shape_cast %94 : vector<1x64x64xbf16> to vector<64x64xbf16>
    %cst_97 = arith.constant dense<0.000000e+00> : vector<144x64xf32>
    %96 = tpu.matmul %93, %95, %cst_97 {dimension_numbers = #tpu.dot_dimension_numbers<[1], [0], [0], [1], [0, 0, 1, 1], [], []>} : vector<144x64xbf16>, vector<64x64xbf16>, vector<144x64xf32> -> vector<144x64xf32>
    %97 = arith.addf %92, %96 : vector<144x64xf32>
    %c35 = arith.constant 35 : index
    %c0_98 = arith.constant 0 : index
    %98 = vector.load %arg11[%c35, %c0_98] : memref<212x64xbf16, #tpu.memory_space<vmem>>, vector<144x64xbf16>
    %c5_99 = arith.constant 5 : index
    %c0_100 = arith.constant 0 : index
    %c0_101 = arith.constant 0 : index
    %99 = vector.load %arg6[%c5_99, %c0_100, %c0_101] : memref<9x64x64xbf16, #tpu.memory_space<vmem>>, vector<1x64x64xbf16>
    %100 = vector.shape_cast %99 : vector<1x64x64xbf16> to vector<64x64xbf16>
    %cst_102 = arith.constant dense<0.000000e+00> : vector<144x64xf32>
    %101 = tpu.matmul %98, %100, %cst_102 {dimension_numbers = #tpu.dot_dimension_numbers<[1], [0], [0], [1], [0, 0, 1, 1], [], []>} : vector<144x64xbf16>, vector<64x64xbf16>, vector<144x64xf32> -> vector<144x64xf32>
    %102 = arith.addf %97, %101 : vector<144x64xf32>
    %c51 = arith.constant 51 : index
    %c0_103 = arith.constant 0 : index
    %103 = vector.load %arg11[%c51, %c0_103] : memref<212x64xbf16, #tpu.memory_space<vmem>>, vector<144x64xbf16>
    %c6_104 = arith.constant 6 : index
    %c0_105 = arith.constant 0 : index
    %c0_106 = arith.constant 0 : index
    %104 = vector.load %arg6[%c6_104, %c0_105, %c0_106] : memref<9x64x64xbf16, #tpu.memory_space<vmem>>, vector<1x64x64xbf16>
    %105 = vector.shape_cast %104 : vector<1x64x64xbf16> to vector<64x64xbf16>
    %cst_107 = arith.constant dense<0.000000e+00> : vector<144x64xf32>
    %106 = tpu.matmul %103, %105, %cst_107 {dimension_numbers = #tpu.dot_dimension_numbers<[1], [0], [0], [1], [0, 0, 1, 1], [], []>} : vector<144x64xbf16>, vector<64x64xbf16>, vector<144x64xf32> -> vector<144x64xf32>
    %107 = arith.addf %102, %106 : vector<144x64xf32>
    %c52 = arith.constant 52 : index
    %c0_108 = arith.constant 0 : index
    %108 = vector.load %arg11[%c52, %c0_108] : memref<212x64xbf16, #tpu.memory_space<vmem>>, vector<144x64xbf16>
    %c7_109 = arith.constant 7 : index
    %c0_110 = arith.constant 0 : index
    %c0_111 = arith.constant 0 : index
    %109 = vector.load %arg6[%c7_109, %c0_110, %c0_111] : memref<9x64x64xbf16, #tpu.memory_space<vmem>>, vector<1x64x64xbf16>
    %110 = vector.shape_cast %109 : vector<1x64x64xbf16> to vector<64x64xbf16>
    %cst_112 = arith.constant dense<0.000000e+00> : vector<144x64xf32>
    %111 = tpu.matmul %108, %110, %cst_112 {dimension_numbers = #tpu.dot_dimension_numbers<[1], [0], [0], [1], [0, 0, 1, 1], [], []>} : vector<144x64xbf16>, vector<64x64xbf16>, vector<144x64xf32> -> vector<144x64xf32>
    %112 = arith.addf %107, %111 : vector<144x64xf32>
    %c53 = arith.constant 53 : index
    %c0_113 = arith.constant 0 : index
    %113 = vector.load %arg11[%c53, %c0_113] : memref<212x64xbf16, #tpu.memory_space<vmem>>, vector<144x64xbf16>
    %c8_114 = arith.constant 8 : index
    %c0_115 = arith.constant 0 : index
    %c0_116 = arith.constant 0 : index
    %114 = vector.load %arg6[%c8_114, %c0_115, %c0_116] : memref<9x64x64xbf16, #tpu.memory_space<vmem>>, vector<1x64x64xbf16>
    %115 = vector.shape_cast %114 : vector<1x64x64xbf16> to vector<64x64xbf16>
    %cst_117 = arith.constant dense<0.000000e+00> : vector<144x64xf32>
    %116 = tpu.matmul %113, %115, %cst_117 {dimension_numbers = #tpu.dot_dimension_numbers<[1], [0], [0], [1], [0, 0, 1, 1], [], []>} : vector<144x64xbf16>, vector<64x64xbf16>, vector<144x64xf32> -> vector<144x64xf32>
    %117 = arith.addf %112, %116 : vector<144x64xf32>
    %c0_118 = arith.constant 0 : index
    %c37_119 = arith.constant 37 : index
    %c0_120 = arith.constant 0 : index
    %118 = vector.load %arg10[%c0_118, %c37_119, %c0_120] : memref<1x288x64xbf16, #tpu.memory_space<vmem>>, vector<1x144x64xbf16>
    %119 = vector.shape_cast %118 : vector<1x144x64xbf16> to vector<144x64xbf16>
    %120 = arith.extf %119 : vector<144x64xbf16> to vector<144x64xf32>
    %121 = arith.addf %117, %120 : vector<144x64xf32>
    %c0_121 = arith.constant 0 : index
    %c0_122 = arith.constant 0 : index
    %122 = vector.load %arg7[%c0_121, %c0_122] : memref<1x64xf32, #tpu.memory_space<vmem>>, vector<1x64xf32>
    %123 = vector.broadcast %122 : vector<1x64xf32> to vector<144x64xf32>
    %124 = arith.addf %121, %123 : vector<144x64xf32>
    %cst_123 = arith.constant 0.000000e+00 : f32
    %125 = vector.broadcast %cst_123 : f32 to vector<144x64xf32>
    %126 = arith.maximumf %124, %125 : vector<144x64xf32>
    %127 = arith.truncf %126 : vector<144x64xf32> to vector<144x64xbf16>
    %c0_124 = arith.constant 0 : index
    %c0_125 = arith.constant 0 : index
    %c0_126 = arith.constant 0 : index
    %128 = vector.load %arg9[%c0_124, %c0_125, %c0_126] : memref<1x144x64xbf16, #tpu.memory_space<vmem>>, vector<1x144x64xbf16>
    %129 = vector.shape_cast %128 : vector<1x144x64xbf16> to vector<144x64xbf16>
    %130 = vector.shape_cast %127 : vector<144x64xbf16> to vector<1x144x64xbf16>
    tpu.vector_store %arg9[%c0_124, %c0_125, %c0_126], %130 {strides = array<i32>} : memref<1x144x64xbf16, #tpu.memory_space<vmem>>, vector<1x144x64xbf16>,
    return
  }
  func.func @transform_0(%arg0: i32, %arg1: i32) -> (i32, i32, i32, i32) {
    %c0_i32 = arith.constant 0 : i32
    %c0_i32_0 = arith.constant 0 : i32
    %c0_i32_1 = arith.constant 0 : i32
    return %arg0, %c0_i32, %arg1, %c0_i32_0 : i32, i32, i32, i32
  }
  func.func @transform_1(%arg0: i32, %arg1: i32) -> (i32, i32, i32, i32) {
    %c1_i32 = arith.constant 1 : i32
    %0 = arith.addi %arg1, %c1_i32 : i32
    %c1_i32_0 = arith.constant 1 : i32
    %1 = arith.muli %0, %c1_i32_0 : i32
    %c0_i32 = arith.constant 0 : i32
    %c0_i32_1 = arith.constant 0 : i32
    %c0_i32_2 = arith.constant 0 : i32
    return %arg0, %c0_i32, %1, %c0_i32_1 : i32, i32, i32, i32
  }
  func.func @transform_2(%arg0: i32, %arg1: i32) -> (i32, i32, i32) {
    %c0_i32 = arith.constant 0 : i32
    %c0_i32_0 = arith.constant 0 : i32
    %c0_i32_1 = arith.constant 0 : i32
    %c0_i32_2 = arith.constant 0 : i32
    return %c0_i32, %c0_i32_0, %c0_i32_1 : i32, i32, i32
  }
  func.func @transform_3(%arg0: i32, %arg1: i32) -> (i32, i32) {
    %c0_i32 = arith.constant 0 : i32
    %c0_i32_0 = arith.constant 0 : i32
    %c0_i32_1 = arith.constant 0 : i32
    return %c0_i32, %c0_i32_0 : i32, i32
  }
  func.func @transform_4(%arg0: i32, %arg1: i32) -> (i32, i32, i32) {
    %c0_i32 = arith.constant 0 : i32
    %c0_i32_0 = arith.constant 0 : i32
    %c0_i32_1 = arith.constant 0 : i32
    %c0_i32_2 = arith.constant 0 : i32
    return %c0_i32, %c0_i32_0, %c0_i32_1 : i32, i32, i32
  }
  func.func @transform_5(%arg0: i32, %arg1: i32) -> (i32, i32) {
    %c0_i32 = arith.constant 0 : i32
    %c0_i32_0 = arith.constant 0 : i32
    %c0_i32_1 = arith.constant 0 : i32
    return %c0_i32, %c0_i32_0 : i32, i32
  }
  func.func @transform_6(%arg0: i32, %arg1: i32) -> (i32, i32, i32) {
    %c0_i32 = arith.constant 0 : i32
    %c0_i32_0 = arith.constant 0 : i32
    %c0_i32_1 = arith.constant 0 : i32
    return %arg1, %c0_i32, %c0_i32_0 : i32, i32, i32
  }
  func.func @transform_7(%arg0: i32, %arg1: i32) -> (i32, i32, i32) {
    %c0_i32 = arith.constant 0 : i32
    %c0_i32_0 = arith.constant 0 : i32
    return %arg0, %arg1, %c0_i32 : i32, i32, i32
  }
}

</mosaic_0001>

<llo_original>
// kernel: tpu_custom_call.1
$region0: #{tpu_custom_call.1}
  #allocation0 [shape = 'u32[]', space=smem, size = 0x4, offset = 0x4, fixed_abs, tag = 'smem constant byte address 0x4 - core index']
  #allocation1 [shape = 'u32[72,128]{1,0:T(1,128)}', space=vmem, size = 0x9000, scoped, tag = 'internal scratch']
  #allocation2 [shape = 'bf16[1,288,64]{2,1,0:T(8,128)(2,1)}', space=vmem, size = 0x12000, scoped, tag = 'scratch operand']
  #allocation3 [shape = 'bf16[212,64]{1,0:T(8,128)(2,1)}', space=vmem, size = 0xd800, scoped, tag = 'scratch operand']
  %s0 = inlined_call_operand.vmem [shape: bf16[2,1,432,64], index: 0, kind: input, shape index: {}]
  %s1 = inlined_call_operand.vmem [shape: bf16[2,1,432,64], index: 1, kind: input, shape index: {}]
  %s2 = inlined_call_operand.vmem [shape: bf16[9,64,64], index: 2, kind: input, shape index: {}]
  %s3 = inlined_call_operand.vmem [shape: f32[1,64], index: 3, kind: input, shape index: {}]
  %s4 = inlined_call_operand.vmem [shape: bf16[9,64,64], index: 4, kind: input, shape index: {}]
  %s5 = inlined_call_operand.vmem [shape: f32[1,64], index: 5, kind: input, shape index: {}]
  %s6 = inlined_call_operand.vmem [shape: f32[2,180,1], index: 6, kind: input, shape index: {}]
  %s7 = inlined_call_operand.vmem [shape: bf16[2,288,64], index: 7, kind: output, shape index: {}]
  %s8 = sld [smem:[#allocation0]]
  $region61: #{tpu_custom_call.1} parent=0
    _
  %s10 = ssub.s32 1, %s8
  %s11 = scalar_select 0, %s10, %s8
  loop: start=0, step=1, limit=6
  $region2: #{tpu_custom_call.1} parent=0 // loop_pre_header
    _
  $region3: #{tpu_custom_call.1} parent=0 // loop_header
    %s13 = sphi 0, %s17
    %p14 = scmp.ge.s32.totalorder %s13, 6
    %s20 = sphi 0, %s32
    %s21 = sphi 0, %s28
    %s22 = sphi 0, %s20
    %s23 = sphi 0, %s21
    %s24 = sphi 0, %s22
    %s25 = sphi 0, %s23
    %s37 = sphi 0, %s39
    %s40 = sphi 0, %s37
    %s41 = sphi 0, %s40
    %s57 = sphi 0, %s41
    %s67 = sphi 0, %s69
    %s70 = sphi 0, %s67
    %s71 = sphi 0, %s70
    %s87 = sphi 0, %s71
    %s91 = sphi 0, %s91
    %s93 = sphi 0, %s91
    %s94 = sphi 0, %s93
    %s108 = sphi 0, %s94
    %s112 = sphi 0, %s112
    %s114 = sphi 0, %s112
    %s115 = sphi 0, %s114
    %s129 = sphi 0, %s115
    %s133 = sphi 0, %s133
    %s135 = sphi 0, %s133
    %s136 = sphi 0, %s135
    %s150 = sphi 0, %s136
    %s154 = sphi 0, %s154
    %s156 = sphi 0, %s154
    %s157 = sphi 0, %s156
    %s171 = sphi 0, %s157
    %s177 = sphi 0, %s179
    %s180 = sphi 0, %s177
    %s181 = sphi 0, %s180
    %s197 = sphi 0, %s181
    %s205 = sphi 0, %s207
    %s208 = sphi 0, %s205
    %s209 = sphi 0, %s208
    %s225 = sphi 0, %s209
  $region4: #{tpu_custom_call.1} parent=0 // loop_header_branch
    %16 = sbr.rel (%p14) target = $region8
  $region5: #{tpu_custom_call.1} parent=0 // loop_body
    %s18 = ssub.s32 %s13, 1
    %s19 = ssub.s32 %s13, 2
    %s26 = sadd.s32 1, %s21
    %p27 = scmp.ge.s32.totalorder %s26, 2
    %s28 = scalar_select %p27, 0, %s26
    %s29 = sadd.s32 1, %s20
    %s30 = scalar_select %p27, %s29, %s20
    %p31 = scmp.ge.s32.totalorder %s30, 2
    %s32 = scalar_select %p31, 0, %s30
    %s33 = ssub.s32 %s20, %s32
    %s34 = ssub.s32 %s21, %s28
    %s35 = sor.u32 %s33, %s34
    %p36 = scmp.eq.s32.totalorder %s35, 0
    %s38 = sadd.s32 %s37, 1
    %s39 = scalar_select %p36, %s37, %s38
    %p42 = pneg %p36
    %p43 = scmp.eq.s32.totalorder %s13, 3
    %p44 = por %p42, %p43
    %p45 = scmp.ne.s32.totalorder %s37, %s40
    %p46 = scmp.eq.s32.totalorder %s13, 0
    %p47 = por %p45, %p46
    %p48 = scmp.ne.s32.totalorder %s37, %s40
    %p49 = scmp.eq.s32.totalorder %s18, 3
    %p50 = por %p48, %p49
    %p51 = scmp.ne.s32.totalorder %s40, %s41
    %p52 = scmp.eq.s32.totalorder %s18, 0
    %p53 = por %p51, %p52
    %p54 = scmp.ne.s32.totalorder %s40, %s41
    %p55 = scmp.eq.s32.totalorder %s19, 3
    %p56 = por %p54, %p55
    %p58 = scmp.ne.s32.totalorder %s41, %s57
    %p59 = scmp.eq.s32.totalorder %s19, 0
    %p60 = por %p58, %p59
    %s61 = sadd.s32 %s21, 1
    %s62 = sadd.s32 %s28, 1
    %s63 = ssub.s32 %s20, %s32
    %s64 = ssub.s32 %s61, %s62
    %s65 = sor.u32 %s63, %s64
    %p66 = scmp.eq.s32.totalorder %s65, 0
    %s68 = sadd.s32 %s67, 1
    %s69 = scalar_select %p66, %s67, %s68
    %p72 = pneg %p66
    %p73 = scmp.eq.s32.totalorder %s13, 3
    %p74 = por %p72, %p73
    %p75 = scmp.ne.s32.totalorder %s67, %s70
    %p76 = scmp.eq.s32.totalorder %s13, 0
    %p77 = por %p75, %p76
    %p78 = scmp.ne.s32.totalorder %s67, %s70
    %p79 = scmp.eq.s32.totalorder %s18, 3
    %p80 = por %p78, %p79
    %p81 = scmp.ne.s32.totalorder %s70, %s71
    %p82 = scmp.eq.s32.totalorder %s18, 0
    %p83 = por %p81, %p82
    %p84 = scmp.ne.s32.totalorder %s70, %s71
    %p85 = scmp.eq.s32.totalorder %s19, 3
    %p86 = por %p84, %p85
    %p88 = scmp.ne.s32.totalorder %s71, %s87
    %p89 = scmp.eq.s32.totalorder %s19, 0
    %p90 = por %p88, %p89
    %s92 = sadd.s32 %s91, 1
    %p95 = scmp.eq.s32.totalorder %s13, 3
    %p96 = scmp.ne.s32.totalorder %s91, %s93
    %p97 = scmp.eq.s32.totalorder %s13, 0
    %p98 = por %p96, %p97
    %p99 = scmp.ne.s32.totalorder %s91, %s93
    %p100 = scmp.eq.s32.totalorder %s18, 3
    %p101 = por %p99, %p100
    %p102 = scmp.ne.s32.totalorder %s93, %s94
    %p103 = scmp.eq.s32.totalorder %s18, 0
    %p104 = por %p102, %p103
    %p105 = scmp.ne.s32.totalorder %s93, %s94
    %p106 = scmp.eq.s32.totalorder %s19, 3
    %p107 = por %p105, %p106
    %p109 = scmp.ne.s32.totalorder %s94, %s108
    %p110 = scmp.eq.s32.totalorder %s19, 0
    %p111 = por %p109, %p110
    %s113 = sadd.s32 %s112, 1
    %p116 = scmp.eq.s32.totalorder %s13, 3
    %p117 = scmp.ne.s32.totalorder %s112, %s114
    %p118 = scmp.eq.s32.totalorder %s13, 0
    %p119 = por %p117, %p118
    %p120 = scmp.ne.s32.totalorder %s112, %s114
    %p121 = scmp.eq.s32.totalorder %s18, 3
    %p122 = por %p120, %p121
    %p123 = scmp.ne.s32.totalorder %s114, %s115
    %p124 = scmp.eq.s32.totalorder %s18, 0
    %p125 = por %p123, %p124
    %p126 = scmp.ne.s32.totalorder %s114, %s115
    %p127 = scmp.eq.s32.totalorder %s19, 3
    %p128 = por %p126, %p127
    %p130 = scmp.ne.s32.totalorder %s115, %s129
    %p131 = scmp.eq.s32.totalorder %s19, 0
    %p132 = por %p130, %p131
    %s134 = sadd.s32 %s133, 1
    %p137 = scmp.eq.s32.totalorder %s13, 3
    %p138 = scmp.ne.s32.totalorder %s133, %s135
    %p139 = scmp.eq.s32.totalorder %s13, 0
    %p140 = por %p138, %p139
    %p141 = scmp.ne.s32.totalorder %s133, %s135
    %p142 = scmp.eq.s32.totalorder %s18, 3
    %p143 = por %p141, %p142
    %p144 = scmp.ne.s32.totalorder %s135, %s136
    %p145 = scmp.eq.s32.totalorder %s18, 0
    %p146 = por %p144, %p145
    %p147 = scmp.ne.s32.totalorder %s135, %s136
    %p148 = scmp.eq.s32.totalorder %s19, 3
    %p149 = por %p147, %p148
    %p151 = scmp.ne.s32.totalorder %s136, %s150
    %p152 = scmp.eq.s32.totalorder %s19, 0
    %p153 = por %p151, %p152
    %s155 = sadd.s32 %s154, 1
    %p158 = scmp.eq.s32.totalorder %s13, 3
    %p159 = scmp.ne.s32.totalorder %s154, %s156
    %p160 = scmp.eq.s32.totalorder %s13, 0
    %p161 = por %p159, %p160
    %p162 = scmp.ne.s32.totalorder %s154, %s156
    %p163 = scmp.eq.s32.totalorder %s18, 3
    %p164 = por %p162, %p163
    %p165 = scmp.ne.s32.totalorder %s156, %s157
    %p166 = scmp.eq.s32.totalorder %s18, 0
    %p167 = por %p165, %p166
    %p168 = scmp.ne.s32.totalorder %s156, %s157
    %p169 = scmp.eq.s32.totalorder %s19, 3
    %p170 = por %p168, %p169
    %p172 = scmp.ne.s32.totalorder %s157, %s171
    %p173 = scmp.eq.s32.totalorder %s19, 0
    %p174 = por %p172, %p173
    %s175 = ssub.s32 %s21, %s28
    %p176 = scmp.eq.s32.totalorder %s175, 0
    %s178 = sadd.s32 %s177, 1
    %s179 = scalar_select %p176, %s177, %s178
    %p182 = pneg %p176
    %p183 = scmp.eq.s32.totalorder %s13, 3
    %p184 = por %p182, %p183
    %p185 = scmp.ne.s32.totalorder %s177, %s180
    %p186 = scmp.eq.s32.totalorder %s13, 0
    %p187 = por %p185, %p186
    %p188 = scmp.ne.s32.totalorder %s177, %s180
    %p189 = scmp.eq.s32.totalorder %s18, 3
    %p190 = por %p188, %p189
    %p191 = scmp.ne.s32.totalorder %s180, %s181
    %p192 = scmp.eq.s32.totalorder %s18, 0
    %p193 = por %p191, %p192
    %p194 = scmp.ne.s32.totalorder %s180, %s181
    %p195 = scmp.eq.s32.totalorder %s19, 3
    %p196 = por %p194, %p195
    %p198 = scmp.ne.s32.totalorder %s181, %s197
    %p199 = scmp.eq.s32.totalorder %s19, 0
    %p200 = por %p198, %p199
    %s201 = ssub.s32 %s20, %s32
    %s202 = ssub.s32 %s21, %s28
    %s203 = sor.u32 %s201, %s202
    %p204 = scmp.eq.s32.totalorder %s203, 0
    %s206 = sadd.s32 %s205, 1
    %s207 = scalar_select %p204, %s205, %s206
    %p210 = pneg %p204
    %p211 = scmp.eq.s32.totalorder %s13, 3
    %p212 = por %p210, %p211
    %p213 = scmp.ne.s32.totalorder %s205, %s208
    %p214 = scmp.eq.s32.totalorder %s13, 0
    %p215 = por %p213, %p214
    %p216 = scmp.ne.s32.totalorder %s205, %s208
    %p217 = scmp.eq.s32.totalorder %s18, 3
    %p218 = por %p216, %p217
    %p219 = scmp.ne.s32.totalorder %s208, %s209
    %p220 = scmp.eq.s32.totalorder %s18, 0
    %p221 = por %p219, %p220
    %p222 = scmp.ne.s32.totalorder %s208, %s209
    %p223 = scmp.eq.s32.totalorder %s19, 3
    %p224 = por %p222, %p223
    %p226 = scmp.ne.s32.totalorder %s209, %s225
    %p227 = scmp.eq.s32.totalorder %s19, 0
    %p228 = por %p226, %p227
    %p229 = scmp.le.s32.totalorder 1, %s13
    %p230 = scmp.lt.s32.totalorder %s13, 5
    %p231 = pnand %p229, %p230
    %p232 = pneg %p231
    // Predicated region
    $region9: #{tpu_custom_call.1} parent=5 // pred_check
      _
    $region10: #{tpu_custom_call.1} parent=5 // pred_check_branch
      %234 = sbr.rel (%p231) target = $region12
    $region11: #{tpu_custom_call.1} parent=5 // pred_region
      %s235 = ssub.s32 %s13, 1
      // Predicated region
      $region13: #{tpu_custom_call.1} parent=11 // pred_check
        %p236 = pneg %p104
      $region14: #{tpu_custom_call.1} parent=11 // pred_check_branch
        %238 = sbr.rel (%p236) target = $region16
      $region15: #{tpu_custom_call.1} parent=11 // pred_region
        _
      $region16: #{tpu_custom_call.1} parent=11 // pred_fallthru
        _
      // Predicated region
      $region17: #{tpu_custom_call.1} parent=11 // pred_check
        %p239 = pneg %p125
      $region18: #{tpu_custom_call.1} parent=11 // pred_check_branch
        %241 = sbr.rel (%p239) target = $region20
      $region19: #{tpu_custom_call.1} parent=11 // pred_region
        _
      $region20: #{tpu_custom_call.1} parent=11 // pred_fallthru
        _
      // Predicated region
      $region21: #{tpu_custom_call.1} parent=11 // pred_check
        %p242 = pneg %p146
      $region22: #{tpu_custom_call.1} parent=11 // pred_check_branch
        %244 = sbr.rel (%p242) target = $region24
      $region23: #{tpu_custom_call.1} parent=11 // pred_region
        _
      $region24: #{tpu_custom_call.1} parent=11 // pred_fallthru
        _
      // Predicated region
      $region25: #{tpu_custom_call.1} parent=11 // pred_check
        %p245 = pneg %p167
      $region26: #{tpu_custom_call.1} parent=11 // pred_check_branch
        %247 = sbr.rel (%p245) target = $region28
      $region27: #{tpu_custom_call.1} parent=11 // pred_region
        _
      $region28: #{tpu_custom_call.1} parent=11 // pred_fallthru
        _
    $region12: #{tpu_custom_call.1} parent=5 // pred_fallthru
      _
    %p248 = scmp.lt.s32.totalorder %s13, 4
    // Predicated region
    $region29: #{tpu_custom_call.1} parent=5 // pred_check
      %p249 = pneg %p248
    $region30: #{tpu_custom_call.1} parent=5 // pred_check_branch
      %251 = sbr.rel (%p249) target = $region32
    $region31: #{tpu_custom_call.1} parent=5 // pred_region
      // Predicated region
      $region33: #{tpu_custom_call.1} parent=31 // pred_check
        %p252 = pneg %p47
      $region34: #{tpu_custom_call.1} parent=31 // pred_check_branch
        %254 = sbr.rel (%p252) target = $region36
      $region35: #{tpu_custom_call.1} parent=31 // pred_region
        %s255 = smul.u32 18, %s21
        %p256 = scmp.lt.s32.totalorder %s20, 1
        %s257 = scalar_select %p256, %s20, 1
        %p258 = scmp.lt.s32.totalorder %s255, 53
        %s259 = scalar_select %p258, %s255, 53
        %s260 = smul.addr %s257, 54
        %s261 = sadd.s32 %s259, %s260
        %s262 = smul.addr %s261, 4
        %s263 = scalar_lea.vmem %s0, %s262
        %s264 = smul.u32 18, %s21
      $region36: #{tpu_custom_call.1} parent=31 // pred_fallthru
        _
      // Predicated region
      $region37: #{tpu_custom_call.1} parent=31 // pred_check
        %p265 = pneg %p77
      $region38: #{tpu_custom_call.1} parent=31 // pred_check_branch
        %267 = sbr.rel (%p265) target = $region40
      $region39: #{tpu_custom_call.1} parent=31 // pred_region
        %s268 = sadd.s32 %s21, 1
        %s269 = smul.u32 18, %s268
        %p270 = scmp.lt.s32.totalorder %s20, 1
        %s271 = scalar_select %p270, %s20, 1
        %p272 = scmp.lt.s32.totalorder %s269, 53
        %s273 = scalar_select %p272, %s269, 53
        %s274 = smul.addr %s271, 54
        %s275 = sadd.s32 %s273, %s274
        %s276 = smul.addr %s275, 4
        %s277 = scalar_lea.vmem %s1, %s276
        %s278 = sadd.s32 %s21, 1
        %s279 = smul.u32 18, %s278
      $region40: #{tpu_custom_call.1} parent=31 // pred_fallthru
        _
      // Predicated region
      $region41: #{tpu_custom_call.1} parent=31 // pred_check
        %p280 = pneg %p187
      $region42: #{tpu_custom_call.1} parent=31 // pred_check_branch
        %282 = sbr.rel (%p280) target = $region44
      $region43: #{tpu_custom_call.1} parent=31 // pred_region
        %p283 = scmp.lt.s32.totalorder %s21, 1
        %s284 = scalar_select %p283, %s21, 1
        %s285 = smul.addr %s284, 23
        %s286 = smul.addr %s285, 8
        %s287 = scalar_lea.vmem %s6, %s286
      $region44: #{tpu_custom_call.1} parent=31 // pred_fallthru
        _
    $region32: #{tpu_custom_call.1} parent=5 // pred_fallthru
      _
    %p288 = scmp.le.s32.totalorder 1, %s13
    %p289 = scmp.lt.s32.totalorder %s13, 5
    %p290 = pnand %p288, %p289
    %p291 = pneg %p290
    // Predicated region
    $region45: #{tpu_custom_call.1} parent=5 // pred_check
      _
    $region46: #{tpu_custom_call.1} parent=5 // pred_check_branch
      %293 = sbr.rel (%p290) target = $region48
    $region47: #{tpu_custom_call.1} parent=5 // pred_region
      %s294 = ssub.s32 %s13, 1
      %s295 = smul.u32 18, %s23
      %p296 = scmp.lt.s32.totalorder %s22, 1
      %s297 = scalar_select %p296, %s22, 1
      %p298 = scmp.lt.s32.totalorder %s295, 53
      %s299 = scalar_select %p298, %s295, 53
      %s300 = smul.addr %s297, 54
      %s301 = sadd.s32 %s299, %s300
      %s302 = smul.addr %s301, 4
      %s303 = scalar_lea.vmem %s0, %s302
      %p304 = pneg %p53
      %p305 = pneg %p50
      %s306 = sadd.s32 %s23, 1
      %s307 = smul.u32 18, %s306
      %p308 = scmp.lt.s32.totalorder %s22, 1
      %s309 = scalar_select %p308, %s22, 1
      %p310 = scmp.lt.s32.totalorder %s307, 53
      %s311 = scalar_select %p310, %s307, 53
      %s312 = smul.addr %s309, 54
      %s313 = sadd.s32 %s311, %s312
      %s314 = smul.addr %s313, 4
      %s315 = scalar_lea.vmem %s1, %s314
      %p316 = pneg %p83
      %p317 = pneg %p80
      %p318 = pneg %p104
      %p319 = pneg %p101
      %p320 = pneg %p125
      %p321 = pneg %p122
      %p322 = pneg %p146
      %p323 = pneg %p143
      %p324 = pneg %p167
      %p325 = pneg %p164
      %p326 = scmp.lt.s32.totalorder %s23, 1
      %s327 = scalar_select %p326, %s23, 1
      %s328 = smul.addr %s327, 23
      %s329 = smul.addr %s328, 8
      %s330 = scalar_lea.vmem %s6, %s329
      %p331 = pneg %p193
      %p332 = pneg %p190
      %p333 = pneg %p221
      %p334 = pneg %p218
      %s335 = smul.u32 18, %s23
      %p336 = scmp.lt.s32.totalorder %s22, 1
      %s337 = scalar_select %p336, %s22, 1
      %p338 = scmp.lt.s32.totalorder %s335, 35
      %s339 = scalar_select %p338, %s335, 35
      %s340 = smul.addr %s337, 36
      %s341 = sadd.s32 %s339, %s340
      %s342 = smul.addr %s341, 4
      %s343 = scalar_lea.vmem %s7, %s342
      %s344 = smul.u32 18, %s23
      %p345 = scmp.lt.s32.totalorder %s22, 1
      %s346 = scalar_select %p345, %s22, 1
      %p347 = scmp.lt.s32.totalorder %s344, 53
      %s348 = scalar_select %p347, %s344, 53
      %s349 = smul.addr %s346, 54
      %s350 = sadd.s32 %s348, %s349
      %s351 = smul.addr %s350, 4
      %s352 = scalar_lea.vmem %s0, %s351
      %s353 = smul.u32 18, %s23
      %s354 = sadd.s32 %s23, 1
      %s355 = smul.u32 18, %s354
      %p356 = scmp.lt.s32.totalorder %s22, 1
      %s357 = scalar_select %p356, %s22, 1
      %p358 = scmp.lt.s32.totalorder %s355, 53
      %s359 = scalar_select %p358, %s355, 53
      %s360 = smul.addr %s357, 54
      %s361 = sadd.s32 %s359, %s360
      %s362 = smul.addr %s361, 4
      %s363 = scalar_lea.vmem %s1, %s362
      %s364 = sadd.s32 %s23, 1
      %s365 = smul.u32 18, %s364
      %p366 = scmp.lt.s32.totalorder %s23, 1
      %s367 = scalar_select %p366, %s23, 1
      %s368 = smul.addr %s367, 23
      %s369 = smul.addr %s368, 8
      %s370 = scalar_lea.vmem %s6, %s369
      %s371 = smul.u32 18, %s23
      %p372 = scmp.lt.s32.totalorder %s22, 1
      %s373 = scalar_select %p372, %s22, 1
      %p374 = scmp.lt.s32.totalorder %s371, 35
      %s375 = scalar_select %p374, %s371, 35
      %s376 = smul.addr %s373, 36
      %s377 = sadd.s32 %s375, %s376
      %s378 = smul.addr %s377, 4
      %s379 = scalar_lea.vmem %s7, %s378
      %s380 = smul.u32 18, %s23
      %v382 = vld [vmem:[%s352] sm:$0xf]
      %v383 = vld [vmem:[%s352 + $0x4] sm:$0xf]
      %v384 = vld [vmem:[%s352 + $0x8] sm:$0xf]
      %v385 = vld [vmem:[%s352 + $0xc] sm:$0xf]
      %v386 = vld [vmem:[%s352 + $0x10] sm:$0xf]
      %v387 = vld [vmem:[%s352 + $0x14] sm:$0xf]
      %v388 = vld [vmem:[%s352 + $0x18] sm:$0xf]
      %v389 = vld [vmem:[%s352 + $0x1c] sm:$0xf]
      %v390 = vld [vmem:[%s352 + $0x20] sm:$0xf]
      %v391 = vld [vmem:[%s352 + $0x24] sm:$0xf]
      %v392 = vld [vmem:[%s352 + $0x28] sm:$0xf]
      %v393 = vld [vmem:[%s352 + $0x2c] sm:$0xf]
      %v394 = vld [vmem:[%s352 + $0x30] sm:$0xf]
      %v395 = vld [vmem:[%s352 + $0x34] sm:$0xf]
      %v396 = vld [vmem:[%s352 + $0x38] sm:$0xf]
      %v397 = vld [vmem:[%s352 + $0x3c] sm:$0xf]
      %v398 = vld [vmem:[%s352 + $0x40] sm:$0xf]
      %v399 = vld [vmem:[%s352 + $0x44] sm:$0xf]
      %vm400 = vcmask 519168
      %401 = vst.msk [vmem:[#allocation2] sm:$0xf] %vm400, %v382
      %402 = vst.msk [vmem:[#allocation2 + $0x4] sm:$0xf] %vm400, %v383
      %403 = vst.msk [vmem:[#allocation2 + $0x8] sm:$0xf] %vm400, %v384
      %404 = vst.msk [vmem:[#allocation2 + $0xc] sm:$0xf] %vm400, %v385
      %405 = vst.msk [vmem:[#allocation2 + $0x10] sm:$0xf] %vm400, %v386
      %406 = vst.msk [vmem:[#allocation2 + $0x14] sm:$0xf] %vm400, %v387
      %407 = vst.msk [vmem:[#allocation2 + $0x18] sm:$0xf] %vm400, %v388
      %408 = vst.msk [vmem:[#allocation2 + $0x1c] sm:$0xf] %vm400, %v389
      %409 = vst.msk [vmem:[#allocation2 + $0x20] sm:$0xf] %vm400, %v390
      %410 = vst.msk [vmem:[#allocation2 + $0x24] sm:$0xf] %vm400, %v391
      %411 = vst.msk [vmem:[#allocation2 + $0x28] sm:$0xf] %vm400, %v392
      %412 = vst.msk [vmem:[#allocation2 + $0x2c] sm:$0xf] %vm400, %v393
      %413 = vst.msk [vmem:[#allocation2 + $0x30] sm:$0xf] %vm400, %v394
      %414 = vst.msk [vmem:[#allocation2 + $0x34] sm:$0xf] %vm400, %v395
      %415 = vst.msk [vmem:[#allocation2 + $0x38] sm:$0xf] %vm400, %v396
      %416 = vst.msk [vmem:[#allocation2 + $0x3c] sm:$0xf] %vm400, %v397
      %417 = vst.msk [vmem:[#allocation2 + $0x40] sm:$0xf] %vm400, %v398
      %418 = vst.msk [vmem:[#allocation2 + $0x44] sm:$0xf] %vm400, %v399
      %v419 = vld [vmem:[%s363] sm:$0xf]
      %v420 = vld [vmem:[%s363 + $0x4] sm:$0xf]
      %v421 = vld [vmem:[%s363 + $0x8] sm:$0xf]
      %v422 = vld [vmem:[%s363 + $0xc] sm:$0xf]
      %v423 = vld [vmem:[%s363 + $0x10] sm:$0xf]
      %v424 = vld [vmem:[%s363 + $0x14] sm:$0xf]
      %v425 = vld [vmem:[%s363 + $0x18] sm:$0xf]
      %v426 = vld [vmem:[%s363 + $0x1c] sm:$0xf]
      %v427 = vld [vmem:[%s363 + $0x20] sm:$0xf]
      %v428 = vld [vmem:[%s363 + $0x24] sm:$0xf]
      %v429 = vld [vmem:[%s363 + $0x28] sm:$0xf]
      %v430 = vld [vmem:[%s363 + $0x2c] sm:$0xf]
      %v431 = vld [vmem:[%s363 + $0x30] sm:$0xf]
      %v432 = vld [vmem:[%s363 + $0x34] sm:$0xf]
      %v433 = vld [vmem:[%s363 + $0x38] sm:$0xf]
      %v434 = vld [vmem:[%s363 + $0x3c] sm:$0xf]
      %v435 = vld [vmem:[%s363 + $0x40] sm:$0xf]
      %v436 = vld [vmem:[%s363 + $0x44] sm:$0xf]
      %437 = vst.msk [vmem:[#allocation2 + $0x48] sm:$0xf] %vm400, %v419
      %438 = vst.msk [vmem:[#allocation2 + $0x4c] sm:$0xf] %vm400, %v420
      %439 = vst.msk [vmem:[#allocation2 + $0x50] sm:$0xf] %vm400, %v421
      %440 = vst.msk [vmem:[#allocation2 + $0x54] sm:$0xf] %vm400, %v422
      %441 = vst.msk [vmem:[#allocation2 + $0x58] sm:$0xf] %vm400, %v423
      %442 = vst.msk [vmem:[#allocation2 + $0x5c] sm:$0xf] %vm400, %v424
      %443 = vst.msk [vmem:[#allocation2 + $0x60] sm:$0xf] %vm400, %v425
      %444 = vst.msk [vmem:[#allocation2 + $0x64] sm:$0xf] %vm400, %v426
      %445 = vst.msk [vmem:[#allocation2 + $0x68] sm:$0xf] %vm400, %v427
      %446 = vst.msk [vmem:[#allocation2 + $0x6c] sm:$0xf] %vm400, %v428
      %447 = vst.msk [vmem:[#allocation2 + $0x70] sm:$0xf] %vm400, %v429
      %448 = vst.msk [vmem:[#allocation2 + $0x74] sm:$0xf] %vm400, %v430
      %449 = vst.msk [vmem:[#allocation2 + $0x78] sm:$0xf] %vm400, %v431
      %450 = vst.msk [vmem:[#allocation2 + $0x7c] sm:$0xf] %vm400, %v432
      %451 = vst.msk [vmem:[#allocation2 + $0x80] sm:$0xf] %vm400, %v433
      %452 = vst.msk [vmem:[#allocation2 + $0x84] sm:$0xf] %vm400, %v434
      %453 = vst.msk [vmem:[#allocation2 + $0x88] sm:$0xf] %vm400, %v435
      %454 = vst.msk [vmem:[#allocation2 + $0x8c] sm:$0xf] %vm400, %v436
      %v455 = vld [vmem:[#allocation2] sm:$0xf]
      %v456 = vld [vmem:[#allocation2 + $0x4] sm:$0xf]
      %v457 = vld [vmem:[#allocation2 + $0x8] sm:$0xf]
      %v458 = vld [vmem:[#allocation2 + $0xc] sm:$0xf]
      %v459 = vld [vmem:[#allocation2 + $0x10] sm:$0xf]
      %v460 = vld [vmem:[#allocation2 + $0x14] sm:$0xf]
      %v461 = vld [vmem:[#allocation2 + $0x18] sm:$0xf]
      %v462 = vld [vmem:[#allocation2 + $0x1c] sm:$0xf]
      %v463 = vld [vmem:[#allocation2 + $0x20] sm:$0xf]
      %v464 = vld [vmem:[#allocation2 + $0x24] sm:$0xf]
      %v465 = vld [vmem:[#allocation2 + $0x28] sm:$0xf]
      %v466 = vld [vmem:[#allocation2 + $0x2c] sm:$0xf]
      %v467 = vld [vmem:[#allocation2 + $0x30] sm:$0xf]
      %v468 = vld [vmem:[#allocation2 + $0x34] sm:$0xf]
      %v469 = vld [vmem:[#allocation2 + $0x38] sm:$0xf]
      %v470 = vld [vmem:[#allocation2 + $0x3c] sm:$0xf]
      %v471 = vld [vmem:[#allocation2 + $0x40] sm:$0xf]
      %v472 = vld [vmem:[#allocation2 + $0x44] sm:$0xf]
      %v473 = vld [vmem:[#allocation2 + $0x48] sm:$0xf]
      %v474 = vld [vmem:[#allocation2 + $0x4c] sm:$0xf]
      %v475 = vld [vmem:[#allocation2 + $0x50] sm:$0xf]
      %v476 = vld [vmem:[#allocation2 + $0x54] sm:$0xf]
      %v477 = vld [vmem:[#allocation2 + $0x58] sm:$0x3]
      %v478 = vld [vmem:[%s2] sm:$0xf]
      %v479 = vld [vmem:[%s2 + $0x4] sm:$0xf]
      %v480 = vld [vmem:[%s2 + $0x8] sm:$0xf]
      %v481 = vld [vmem:[%s2 + $0xc] sm:$0xf]
      %v482 = vld [vmem:[%s2 + $0x10] sm:$0xf]
      %v483 = vld [vmem:[%s2 + $0x14] sm:$0xf]
      %v484 = vld [vmem:[%s2 + $0x18] sm:$0xf]
      %v485 = vld [vmem:[%s2 + $0x1c] sm:$0xf]
      %v486 = vld [vmem:[#allocation2 + $0x58] sm:$0x7]
      %s487 = scalar_lea.vmem %s2, 32
      %v488 = vld [vmem:[%s487] sm:$0xf]
      %v489 = vld [vmem:[%s487 + $0x4] sm:$0xf]
      %v490 = vld [vmem:[%s487 + $0x8] sm:$0xf]
      %v491 = vld [vmem:[%s487 + $0xc] sm:$0xf]
      %v492 = vld [vmem:[%s487 + $0x10] sm:$0xf]
      %v493 = vld [vmem:[%s487 + $0x14] sm:$0xf]
      %v494 = vld [vmem:[%s487 + $0x18] sm:$0xf]
      %v495 = vld [vmem:[%s487 + $0x1c] sm:$0xf]
      %v519 = vunpack.c.l.b16 %v455
      %v520 = vunpack.c.l.b16 %v456
      %v521 = vunpack.c.l.b16 %v457
      %v522 = vunpack.c.l.b16 %v458
      %v523 = vunpack.c.l.b16 %v459
      %v524 = vunpack.c.l.b16 %v460
      %v525 = vunpack.c.l.b16 %v461
      %v526 = vunpack.c.l.b16 %v462
      %v527 = vunpack.c.l.b16 %v463
      %v528 = vunpack.c.l.b16 %v464
      %v529 = vunpack.c.l.b16 %v465
      %v530 = vunpack.c.l.b16 %v466
      %v531 = vunpack.c.l.b16 %v467
      %v532 = vunpack.c.l.b16 %v468
      %v533 = vunpack.c.l.b16 %v469
      %v534 = vunpack.c.l.b16 %v470
      %v535 = vunpack.c.l.b16 %v471
      %v536 = vunpack.c.l.b16 %v472
      %v537 = vunpack.c.l.b16 %v473
      %v538 = vunpack.c.l.b16 %v474
      %v539 = vunpack.c.l.b16 %v475
      %v540 = vunpack.c.l.b16 %v476
      %v541 = vunpack.c.l.b16 %v486
      %v542 = vpack.c.b16 %v520, %v519
      %v543 = vpack.c.b16 %v522, %v521
      %v544 = vpack.c.b16 %v524, %v523
      %v545 = vpack.c.b16 %v526, %v525
      %v546 = vpack.c.b16 %v528, %v527
      %v547 = vpack.c.b16 %v530, %v529
      %v548 = vpack.c.b16 %v532, %v531
      %v549 = vpack.c.b16 %v534, %v533
      %v550 = vpack.c.b16 %v536, %v535
      %v551 = vpack.c.b16 %v538, %v537
      %v552 = vpack.c.b16 %v540, %v539
      %v553 = vpack.c.b16 %v541, %v541
      %vm554 = vsmask.f32 7424
      %v556 = vshrl.u32 %v542, 16
      %v558 = vshll.u32 %v542, 16
      %v560 = vrot.slane %v558, 1
      %v561 = vor.u32 %v556, %v560
      %v563 = vshll.u32 %v543, 16
      %v565 = vrot.slane %v563, 1
      %v566 = vsel %vm554, %v561, %v565
      %v567 = vshrl.u32 %v543, 16
      %v569 = vor.u32 %v567, %v565
      %v571 = vshll.u32 %v544, 16
      %v573 = vrot.slane %v571, 1
      %v574 = vsel %vm554, %v569, %v573
      %v575 = vshrl.u32 %v544, 16
      %v577 = vor.u32 %v575, %v573
      %v579 = vshll.u32 %v545, 16
      %v581 = vrot.slane %v579, 1
      %v582 = vsel %vm554, %v577, %v581
      %v583 = vshrl.u32 %v545, 16
      %v585 = vor.u32 %v583, %v581
      %v587 = vshll.u32 %v546, 16
      %v589 = vrot.slane %v587, 1
      %v590 = vsel %vm554, %v585, %v589
      %v591 = vshrl.u32 %v546, 16
      %v593 = vor.u32 %v591, %v589
      %v595 = vshll.u32 %v547, 16
      %v597 = vrot.slane %v595, 1
      %v598 = vsel %vm554, %v593, %v597
      %v599 = vshrl.u32 %v547, 16
      %v601 = vor.u32 %v599, %v597
      %v603 = vshll.u32 %v548, 16
      %v605 = vrot.slane %v603, 1
      %v606 = vsel %vm554, %v601, %v605
      %v607 = vshrl.u32 %v548, 16
      %v609 = vor.u32 %v607, %v605
      %v611 = vshll.u32 %v549, 16
      %v613 = vrot.slane %v611, 1
      %v614 = vsel %vm554, %v609, %v613
      %v615 = vshrl.u32 %v549, 16
      %v617 = vor.u32 %v615, %v613
      %v619 = vshll.u32 %v550, 16
      %v621 = vrot.slane %v619, 1
      %v622 = vsel %vm554, %v617, %v621
      %v623 = vshrl.u32 %v550, 16
      %v625 = vor.u32 %v623, %v621
      %v627 = vshll.u32 %v551, 16
      %v629 = vrot.slane %v627, 1
      %v630 = vsel %vm554, %v625, %v629
      %v631 = vshrl.u32 %v551, 16
      %v633 = vor.u32 %v631, %v629
      %v635 = vshll.u32 %v552, 16
      %v637 = vrot.slane %v635, 1
      %v638 = vsel %vm554, %v633, %v637
      %v639 = vshrl.u32 %v552, 16
      %v641 = vor.u32 %v639, %v637
      %v643 = vshll.u32 %v553, 16
      %v645 = vrot.slane %v643, 1
      %v646 = vsel %vm554, %v641, %v645
      %v647 = vshrl.u32 %v553, 16
      %v649 = vor.u32 %v647, %v645
      %v658 = vunpack.c.l.b16 %v488
      %v659 = vunpack.c.l.b16 %v489
      %v660 = vunpack.c.l.b16 %v490
      %v661 = vunpack.c.l.b16 %v491
      %v662 = vunpack.c.l.b16 %v492
      %v663 = vunpack.c.l.b16 %v493
      %v664 = vunpack.c.l.b16 %v494
      %v665 = vunpack.c.l.b16 %v495
      %v666 = vpack.c.b16 %v659, %v658
      %v667 = vpack.c.b16 %v661, %v660
      %v668 = vpack.c.b16 %v663, %v662
      %v669 = vpack.c.b16 %v665, %v664
      %vm674 = vcmask 523264
      %v676 = vsel %vm674, %v566, 0
      %v679 = vsel %vm674, %v574, 0
      %v682 = vsel %vm674, %v582, 0
      %v685 = vsel %vm674, %v590, 0
      %v688 = vsel %vm674, %v598, 0
      %v691 = vsel %vm674, %v606, 0
      %v694 = vsel %vm674, %v614, 0
      %v697 = vsel %vm674, %v622, 0
      %v700 = vsel %vm674, %v630, 0
      %v703 = vsel %vm674, %v638, 0
      %v706 = vsel %vm674, %v646, 0
      %v709 = vsel %vm674, %v649, 0
      %711 = vmatpush.bf16.msra.mxu0 0
      %712 = vmatpush.bf16.msra.mxu0 0
      %713 = vmatpush.bf16.msra.mxu0 0
      %714 = vmatpush.bf16.msra.mxu0 0
      %715 = vmatpush.bf16.msra.mxu0 %v669
      %716 = vmatpush.bf16.msra.mxu0 %v668
      %717 = vmatpush.bf16.msra.mxu0 %v667
      %718 = vmatpush.bf16.msra.mxu0 %v666
      %719 = vmatmul.bf16.gmra.mxu0 %v676
      %v720 = vpop.f32.mrf.mxu0
      %v721 = vadd.f32 0.0, %v720
      %v722 = vpop.f32.mrf.mxu0
      %v723 = vadd.f32 0.0, %v722
      %724 = vmatmul.bf16.gmra.mxu0 %v679
      %v725 = vpop.f32.mrf.mxu0
      %v726 = vadd.f32 0.0, %v725
      %v727 = vpop.f32.mrf.mxu0
      %v728 = vadd.f32 0.0, %v727
      %729 = vmatmul.bf16.gmra.mxu0 %v682
      %v730 = vpop.f32.mrf.mxu0
      %v731 = vadd.f32 0.0, %v730
      %v732 = vpop.f32.mrf.mxu0
      %v733 = vadd.f32 0.0, %v732
      %734 = vmatmul.bf16.gmra.mxu0 %v685
      %v735 = vpop.f32.mrf.mxu0
      %v736 = vadd.f32 0.0, %v735
      %v737 = vpop.f32.mrf.mxu0
      %v738 = vadd.f32 0.0, %v737
      %739 = vmatmul.bf16.gmra.mxu0 %v688
      %v740 = vpop.f32.mrf.mxu0
      %v741 = vadd.f32 0.0, %v740
      %v742 = vpop.f32.mrf.mxu0
      %v743 = vadd.f32 0.0, %v742
      %744 = vmatmul.bf16.gmra.mxu0 %v691
      %v745 = vpop.f32.mrf.mxu0
      %v746 = vadd.f32 0.0, %v745
      %v747 = vpop.f32.mrf.mxu0
      %v748 = vadd.f32 0.0, %v747
      %749 = vmatmul.bf16.gmra.mxu0 %v694
      %v750 = vpop.f32.mrf.mxu0
      %v751 = vadd.f32 0.0, %v750
      %v752 = vpop.f32.mrf.mxu0
      %v753 = vadd.f32 0.0, %v752
      %754 = vmatmul.bf16.gmra.mxu0 %v697
      %v755 = vpop.f32.mrf.mxu0
      %v756 = vadd.f32 0.0, %v755
      %v757 = vpop.f32.mrf.mxu0
      %v758 = vadd.f32 0.0, %v757
      %759 = vmatmul.bf16.gmra.mxu0 %v700
      %v760 = vpop.f32.mrf.mxu0
      %v761 = vadd.f32 0.0, %v760
      %v762 = vpop.f32.mrf.mxu0
      %v763 = vadd.f32 0.0, %v762
      %764 = vmatmul.bf16.gmra.mxu0 %v703
      %v765 = vpop.f32.mrf.mxu0
      %v766 = vadd.f32 0.0, %v765
      %v767 = vpop.f32.mrf.mxu0
      %v768 = vadd.f32 0.0, %v767
      %769 = vmatmul.bf16.gmra.mxu0 %v706
      %v770 = vpop.f32.mrf.mxu0
      %v771 = vadd.f32 0.0, %v770
      %v772 = vpop.f32.mrf.mxu0
      %v773 = vadd.f32 0.0, %v772
      %774 = vmatmul.bf16.gmra.mxu0 %v709
      %v775 = vpop.f32.mrf.mxu0
      %v776 = vadd.f32 0.0, %v775
      %v777 = vpop.f32.mrf.mxu0
      %778 = vdwg.mxu0
      %v780 = vunpack.c.l.b16 %v477
      %v781 = vpack.c.b16 %v780, %v780
      %v790 = vunpack.c.l.b16 %v478
      %v791 = vunpack.c.l.b16 %v479
      %v792 = vunpack.c.l.b16 %v480
      %v793 = vunpack.c.l.b16 %v481
      %v794 = vunpack.c.l.b16 %v482
      %v795 = vunpack.c.l.b16 %v483
      %v796 = vunpack.c.l.b16 %v484
      %v797 = vunpack.c.l.b16 %v485
      %v798 = vpack.c.b16 %v791, %v790
      %v799 = vpack.c.b16 %v793, %v792
      %v800 = vpack.c.b16 %v795, %v794
      %v801 = vpack.c.b16 %v797, %v796
      %v806 = vsel %vm674, %v542, 0
      %v808 = vsel %vm674, %v543, 0
      %v810 = vsel %vm674, %v544, 0
      %v812 = vsel %vm674, %v545, 0
      %v814 = vsel %vm674, %v546, 0
      %v816 = vsel %vm674, %v547, 0
      %v818 = vsel %vm674, %v548, 0
      %v820 = vsel %vm674, %v549, 0
      %v822 = vsel %vm674, %v550, 0
      %v824 = vsel %vm674, %v551, 0
      %v826 = vsel %vm674, %v552, 0
      %v829 = vsel %vm674, %v781, 0
      %831 = vmatpush.bf16.msra.mxu0 0
      %832 = vmatpush.bf16.msra.mxu0 0
      %833 = vmatpush.bf16.msra.mxu0 0
      %834 = vmatpush.bf16.msra.mxu0 0
      %835 = vmatpush.bf16.msra.mxu0 %v801
      %836 = vmatpush.bf16.msra.mxu0 %v800
      %837 = vmatpush.bf16.msra.mxu0 %v799
      %838 = vmatpush.bf16.msra.mxu0 %v798
      %839 = vmatmul.bf16.gmra.mxu0 %v806
      %v840 = vpop.f32.mrf.mxu0
      %v841 = vadd.f32 %v721, %v840
      %v842 = vpop.f32.mrf.mxu0
      %v843 = vadd.f32 %v723, %v842
      %844 = vmatmul.bf16.gmra.mxu0 %v808
      %v845 = vpop.f32.mrf.mxu0
      %v846 = vadd.f32 %v726, %v845
      %v847 = vpop.f32.mrf.mxu0
      %v848 = vadd.f32 %v728, %v847
      %849 = vmatmul.bf16.gmra.mxu0 %v810
      %v850 = vpop.f32.mrf.mxu0
      %v851 = vadd.f32 %v731, %v850
      %v852 = vpop.f32.mrf.mxu0
      %v853 = vadd.f32 %v733, %v852
      %854 = vmatmul.bf16.gmra.mxu0 %v812
      %v855 = vpop.f32.mrf.mxu0
      %v856 = vadd.f32 %v736, %v855
      %v857 = vpop.f32.mrf.mxu0
      %v858 = vadd.f32 %v738, %v857
      %859 = vmatmul.bf16.gmra.mxu0 %v814
      %v860 = vpop.f32.mrf.mxu0
      %v861 = vadd.f32 %v741, %v860
      %v862 = vpop.f32.mrf.mxu0
      %v863 = vadd.f32 %v743, %v862
      %864 = vmatmul.bf16.gmra.mxu0 %v816
      %v865 = vpop.f32.mrf.mxu0
      %v866 = vadd.f32 %v746, %v865
      %v867 = vpop.f32.mrf.mxu0
      %v868 = vadd.f32 %v748, %v867
      %869 = vmatmul.bf16.gmra.mxu0 %v818
      %v870 = vpop.f32.mrf.mxu0
      %v871 = vadd.f32 %v751, %v870
      %v872 = vpop.f32.mrf.mxu0
      %v873 = vadd.f32 %v753, %v872
      %874 = vmatmul.bf16.gmra.mxu0 %v820
      %v875 = vpop.f32.mrf.mxu0
      %v876 = vadd.f32 %v756, %v875
      %v877 = vpop.f32.mrf.mxu0
      %v878 = vadd.f32 %v758, %v877
      %879 = vmatmul.bf16.gmra.mxu0 %v822
      %v880 = vpop.f32.mrf.mxu0
      %v881 = vadd.f32 %v761, %v880
      %v882 = vpop.f32.mrf.mxu0
      %v883 = vadd.f32 %v763, %v882
      %884 = vmatmul.bf16.gmra.mxu0 %v824
      %v885 = vpop.f32.mrf.mxu0
      %v886 = vadd.f32 %v766, %v885
      %v887 = vpop.f32.mrf.mxu0
      %v888 = vadd.f32 %v768, %v887
      %889 = vmatmul.bf16.gmra.mxu0 %v826
      %v890 = vpop.f32.mrf.mxu0
      %v891 = vadd.f32 %v771, %v890
      %v892 = vpop.f32.mrf.mxu0
      %v893 = vadd.f32 %v773, %v892
      %894 = vmatmul.bf16.gmra.mxu0 %v829
      %v895 = vpop.f32.mrf.mxu0
      %v896 = vadd.f32 %v776, %v895
      %v897 = vpop.f32.mrf.mxu0
      %898 = vdwg.mxu0
      %v899 = vld [vmem:[#allocation2] sm:$0xe]
      %s900 = scalar_lea.vmem %s2, 64
      %v901 = vld [vmem:[%s900] sm:$0xf]
      %v902 = vld [vmem:[%s900 + $0x4] sm:$0xf]
      %v903 = vld [vmem:[%s900 + $0x8] sm:$0xf]
      %v904 = vld [vmem:[%s900 + $0xc] sm:$0xf]
      %v905 = vld [vmem:[%s900 + $0x10] sm:$0xf]
      %v906 = vld [vmem:[%s900 + $0x14] sm:$0xf]
      %v907 = vld [vmem:[%s900 + $0x18] sm:$0xf]
      %v908 = vld [vmem:[%s900 + $0x1c] sm:$0xf]
      %v910 = vunpack.c.l.b16 %v899
      %v911 = vpack.c.b16 %v520, %v910
      %vm912 = vcmask 1046528
      %v913 = vrot.slane %v911, 1
      %v914 = vrot.slane %v543, 1
      %v915 = vsel %vm912, %v913, %v914
      %v916 = vrot.slane %v544, 1
      %v917 = vsel %vm912, %v914, %v916
      %v918 = vrot.slane %v545, 1
      %v919 = vsel %vm912, %v916, %v918
      %v920 = vrot.slane %v546, 1
      %v921 = vsel %vm912, %v918, %v920
      %v922 = vrot.slane %v547, 1
      %v923 = vsel %vm912, %v920, %v922
      %v924 = vrot.slane %v548, 1
      %v925 = vsel %vm912, %v922, %v924
      %v926 = vrot.slane %v549, 1
      %v927 = vsel %vm912, %v924, %v926
      %v928 = vrot.slane %v550, 1
      %v929 = vsel %vm912, %v926, %v928
      %v930 = vrot.slane %v551, 1
      %v931 = vsel %vm912, %v928, %v930
      %v932 = vrot.slane %v552, 1
      %v933 = vsel %vm912, %v930, %v932
      %v934 = vrot.slane %v553, 1
      %v935 = vsel %vm912, %v932, %v934
      %v944 = vunpack.c.l.b16 %v901
      %v945 = vunpack.c.l.b16 %v902
      %v946 = vunpack.c.l.b16 %v903
      %v947 = vunpack.c.l.b16 %v904
      %v948 = vunpack.c.l.b16 %v905
      %v949 = vunpack.c.l.b16 %v906
      %v950 = vunpack.c.l.b16 %v907
      %v951 = vunpack.c.l.b16 %v908
      %v952 = vpack.c.b16 %v945, %v944
      %v953 = vpack.c.b16 %v947, %v946
      %v954 = vpack.c.b16 %v949, %v948
      %v955 = vpack.c.b16 %v951, %v950
      %v961 = vsel %vm674, %v915, 0
      %v964 = vsel %vm674, %v917, 0
      %v967 = vsel %vm674, %v919, 0
      %v970 = vsel %vm674, %v921, 0
      %v973 = vsel %vm674, %v923, 0
      %v976 = vsel %vm674, %v925, 0
      %v979 = vsel %vm674, %v927, 0
      %v982 = vsel %vm674, %v929, 0
      %v985 = vsel %vm674, %v931, 0
      %v988 = vsel %vm674, %v933, 0
      %v991 = vsel %vm674, %v935, 0
      %v994 = vsel %vm674, %v934, 0
      %996 = vmatpush.bf16.msra.mxu0 0
      %997 = vmatpush.bf16.msra.mxu0 0
      %998 = vmatpush.bf16.msra.mxu0 0
      %999 = vmatpush.bf16.msra.mxu0 0
      %1000 = vmatpush.bf16.msra.mxu0 %v955
      %1001 = vmatpush.bf16.msra.mxu0 %v954
      %1002 = vmatpush.bf16.msra.mxu0 %v953
      %1003 = vmatpush.bf16.msra.mxu0 %v952
      %1004 = vmatmul.bf16.gmra.mxu0 %v961
      %v1005 = vpop.f32.mrf.mxu0
      %v1006 = vadd.f32 0.0, %v1005
      %v1007 = vpop.f32.mrf.mxu0
      %v1008 = vadd.f32 0.0, %v1007
      %1009 = vmatmul.bf16.gmra.mxu0 %v964
      %v1010 = vpop.f32.mrf.mxu0
      %v1011 = vadd.f32 0.0, %v1010
      %v1012 = vpop.f32.mrf.mxu0
      %v1013 = vadd.f32 0.0, %v1012
      %1014 = vmatmul.bf16.gmra.mxu0 %v967
      %v1015 = vpop.f32.mrf.mxu0
      %v1016 = vadd.f32 0.0, %v1015
      %v1017 = vpop.f32.mrf.mxu0
      %v1018 = vadd.f32 0.0, %v1017
      %1019 = vmatmul.bf16.gmra.mxu0 %v970
      %v1020 = vpop.f32.mrf.mxu0
      %v1021 = vadd.f32 0.0, %v1020
      %v1022 = vpop.f32.mrf.mxu0
      %v1023 = vadd.f32 0.0, %v1022
      %1024 = vmatmul.bf16.gmra.mxu0 %v973
      %v1025 = vpop.f32.mrf.mxu0
      %v1026 = vadd.f32 0.0, %v1025
      %v1027 = vpop.f32.mrf.mxu0
      %v1028 = vadd.f32 0.0, %v1027
      %1029 = vmatmul.bf16.gmra.mxu0 %v976
      %v1030 = vpop.f32.mrf.mxu0
      %v1031 = vadd.f32 0.0, %v1030
      %v1032 = vpop.f32.mrf.mxu0
      %v1033 = vadd.f32 0.0, %v1032
      %1034 = vmatmul.bf16.gmra.mxu0 %v979
      %v1035 = vpop.f32.mrf.mxu0
      %v1036 = vadd.f32 0.0, %v1035
      %v1037 = vpop.f32.mrf.mxu0
      %v1038 = vadd.f32 0.0, %v1037
      %1039 = vmatmul.bf16.gmra.mxu0 %v982
      %v1040 = vpop.f32.mrf.mxu0
      %v1041 = vadd.f32 0.0, %v1040
      %v1042 = vpop.f32.mrf.mxu0
      %v1043 = vadd.f32 0.0, %v1042
      %1044 = vmatmul.bf16.gmra.mxu0 %v985
      %v1045 = vpop.f32.mrf.mxu0
      %v1046 = vadd.f32 0.0, %v1045
      %v1047 = vpop.f32.mrf.mxu0
      %v1048 = vadd.f32 0.0, %v1047
      %1049 = vmatmul.bf16.gmra.mxu0 %v988
      %v1050 = vpop.f32.mrf.mxu0
      %v1051 = vadd.f32 0.0, %v1050
      %v1052 = vpop.f32.mrf.mxu0
      %v1053 = vadd.f32 0.0, %v1052
      %1054 = vmatmul.bf16.gmra.mxu0 %v991
      %v1055 = vpop.f32.mrf.mxu0
      %v1056 = vadd.f32 0.0, %v1055
      %v1057 = vpop.f32.mrf.mxu0
      %v1058 = vadd.f32 0.0, %v1057
      %1059 = vmatmul.bf16.gmra.mxu0 %v994
      %v1060 = vpop.f32.mrf.mxu0
      %v1061 = vadd.f32 0.0, %v1060
      %v1062 = vpop.f32.mrf.mxu0
      %1063 = vdwg.mxu0
      %v1064 = vadd.f32 %v841, %v1006
      %v1065 = vadd.f32 %v843, %v1008
      %v1066 = vadd.f32 %v846, %v1011
      %v1067 = vadd.f32 %v848, %v1013
      %v1068 = vadd.f32 %v851, %v1016
      %v1069 = vadd.f32 %v853, %v1018
      %v1070 = vadd.f32 %v856, %v1021
      %v1071 = vadd.f32 %v858, %v1023
      %v1072 = vadd.f32 %v861, %v1026
      %v1073 = vadd.f32 %v863, %v1028
      %v1074 = vadd.f32 %v866, %v1031
      %v1075 = vadd.f32 %v868, %v1033
      %v1076 = vadd.f32 %v871, %v1036
      %v1077 = vadd.f32 %v873, %v1038
      %v1078 = vadd.f32 %v876, %v1041
      %v1079 = vadd.f32 %v878, %v1043
      %v1080 = vadd.f32 %v881, %v1046
      %v1081 = vadd.f32 %v883, %v1048
      %v1082 = vadd.f32 %v886, %v1051
      %v1083 = vadd.f32 %v888, %v1053
      %v1084 = vadd.f32 %v891, %v1056
      %v1085 = vadd.f32 %v893, %v1058
      %v1086 = vadd.f32 %v896, %v1061
      %v1087 = vld [vmem:[#allocation2 + $0x8] sm:$0xe]
      %v1088 = vld [vmem:[#allocation2 + $0xc] sm:$0xf]
      %v1089 = vld [vmem:[#allocation2 + $0x10] sm:$0xf]
      %v1090 = vld [vmem:[#allocation2 + $0x14] sm:$0xf]
      %v1091 = vld [vmem:[#allocation2 + $0x18] sm:$0xf]
      %v1092 = vld [vmem:[#allocation2 + $0x1c] sm:$0xf]
      %v1093 = vld [vmem:[#allocation2 + $0x20] sm:$0xf]
      %v1094 = vld [vmem:[#allocation2 + $0x24] sm:$0xf]
      %v1095 = vld [vmem:[#allocation2 + $0x28] sm:$0xf]
      %v1096 = vld [vmem:[#allocation2 + $0x2c] sm:$0xf]
      %v1097 = vld [vmem:[#allocation2 + $0x30] sm:$0xf]
      %v1098 = vld [vmem:[#allocation2 + $0x34] sm:$0xf]
      %v1099 = vld [vmem:[#allocation2 + $0x38] sm:$0xf]
      %v1100 = vld [vmem:[#allocation2 + $0x3c] sm:$0xf]
      %v1101 = vld [vmem:[#allocation2 + $0x40] sm:$0xf]
      %v1102 = vld [vmem:[#allocation2 + $0x44] sm:$0xf]
      %v1103 = vld [vmem:[#allocation2 + $0x48] sm:$0xf]
      %v1104 = vld [vmem:[#allocation2 + $0x4c] sm:$0xf]
      %v1105 = vld [vmem:[#allocation2 + $0x50] sm:$0xf]
      %v1106 = vld [vmem:[#allocation2 + $0x54] sm:$0xf]
      %v1107 = vld [vmem:[#allocation2 + $0x58] sm:$0xf]
      %v1108 = vld [vmem:[#allocation2 + $0x5c] sm:$0xf]
      %v1109 = vld [vmem:[#allocation2 + $0x60] sm:$0x7]
      %s1110 = scalar_lea.vmem %s2, 96
      %v1111 = vld [vmem:[%s1110] sm:$0xf]
      %v1112 = vld [vmem:[%s1110 + $0x4] sm:$0xf]
      %v1113 = vld [vmem:[%s1110 + $0x8] sm:$0xf]
      %v1114 = vld [vmem:[%s1110 + $0xc] sm:$0xf]
      %v1115 = vld [vmem:[%s1110 + $0x10] sm:$0xf]
      %v1116 = vld [vmem:[%s1110 + $0x14] sm:$0xf]
      %v1117 = vld [vmem:[%s1110 + $0x18] sm:$0xf]
      %v1118 = vld [vmem:[%s1110 + $0x1c] sm:$0xf]
      %v1142 = vunpack.c.l.b16 %v1087
      %v1143 = vunpack.c.l.b16 %v1088
      %v1144 = vunpack.c.l.b16 %v1089
      %v1145 = vunpack.c.l.b16 %v1090
      %v1146 = vunpack.c.l.b16 %v1091
      %v1147 = vunpack.c.l.b16 %v1092
      %v1148 = vunpack.c.l.b16 %v1093
      %v1149 = vunpack.c.l.b16 %v1094
      %v1150 = vunpack.c.l.b16 %v1095
      %v1151 = vunpack.c.l.b16 %v1096
      %v1152 = vunpack.c.l.b16 %v1097
      %v1153 = vunpack.c.l.b16 %v1098
      %v1154 = vunpack.c.l.b16 %v1099
      %v1155 = vunpack.c.l.b16 %v1100
      %v1156 = vunpack.c.l.b16 %v1101
      %v1157 = vunpack.c.l.b16 %v1102
      %v1158 = vunpack.c.l.b16 %v1103
      %v1159 = vunpack.c.l.b16 %v1104
      %v1160 = vunpack.c.l.b16 %v1105
      %v1161 = vunpack.c.l.b16 %v1106
      %v1162 = vunpack.c.l.b16 %v1107
      %v1163 = vunpack.c.l.b16 %v1108
      %v1164 = vunpack.c.l.b16 %v1109
      %v1165 = vpack.c.b16 %v1143, %v1142
      %v1166 = vpack.c.b16 %v1145, %v1144
      %v1167 = vpack.c.b16 %v1147, %v1146
      %v1168 = vpack.c.b16 %v1149, %v1148
      %v1169 = vpack.c.b16 %v1151, %v1150
      %v1170 = vpack.c.b16 %v1153, %v1152
      %v1171 = vpack.c.b16 %v1155, %v1154
      %v1172 = vpack.c.b16 %v1157, %v1156
      %v1173 = vpack.c.b16 %v1159, %v1158
      %v1174 = vpack.c.b16 %v1161, %v1160
      %v1175 = vpack.c.b16 %v1163, %v1162
      %v1176 = vpack.c.b16 %v1164, %v1164
      %v1177 = vrot.slane %v1165, 1
      %v1178 = vrot.slane %v1166, 1
      %v1179 = vsel %vm912, %v1177, %v1178
      %v1180 = vrot.slane %v1167, 1
      %v1181 = vsel %vm912, %v1178, %v1180
      %v1182 = vrot.slane %v1168, 1
      %v1183 = vsel %vm912, %v1180, %v1182
      %v1184 = vrot.slane %v1169, 1
      %v1185 = vsel %vm912, %v1182, %v1184
      %v1186 = vrot.slane %v1170, 1
      %v1187 = vsel %vm912, %v1184, %v1186
      %v1188 = vrot.slane %v1171, 1
      %v1189 = vsel %vm912, %v1186, %v1188
      %v1190 = vrot.slane %v1172, 1
      %v1191 = vsel %vm912, %v1188, %v1190
      %v1192 = vrot.slane %v1173, 1
      %v1193 = vsel %vm912, %v1190, %v1192
      %v1194 = vrot.slane %v1174, 1
      %v1195 = vsel %vm912, %v1192, %v1194
      %v1196 = vrot.slane %v1175, 1
      %v1197 = vsel %vm912, %v1194, %v1196
      %v1198 = vrot.slane %v1176, 1
      %v1199 = vsel %vm912, %v1196, %v1198
      %v1208 = vunpack.c.l.b16 %v1111
      %v1209 = vunpack.c.l.b16 %v1112
      %v1210 = vunpack.c.l.b16 %v1113
      %v1211 = vunpack.c.l.b16 %v1114
      %v1212 = vunpack.c.l.b16 %v1115
      %v1213 = vunpack.c.l.b16 %v1116
      %v1214 = vunpack.c.l.b16 %v1117
      %v1215 = vunpack.c.l.b16 %v1118
      %v1216 = vpack.c.b16 %v1209, %v1208
      %v1217 = vpack.c.b16 %v1211, %v1210
      %v1218 = vpack.c.b16 %v1213, %v1212
      %v1219 = vpack.c.b16 %v1215, %v1214
      %v1225 = vsel %vm674, %v1179, 0
      %v1228 = vsel %vm674, %v1181, 0
      %v1231 = vsel %vm674, %v1183, 0
      %v1234 = vsel %vm674, %v1185, 0
      %v1237 = vsel %vm674, %v1187, 0
      %v1240 = vsel %vm674, %v1189, 0
      %v1243 = vsel %vm674, %v1191, 0
      %v1246 = vsel %vm674, %v1193, 0
      %v1249 = vsel %vm674, %v1195, 0
      %v1252 = vsel %vm674, %v1197, 0
      %v1255 = vsel %vm674, %v1199, 0
      %v1258 = vsel %vm674, %v1198, 0
      %1260 = vmatpush.bf16.msra.mxu0 0
      %1261 = vmatpush.bf16.msra.mxu0 0
      %1262 = vmatpush.bf16.msra.mxu0 0
      %1263 = vmatpush.bf16.msra.mxu0 0
      %1264 = vmatpush.bf16.msra.mxu0 %v1219
      %1265 = vmatpush.bf16.msra.mxu0 %v1218
      %1266 = vmatpush.bf16.msra.mxu0 %v1217
      %1267 = vmatpush.bf16.msra.mxu0 %v1216
      %1268 = vmatmul.bf16.gmra.mxu0 %v1225
      %v1269 = vpop.f32.mrf.mxu0
      %v1270 = vadd.f32 0.0, %v1269
      %v1271 = vpop.f32.mrf.mxu0
      %v1272 = vadd.f32 0.0, %v1271
      %1273 = vmatmul.bf16.gmra.mxu0 %v1228
      %v1274 = vpop.f32.mrf.mxu0
      %v1275 = vadd.f32 0.0, %v1274
      %v1276 = vpop.f32.mrf.mxu0
      %v1277 = vadd.f32 0.0, %v1276
      %1278 = vmatmul.bf16.gmra.mxu0 %v1231
      %v1279 = vpop.f32.mrf.mxu0
      %v1280 = vadd.f32 0.0, %v1279
      %v1281 = vpop.f32.mrf.mxu0
      %v1282 = vadd.f32 0.0, %v1281
      %1283 = vmatmul.bf16.gmra.mxu0 %v1234
      %v1284 = vpop.f32.mrf.mxu0
      %v1285 = vadd.f32 0.0, %v1284
      %v1286 = vpop.f32.mrf.mxu0
      %v1287 = vadd.f32 0.0, %v1286
      %1288 = vmatmul.bf16.gmra.mxu0 %v1237
      %v1289 = vpop.f32.mrf.mxu0
      %v1290 = vadd.f32 0.0, %v1289
      %v1291 = vpop.f32.mrf.mxu0
      %v1292 = vadd.f32 0.0, %v1291
      %1293 = vmatmul.bf16.gmra.mxu0 %v1240
      %v1294 = vpop.f32.mrf.mxu0
      %v1295 = vadd.f32 0.0, %v1294
      %v1296 = vpop.f32.mrf.mxu0
      %v1297 = vadd.f32 0.0, %v1296
      %1298 = vmatmul.bf16.gmra.mxu0 %v1243
      %v1299 = vpop.f32.mrf.mxu0
      %v1300 = vadd.f32 0.0, %v1299
      %v1301 = vpop.f32.mrf.mxu0
      %v1302 = vadd.f32 0.0, %v1301
      %1303 = vmatmul.bf16.gmra.mxu0 %v1246
      %v1304 = vpop.f32.mrf.mxu0
      %v1305 = vadd.f32 0.0, %v1304
      %v1306 = vpop.f32.mrf.mxu0
      %v1307 = vadd.f32 0.0, %v1306
      %1308 = vmatmul.bf16.gmra.mxu0 %v1249
      %v1309 = vpop.f32.mrf.mxu0
      %v1310 = vadd.f32 0.0, %v1309
      %v1311 = vpop.f32.mrf.mxu0
      %v1312 = vadd.f32 0.0, %v1311
      %1313 = vmatmul.bf16.gmra.mxu0 %v1252
      %v1314 = vpop.f32.mrf.mxu0
      %v1315 = vadd.f32 0.0, %v1314
      %v1316 = vpop.f32.mrf.mxu0
      %v1317 = vadd.f32 0.0, %v1316
      %1318 = vmatmul.bf16.gmra.mxu0 %v1255
      %v1319 = vpop.f32.mrf.mxu0
      %v1320 = vadd.f32 0.0, %v1319
      %v1321 = vpop.f32.mrf.mxu0
      %v1322 = vadd.f32 0.0, %v1321
      %1323 = vmatmul.bf16.gmra.mxu0 %v1258
      %v1324 = vpop.f32.mrf.mxu0
      %v1325 = vadd.f32 0.0, %v1324
      %v1326 = vpop.f32.mrf.mxu0
      %1327 = vdwg.mxu0
      %v1328 = vadd.f32 %v1064, %v1270
      %v1329 = vadd.f32 %v1065, %v1272
      %v1330 = vadd.f32 %v1066, %v1275
      %v1331 = vadd.f32 %v1067, %v1277
      %v1332 = vadd.f32 %v1068, %v1280
      %v1333 = vadd.f32 %v1069, %v1282
      %v1334 = vadd.f32 %v1070, %v1285
      %v1335 = vadd.f32 %v1071, %v1287
      %v1336 = vadd.f32 %v1072, %v1290
      %v1337 = vadd.f32 %v1073, %v1292
      %v1338 = vadd.f32 %v1074, %v1295
      %v1339 = vadd.f32 %v1075, %v1297
      %v1340 = vadd.f32 %v1076, %v1300
      %v1341 = vadd.f32 %v1077, %v1302
      %v1342 = vadd.f32 %v1078, %v1305
      %v1343 = vadd.f32 %v1079, %v1307
      %v1344 = vadd.f32 %v1080, %v1310
      %v1345 = vadd.f32 %v1081, %v1312
      %v1346 = vadd.f32 %v1082, %v1315
      %v1347 = vadd.f32 %v1083, %v1317
      %v1348 = vadd.f32 %v1084, %v1320
      %v1349 = vadd.f32 %v1085, %v1322
      %v1350 = vadd.f32 %v1086, %v1325
      %v1351 = vld [vmem:[#allocation2 + $0x60] sm:$0xf]
      %s1352 = scalar_lea.vmem %s2, 128
      %v1353 = vld [vmem:[%s1352] sm:$0xf]
      %v1354 = vld [vmem:[%s1352 + $0x4] sm:$0xf]
      %v1355 = vld [vmem:[%s1352 + $0x8] sm:$0xf]
      %v1356 = vld [vmem:[%s1352 + $0xc] sm:$0xf]
      %v1357 = vld [vmem:[%s1352 + $0x10] sm:$0xf]
      %v1358 = vld [vmem:[%s1352 + $0x14] sm:$0xf]
      %v1359 = vld [vmem:[%s1352 + $0x18] sm:$0xf]
      %v1360 = vld [vmem:[%s1352 + $0x1c] sm:$0xf]
      %v1362 = vunpack.c.l.b16 %v1351
      %v1363 = vpack.c.b16 %v1362, %v1362
      %vm1364 = vsmask.f32 6400
      %v1366 = vshrl.u32 %v1165, 16
      %v1368 = vrot.slane %v1366, 1
      %v1369 = vshll.u32 %v1165, 16
      %v1371 = vrot.slane %v1369, 2
      %v1372 = vor.u32 %v1368, %v1371
      %v1374 = vshrl.u32 %v1166, 16
      %v1376 = vrot.slane %v1374, 1
      %v1377 = vshll.u32 %v1166, 16
      %v1379 = vrot.slane %v1377, 2
      %v1380 = vor.u32 %v1376, %v1379
      %v1381 = vsel %vm1364, %v1372, %v1380
      %v1383 = vshrl.u32 %v1167, 16
      %v1385 = vrot.slane %v1383, 1
      %v1386 = vshll.u32 %v1167, 16
      %v1388 = vrot.slane %v1386, 2
      %v1389 = vor.u32 %v1385, %v1388
      %v1390 = vsel %vm1364, %v1380, %v1389
      %v1392 = vshrl.u32 %v1168, 16
      %v1394 = vrot.slane %v1392, 1
      %v1395 = vshll.u32 %v1168, 16
      %v1397 = vrot.slane %v1395, 2
      %v1398 = vor.u32 %v1394, %v1397
      %v1399 = vsel %vm1364, %v1389, %v1398
      %v1401 = vshrl.u32 %v1169, 16
      %v1403 = vrot.slane %v1401, 1
      %v1404 = vshll.u32 %v1169, 16
      %v1406 = vrot.slane %v1404, 2
      %v1407 = vor.u32 %v1403, %v1406
      %v1408 = vsel %vm1364, %v1398, %v1407
      %v1410 = vshrl.u32 %v1170, 16
      %v1412 = vrot.slane %v1410, 1
      %v1413 = vshll.u32 %v1170, 16
      %v1415 = vrot.slane %v1413, 2
      %v1416 = vor.u32 %v1412, %v1415
      %v1417 = vsel %vm1364, %v1407, %v1416
      %v1419 = vshrl.u32 %v1171, 16
      %v1421 = vrot.slane %v1419, 1
      %v1422 = vshll.u32 %v1171, 16
      %v1424 = vrot.slane %v1422, 2
      %v1425 = vor.u32 %v1421, %v1424
      %v1426 = vsel %vm1364, %v1416, %v1425
      %v1428 = vshrl.u32 %v1172, 16
      %v1430 = vrot.slane %v1428, 1
      %v1431 = vshll.u32 %v1172, 16
      %v1433 = vrot.slane %v1431, 2
      %v1434 = vor.u32 %v1430, %v1433
      %v1435 = vsel %vm1364, %v1425, %v1434
      %v1437 = vshrl.u32 %v1173, 16
      %v1439 = vrot.slane %v1437, 1
      %v1440 = vshll.u32 %v1173, 16
      %v1442 = vrot.slane %v1440, 2
      %v1443 = vor.u32 %v1439, %v1442
      %v1444 = vsel %vm1364, %v1434, %v1443
      %v1446 = vshrl.u32 %v1174, 16
      %v1448 = vrot.slane %v1446, 1
      %v1449 = vshll.u32 %v1174, 16
      %v1451 = vrot.slane %v1449, 2
      %v1452 = vor.u32 %v1448, %v1451
      %v1453 = vsel %vm1364, %v1443, %v1452
      %v1455 = vshrl.u32 %v1175, 16
      %v1457 = vrot.slane %v1455, 1
      %v1458 = vshll.u32 %v1175, 16
      %v1460 = vrot.slane %v1458, 2
      %v1461 = vor.u32 %v1457, %v1460
      %v1462 = vsel %vm1364, %v1452, %v1461
      %v1464 = vshrl.u32 %v1363, 16
      %v1466 = vrot.slane %v1464, 1
      %v1467 = vshll.u32 %v1363, 16
      %v1469 = vrot.slane %v1467, 2
      %v1470 = vor.u32 %v1466, %v1469
      %v1471 = vsel %vm1364, %v1461, %v1470
      %v1480 = vunpack.c.l.b16 %v1353
      %v1481 = vunpack.c.l.b16 %v1354
      %v1482 = vunpack.c.l.b16 %v1355
      %v1483 = vunpack.c.l.b16 %v1356
      %v1484 = vunpack.c.l.b16 %v1357
      %v1485 = vunpack.c.l.b16 %v1358
      %v1486 = vunpack.c.l.b16 %v1359
      %v1487 = vunpack.c.l.b16 %v1360
      %v1488 = vpack.c.b16 %v1481, %v1480
      %v1489 = vpack.c.b16 %v1483, %v1482
      %v1490 = vpack.c.b16 %v1485, %v1484
      %v1491 = vpack.c.b16 %v1487, %v1486
      %v1497 = vsel %vm674, %v1381, 0
      %v1500 = vsel %vm674, %v1390, 0
      %v1503 = vsel %vm674, %v1399, 0
      %v1506 = vsel %vm674, %v1408, 0
      %v1509 = vsel %vm674, %v1417, 0
      %v1512 = vsel %vm674, %v1426, 0
      %v1515 = vsel %vm674, %v1435, 0
      %v1518 = vsel %vm674, %v1444, 0
      %v1521 = vsel %vm674, %v1453, 0
      %v1524 = vsel %vm674, %v1462, 0
      %v1527 = vsel %vm674, %v1471, 0
      %v1530 = vsel %vm674, %v1470, 0
      %1532 = vmatpush.bf16.msra.mxu0 0
      %1533 = vmatpush.bf16.msra.mxu0 0
      %1534 = vmatpush.bf16.msra.mxu0 0
      %1535 = vmatpush.bf16.msra.mxu0 0
      %1536 = vmatpush.bf16.msra.mxu0 %v1491
      %1537 = vmatpush.bf16.msra.mxu0 %v1490
      %1538 = vmatpush.bf16.msra.mxu0 %v1489
      %1539 = vmatpush.bf16.msra.mxu0 %v1488
      %1540 = vmatmul.bf16.gmra.mxu0 %v1497
      %v1541 = vpop.f32.mrf.mxu0
      %v1542 = vadd.f32 0.0, %v1541
      %v1543 = vpop.f32.mrf.mxu0
      %v1544 = vadd.f32 0.0, %v1543
      %1545 = vmatmul.bf16.gmra.mxu0 %v1500
      %v1546 = vpop.f32.mrf.mxu0
      %v1547 = vadd.f32 0.0, %v1546
      %v1548 = vpop.f32.mrf.mxu0
      %v1549 = vadd.f32 0.0, %v1548
      %1550 = vmatmul.bf16.gmra.mxu0 %v1503
      %v1551 = vpop.f32.mrf.mxu0
      %v1552 = vadd.f32 0.0, %v1551
      %v1553 = vpop.f32.mrf.mxu0
      %v1554 = vadd.f32 0.0, %v1553
      %1555 = vmatmul.bf16.gmra.mxu0 %v1506
      %v1556 = vpop.f32.mrf.mxu0
      %v1557 = vadd.f32 0.0, %v1556
      %v1558 = vpop.f32.mrf.mxu0
      %v1559 = vadd.f32 0.0, %v1558
      %1560 = vmatmul.bf16.gmra.mxu0 %v1509
      %v1561 = vpop.f32.mrf.mxu0
      %v1562 = vadd.f32 0.0, %v1561
      %v1563 = vpop.f32.mrf.mxu0
      %v1564 = vadd.f32 0.0, %v1563
      %1565 = vmatmul.bf16.gmra.mxu0 %v1512
      %v1566 = vpop.f32.mrf.mxu0
      %v1567 = vadd.f32 0.0, %v1566
      %v1568 = vpop.f32.mrf.mxu0
      %v1569 = vadd.f32 0.0, %v1568
      %1570 = vmatmul.bf16.gmra.mxu0 %v1515
      %v1571 = vpop.f32.mrf.mxu0
      %v1572 = vadd.f32 0.0, %v1571
      %v1573 = vpop.f32.mrf.mxu0
      %v1574 = vadd.f32 0.0, %v1573
      %1575 = vmatmul.bf16.gmra.mxu0 %v1518
      %v1576 = vpop.f32.mrf.mxu0
      %v1577 = vadd.f32 0.0, %v1576
      %v1578 = vpop.f32.mrf.mxu0
      %v1579 = vadd.f32 0.0, %v1578
      %1580 = vmatmul.bf16.gmra.mxu0 %v1521
      %v1581 = vpop.f32.mrf.mxu0
      %v1582 = vadd.f32 0.0, %v1581
      %v1583 = vpop.f32.mrf.mxu0
      %v1584 = vadd.f32 0.0, %v1583
      %1585 = vmatmul.bf16.gmra.mxu0 %v1524
      %v1586 = vpop.f32.mrf.mxu0
      %v1587 = vadd.f32 0.0, %v1586
      %v1588 = vpop.f32.mrf.mxu0
      %v1589 = vadd.f32 0.0, %v1588
      %1590 = vmatmul.bf16.gmra.mxu0 %v1527
      %v1591 = vpop.f32.mrf.mxu0
      %v1592 = vadd.f32 0.0, %v1591
      %v1593 = vpop.f32.mrf.mxu0
      %v1594 = vadd.f32 0.0, %v1593
      %1595 = vmatmul.bf16.gmra.mxu0 %v1530
      %v1596 = vpop.f32.mrf.mxu0
      %v1597 = vadd.f32 0.0, %v1596
      %v1598 = vpop.f32.mrf.mxu0
      %1599 = vdwg.mxu0
      %v1600 = vadd.f32 %v1328, %v1542
      %v1601 = vadd.f32 %v1329, %v1544
      %v1602 = vadd.f32 %v1330, %v1547
      %v1603 = vadd.f32 %v1331, %v1549
      %v1604 = vadd.f32 %v1332, %v1552
      %v1605 = vadd.f32 %v1333, %v1554
      %v1606 = vadd.f32 %v1334, %v1557
      %v1607 = vadd.f32 %v1335, %v1559
      %v1608 = vadd.f32 %v1336, %v1562
      %v1609 = vadd.f32 %v1337, %v1564
      %v1610 = vadd.f32 %v1338, %v1567
      %v1611 = vadd.f32 %v1339, %v1569
      %v1612 = vadd.f32 %v1340, %v1572
      %v1613 = vadd.f32 %v1341, %v1574
      %v1614 = vadd.f32 %v1342, %v1577
      %v1615 = vadd.f32 %v1343, %v1579
      %v1616 = vadd.f32 %v1344, %v1582
      %v1617 = vadd.f32 %v1345, %v1584
      %v1618 = vadd.f32 %v1346, %v1587
      %v1619 = vadd.f32 %v1347, %v1589
      %v1620 = vadd.f32 %v1348, %v1592
      %v1621 = vadd.f32 %v1349, %v1594
      %v1622 = vadd.f32 %v1350, %v1597
      %v1623 = vld [vmem:[#allocation2 + $0x8] sm:$0xc]
      %s1624 = scalar_lea.vmem %s2, 160
      %v1625 = vld [vmem:[%s1624] sm:$0xf]
      %v1626 = vld [vmem:[%s1624 + $0x4] sm:$0xf]
      %v1627 = vld [vmem:[%s1624 + $0x8] sm:$0xf]
      %v1628 = vld [vmem:[%s1624 + $0xc] sm:$0xf]
      %v1629 = vld [vmem:[%s1624 + $0x10] sm:$0xf]
      %v1630 = vld [vmem:[%s1624 + $0x14] sm:$0xf]
      %v1631 = vld [vmem:[%s1624 + $0x18] sm:$0xf]
      %v1632 = vld [vmem:[%s1624 + $0x1c] sm:$0xf]
      %v1634 = vunpack.c.l.b16 %v1623
      %v1635 = vpack.c.b16 %v1143, %v1634
      %vm1636 = vcmask 1045504
      %v1637 = vrot.slane %v1635, 2
      %v1638 = vrot.slane %v1166, 2
      %v1639 = vsel %vm1636, %v1637, %v1638
      %v1640 = vrot.slane %v1167, 2
      %v1641 = vsel %vm1636, %v1638, %v1640
      %v1642 = vrot.slane %v1168, 2
      %v1643 = vsel %vm1636, %v1640, %v1642
      %v1644 = vrot.slane %v1169, 2
      %v1645 = vsel %vm1636, %v1642, %v1644
      %v1646 = vrot.slane %v1170, 2
      %v1647 = vsel %vm1636, %v1644, %v1646
      %v1648 = vrot.slane %v1171, 2
      %v1649 = vsel %vm1636, %v1646, %v1648
      %v1650 = vrot.slane %v1172, 2
      %v1651 = vsel %vm1636, %v1648, %v1650
      %v1652 = vrot.slane %v1173, 2
      %v1653 = vsel %vm1636, %v1650, %v1652
      %v1654 = vrot.slane %v1174, 2
      %v1655 = vsel %vm1636, %v1652, %v1654
      %v1656 = vrot.slane %v1175, 2
      %v1657 = vsel %vm1636, %v1654, %v1656
      %v1658 = vrot.slane %v1363, 2
      %v1659 = vsel %vm1636, %v1656, %v1658
      %v1668 = vunpack.c.l.b16 %v1625
      %v1669 = vunpack.c.l.b16 %v1626
      %v1670 = vunpack.c.l.b16 %v1627
      %v1671 = vunpack.c.l.b16 %v1628
      %v1672 = vunpack.c.l.b16 %v1629
      %v1673 = vunpack.c.l.b16 %v1630
      %v1674 = vunpack.c.l.b16 %v1631
      %v1675 = vunpack.c.l.b16 %v1632
      %v1676 = vpack.c.b16 %v1669, %v1668
      %v1677 = vpack.c.b16 %v1671, %v1670
      %v1678 = vpack.c.b16 %v1673, %v1672
      %v1679 = vpack.c.b16 %v1675, %v1674
      %v1685 = vsel %vm674, %v1639, 0
      %v1688 = vsel %vm674, %v1641, 0
      %v1691 = vsel %vm674, %v1643, 0
      %v1694 = vsel %vm674, %v1645, 0
      %v1697 = vsel %vm674, %v1647, 0
      %v1700 = vsel %vm674, %v1649, 0
      %v1703 = vsel %vm674, %v1651, 0
      %v1706 = vsel %vm674, %v1653, 0
      %v1709 = vsel %vm674, %v1655, 0
      %v1712 = vsel %vm674, %v1657, 0
      %v1715 = vsel %vm674, %v1659, 0
      %v1718 = vsel %vm674, %v1658, 0
      %1720 = vmatpush.bf16.msra.mxu0 0
      %1721 = vmatpush.bf16.msra.mxu0 0
      %1722 = vmatpush.bf16.msra.mxu0 0
      %1723 = vmatpush.bf16.msra.mxu0 0
      %1724 = vmatpush.bf16.msra.mxu0 %v1679
      %1725 = vmatpush.bf16.msra.mxu0 %v1678
      %1726 = vmatpush.bf16.msra.mxu0 %v1677
      %1727 = vmatpush.bf16.msra.mxu0 %v1676
      %1728 = vmatmul.bf16.gmra.mxu0 %v1685
      %v1729 = vpop.f32.mrf.mxu0
      %v1730 = vadd.f32 0.0, %v1729
      %v1731 = vpop.f32.mrf.mxu0
      %v1732 = vadd.f32 0.0, %v1731
      %1733 = vmatmul.bf16.gmra.mxu0 %v1688
      %v1734 = vpop.f32.mrf.mxu0
      %v1735 = vadd.f32 0.0, %v1734
      %v1736 = vpop.f32.mrf.mxu0
      %v1737 = vadd.f32 0.0, %v1736
      %1738 = vmatmul.bf16.gmra.mxu0 %v1691
      %v1739 = vpop.f32.mrf.mxu0
      %v1740 = vadd.f32 0.0, %v1739
      %v1741 = vpop.f32.mrf.mxu0
      %v1742 = vadd.f32 0.0, %v1741
      %1743 = vmatmul.bf16.gmra.mxu0 %v1694
      %v1744 = vpop.f32.mrf.mxu0
      %v1745 = vadd.f32 0.0, %v1744
      %v1746 = vpop.f32.mrf.mxu0
      %v1747 = vadd.f32 0.0, %v1746
      %1748 = vmatmul.bf16.gmra.mxu0 %v1697
      %v1749 = vpop.f32.mrf.mxu0
      %v1750 = vadd.f32 0.0, %v1749
      %v1751 = vpop.f32.mrf.mxu0
      %v1752 = vadd.f32 0.0, %v1751
      %1753 = vmatmul.bf16.gmra.mxu0 %v1700
      %v1754 = vpop.f32.mrf.mxu0
      %v1755 = vadd.f32 0.0, %v1754
      %v1756 = vpop.f32.mrf.mxu0
      %v1757 = vadd.f32 0.0, %v1756
      %1758 = vmatmul.bf16.gmra.mxu0 %v1703
      %v1759 = vpop.f32.mrf.mxu0
      %v1760 = vadd.f32 0.0, %v1759
      %v1761 = vpop.f32.mrf.mxu0
      %v1762 = vadd.f32 0.0, %v1761
      %1763 = vmatmul.bf16.gmra.mxu0 %v1706
      %v1764 = vpop.f32.mrf.mxu0
      %v1765 = vadd.f32 0.0, %v1764
      %v1766 = vpop.f32.mrf.mxu0
      %v1767 = vadd.f32 0.0, %v1766
      %1768 = vmatmul.bf16.gmra.mxu0 %v1709
      %v1769 = vpop.f32.mrf.mxu0
      %v1770 = vadd.f32 0.0, %v1769
      %v1771 = vpop.f32.mrf.mxu0
      %v1772 = vadd.f32 0.0, %v1771
      %1773 = vmatmul.bf16.gmra.mxu0 %v1712
      %v1774 = vpop.f32.mrf.mxu0
      %v1775 = vadd.f32 0.0, %v1774
      %v1776 = vpop.f32.mrf.mxu0
      %v1777 = vadd.f32 0.0, %v1776
      %1778 = vmatmul.bf16.gmra.mxu0 %v1715
      %v1779 = vpop.f32.mrf.mxu0
      %v1780 = vadd.f32 0.0, %v1779
      %v1781 = vpop.f32.mrf.mxu0
      %v1782 = vadd.f32 0.0, %v1781
      %1783 = vmatmul.bf16.gmra.mxu0 %v1718
      %v1784 = vpop.f32.mrf.mxu0
      %v1785 = vadd.f32 0.0, %v1784
      %v1786 = vpop.f32.mrf.mxu0
      %1787 = vdwg.mxu0
      %v1788 = vadd.f32 %v1600, %v1730
      %v1789 = vadd.f32 %v1601, %v1732
      %v1790 = vadd.f32 %v1602, %v1735
      %v1791 = vadd.f32 %v1603, %v1737
      %v1792 = vadd.f32 %v1604, %v1740
      %v1793 = vadd.f32 %v1605, %v1742
      %v1794 = vadd.f32 %v1606, %v1745
      %v1795 = vadd.f32 %v1607, %v1747
      %v1796 = vadd.f32 %v1608, %v1750
      %v1797 = vadd.f32 %v1609, %v1752
      %v1798 = vadd.f32 %v1610, %v1755
      %v1799 = vadd.f32 %v1611, %v1757
      %v1800 = vadd.f32 %v1612, %v1760
      %v1801 = vadd.f32 %v1613, %v1762
      %v1802 = vadd.f32 %v1614, %v1765
      %v1803 = vadd.f32 %v1615, %v1767
      %v1804 = vadd.f32 %v1616, %v1770
      %v1805 = vadd.f32 %v1617, %v1772
      %v1806 = vadd.f32 %v1618, %v1775
      %v1807 = vadd.f32 %v1619, %v1777
      %v1808 = vadd.f32 %v1620, %v1780
      %v1809 = vadd.f32 %v1621, %v1782
      %v1810 = vadd.f32 %v1622, %v1785
      %v1811 = vld [vmem:[#allocation2 + $0x10] sm:$0xc]
      %v1812 = vld [vmem:[#allocation2 + $0x14] sm:$0xf]
      %v1813 = vld [vmem:[#allocation2 + $0x18] sm:$0xf]
      %v1814 = vld [vmem:[#allocation2 + $0x1c] sm:$0xf]
      %v1815 = vld [vmem:[#allocation2 + $0x20] sm:$0xf]
      %v1816 = vld [vmem:[#allocation2 + $0x24] sm:$0xf]
      %v1817 = vld [vmem:[#allocation2 + $0x28] sm:$0xf]
      %v1818 = vld [vmem:[#allocation2 + $0x2c] sm:$0xf]
      %v1819 = vld [vmem:[#allocation2 + $0x30] sm:$0xf]
      %v1820 = vld [vmem:[#allocation2 + $0x34] sm:$0xf]
      %v1821 = vld [vmem:[#allocation2 + $0x38] sm:$0xf]
      %v1822 = vld [vmem:[#allocation2 + $0x3c] sm:$0xf]
      %v1823 = vld [vmem:[#allocation2 + $0x40] sm:$0xf]
      %v1824 = vld [vmem:[#allocation2 + $0x44] sm:$0xf]
      %v1825 = vld [vmem:[#allocation2 + $0x48] sm:$0xf]
      %v1826 = vld [vmem:[#allocation2 + $0x4c] sm:$0xf]
      %v1827 = vld [vmem:[#allocation2 + $0x50] sm:$0xf]
      %v1828 = vld [vmem:[#allocation2 + $0x54] sm:$0xf]
      %v1829 = vld [vmem:[#allocation2 + $0x58] sm:$0xf]
      %v1830 = vld [vmem:[#allocation2 + $0x5c] sm:$0xf]
      %v1831 = vld [vmem:[#allocation2 + $0x60] sm:$0xf]
      %v1832 = vld [vmem:[#allocation2 + $0x64] sm:$0xf]
      %v1833 = vld [vmem:[#allocation2 + $0x68] sm:$0xf]
      %s1834 = scalar_lea.vmem %s2, 192
      %v1835 = vld [vmem:[%s1834] sm:$0xf]
      %v1836 = vld [vmem:[%s1834 + $0x4] sm:$0xf]
      %v1837 = vld [vmem:[%s1834 + $0x8] sm:$0xf]
      %v1838 = vld [vmem:[%s1834 + $0xc] sm:$0xf]
      %v1839 = vld [vmem:[%s1834 + $0x10] sm:$0xf]
      %v1840 = vld [vmem:[%s1834 + $0x14] sm:$0xf]
      %v1841 = vld [vmem:[%s1834 + $0x18] sm:$0xf]
      %v1842 = vld [vmem:[%s1834 + $0x1c] sm:$0xf]
      %v1866 = vunpack.c.l.b16 %v1811
      %v1867 = vunpack.c.l.b16 %v1812
      %v1868 = vunpack.c.l.b16 %v1813
      %v1869 = vunpack.c.l.b16 %v1814
      %v1870 = vunpack.c.l.b16 %v1815
      %v1871 = vunpack.c.l.b16 %v1816
      %v1872 = vunpack.c.l.b16 %v1817
      %v1873 = vunpack.c.l.b16 %v1818
      %v1874 = vunpack.c.l.b16 %v1819
      %v1875 = vunpack.c.l.b16 %v1820
      %v1876 = vunpack.c.l.b16 %v1821
      %v1877 = vunpack.c.l.b16 %v1822
      %v1878 = vunpack.c.l.b16 %v1823
      %v1879 = vunpack.c.l.b16 %v1824
      %v1880 = vunpack.c.l.b16 %v1825
      %v1881 = vunpack.c.l.b16 %v1826
      %v1882 = vunpack.c.l.b16 %v1827
      %v1883 = vunpack.c.l.b16 %v1828
      %v1884 = vunpack.c.l.b16 %v1829
      %v1885 = vunpack.c.l.b16 %v1830
      %v1886 = vunpack.c.l.b16 %v1831
      %v1887 = vunpack.c.l.b16 %v1832
      %v1888 = vunpack.c.l.b16 %v1833
      %v1889 = vpack.c.b16 %v1867, %v1866
      %v1890 = vpack.c.b16 %v1869, %v1868
      %v1891 = vpack.c.b16 %v1871, %v1870
      %v1892 = vpack.c.b16 %v1873, %v1872
      %v1893 = vpack.c.b16 %v1875, %v1874
      %v1894 = vpack.c.b16 %v1877, %v1876
      %v1895 = vpack.c.b16 %v1879, %v1878
      %v1896 = vpack.c.b16 %v1881, %v1880
      %v1897 = vpack.c.b16 %v1883, %v1882
      %v1898 = vpack.c.b16 %v1885, %v1884
      %v1899 = vpack.c.b16 %v1887, %v1886
      %v1900 = vpack.c.b16 %v1888, %v1888
      %v1901 = vrot.slane %v1889, 2
      %v1902 = vrot.slane %v1890, 2
      %v1903 = vsel %vm1636, %v1901, %v1902
      %v1904 = vrot.slane %v1891, 2
      %v1905 = vsel %vm1636, %v1902, %v1904
      %v1906 = vrot.slane %v1892, 2
      %v1907 = vsel %vm1636, %v1904, %v1906
      %v1908 = vrot.slane %v1893, 2
      %v1909 = vsel %vm1636, %v1906, %v1908
      %v1910 = vrot.slane %v1894, 2
      %v1911 = vsel %vm1636, %v1908, %v1910
      %v1912 = vrot.slane %v1895, 2
      %v1913 = vsel %vm1636, %v1910, %v1912
      %v1914 = vrot.slane %v1896, 2
      %v1915 = vsel %vm1636, %v1912, %v1914
      %v1916 = vrot.slane %v1897, 2
      %v1917 = vsel %vm1636, %v1914, %v1916
      %v1918 = vrot.slane %v1898, 2
      %v1919 = vsel %vm1636, %v1916, %v1918
      %v1920 = vrot.slane %v1899, 2
      %v1921 = vsel %vm1636, %v1918, %v1920
      %v1922 = vrot.slane %v1900, 2
      %v1923 = vsel %vm1636, %v1920, %v1922
      %v1932 = vunpack.c.l.b16 %v1835
      %v1933 = vunpack.c.l.b16 %v1836
      %v1934 = vunpack.c.l.b16 %v1837
      %v1935 = vunpack.c.l.b16 %v1838
      %v1936 = vunpack.c.l.b16 %v1839
      %v1937 = vunpack.c.l.b16 %v1840
      %v1938 = vunpack.c.l.b16 %v1841
      %v1939 = vunpack.c.l.b16 %v1842
      %v1940 = vpack.c.b16 %v1933, %v1932
      %v1941 = vpack.c.b16 %v1935, %v1934
      %v1942 = vpack.c.b16 %v1937, %v1936
      %v1943 = vpack.c.b16 %v1939, %v1938
      %v1949 = vsel %vm674, %v1903, 0
      %v1952 = vsel %vm674, %v1905, 0
      %v1955 = vsel %vm674, %v1907, 0
      %v1958 = vsel %vm674, %v1909, 0
      %v1961 = vsel %vm674, %v1911, 0
      %v1964 = vsel %vm674, %v1913, 0
      %v1967 = vsel %vm674, %v1915, 0
      %v1970 = vsel %vm674, %v1917, 0
      %v1973 = vsel %vm674, %v1919, 0
      %v1976 = vsel %vm674, %v1921, 0
      %v1979 = vsel %vm674, %v1923, 0
      %v1982 = vsel %vm674, %v1922, 0
      %1984 = vmatpush.bf16.msra.mxu0 0
      %1985 = vmatpush.bf16.msra.mxu0 0
      %1986 = vmatpush.bf16.msra.mxu0 0
      %1987 = vmatpush.bf16.msra.mxu0 0
      %1988 = vmatpush.bf16.msra.mxu0 %v1943
      %1989 = vmatpush.bf16.msra.mxu0 %v1942
      %1990 = vmatpush.bf16.msra.mxu0 %v1941
      %1991 = vmatpush.bf16.msra.mxu0 %v1940
      %1992 = vmatmul.bf16.gmra.mxu0 %v1949
      %v1993 = vpop.f32.mrf.mxu0
      %v1994 = vadd.f32 0.0, %v1993
      %v1995 = vpop.f32.mrf.mxu0
      %v1996 = vadd.f32 0.0, %v1995
      %1997 = vmatmul.bf16.gmra.mxu0 %v1952
      %v1998 = vpop.f32.mrf.mxu0
      %v1999 = vadd.f32 0.0, %v1998
      %v2000 = vpop.f32.mrf.mxu0
      %v2001 = vadd.f32 0.0, %v2000
      %2002 = vmatmul.bf16.gmra.mxu0 %v1955
      %v2003 = vpop.f32.mrf.mxu0
      %v2004 = vadd.f32 0.0, %v2003
      %v2005 = vpop.f32.mrf.mxu0
      %v2006 = vadd.f32 0.0, %v2005
      %2007 = vmatmul.bf16.gmra.mxu0 %v1958
      %v2008 = vpop.f32.mrf.mxu0
      %v2009 = vadd.f32 0.0, %v2008
      %v2010 = vpop.f32.mrf.mxu0
      %v2011 = vadd.f32 0.0, %v2010
      %2012 = vmatmul.bf16.gmra.mxu0 %v1961
      %v2013 = vpop.f32.mrf.mxu0
      %v2014 = vadd.f32 0.0, %v2013
      %v2015 = vpop.f32.mrf.mxu0
      %v2016 = vadd.f32 0.0, %v2015
      %2017 = vmatmul.bf16.gmra.mxu0 %v1964
      %v2018 = vpop.f32.mrf.mxu0
      %v2019 = vadd.f32 0.0, %v2018
      %v2020 = vpop.f32.mrf.mxu0
      %v2021 = vadd.f32 0.0, %v2020
      %2022 = vmatmul.bf16.gmra.mxu0 %v1967
      %v2023 = vpop.f32.mrf.mxu0
      %v2024 = vadd.f32 0.0, %v2023
      %v2025 = vpop.f32.mrf.mxu0
      %v2026 = vadd.f32 0.0, %v2025
      %2027 = vmatmul.bf16.gmra.mxu0 %v1970
      %v2028 = vpop.f32.mrf.mxu0
      %v2029 = vadd.f32 0.0, %v2028
      %v2030 = vpop.f32.mrf.mxu0
      %v2031 = vadd.f32 0.0, %v2030
      %2032 = vmatmul.bf16.gmra.mxu0 %v1973
      %v2033 = vpop.f32.mrf.mxu0
      %v2034 = vadd.f32 0.0, %v2033
      %v2035 = vpop.f32.mrf.mxu0
      %v2036 = vadd.f32 0.0, %v2035
      %2037 = vmatmul.bf16.gmra.mxu0 %v1976
      %v2038 = vpop.f32.mrf.mxu0
      %v2039 = vadd.f32 0.0, %v2038
      %v2040 = vpop.f32.mrf.mxu0
      %v2041 = vadd.f32 0.0, %v2040
      %2042 = vmatmul.bf16.gmra.mxu0 %v1979
      %v2043 = vpop.f32.mrf.mxu0
      %v2044 = vadd.f32 0.0, %v2043
      %v2045 = vpop.f32.mrf.mxu0
      %v2046 = vadd.f32 0.0, %v2045
      %2047 = vmatmul.bf16.gmra.mxu0 %v1982
      %v2048 = vpop.f32.mrf.mxu0
      %v2049 = vadd.f32 0.0, %v2048
      %v2050 = vpop.f32.mrf.mxu0
      %2051 = vdwg.mxu0
      %v2052 = vadd.f32 %v1788, %v1994
      %v2053 = vadd.f32 %v1789, %v1996
      %v2054 = vadd.f32 %v1790, %v1999
      %v2055 = vadd.f32 %v1791, %v2001
      %v2056 = vadd.f32 %v1792, %v2004
      %v2057 = vadd.f32 %v1793, %v2006
      %v2058 = vadd.f32 %v1794, %v2009
      %v2059 = vadd.f32 %v1795, %v2011
      %v2060 = vadd.f32 %v1796, %v2014
      %v2061 = vadd.f32 %v1797, %v2016
      %v2062 = vadd.f32 %v1798, %v2019
      %v2063 = vadd.f32 %v1799, %v2021
      %v2064 = vadd.f32 %v1800, %v2024
      %v2065 = vadd.f32 %v1801, %v2026
      %v2066 = vadd.f32 %v1802, %v2029
      %v2067 = vadd.f32 %v1803, %v2031
      %v2068 = vadd.f32 %v1804, %v2034
      %v2069 = vadd.f32 %v1805, %v2036
      %v2070 = vadd.f32 %v1806, %v2039
      %v2071 = vadd.f32 %v1807, %v2041
      %v2072 = vadd.f32 %v1808, %v2044
      %v2073 = vadd.f32 %v1809, %v2046
      %v2074 = vadd.f32 %v1810, %v2049
      %v2075 = vld [vmem:[#allocation2 + $0x10] sm:$0xc]
      %v2076 = vld [vmem:[#allocation2 + $0x14] sm:$0xf]
      %v2077 = vld [vmem:[#allocation2 + $0x18] sm:$0xf]
      %v2078 = vld [vmem:[#allocation2 + $0x1c] sm:$0xf]
      %v2079 = vld [vmem:[#allocation2 + $0x20] sm:$0xf]
      %v2080 = vld [vmem:[#allocation2 + $0x24] sm:$0xf]
      %v2081 = vld [vmem:[#allocation2 + $0x28] sm:$0xf]
      %v2082 = vld [vmem:[#allocation2 + $0x2c] sm:$0xf]
      %v2083 = vld [vmem:[#allocation2 + $0x30] sm:$0xf]
      %v2084 = vld [vmem:[#allocation2 + $0x34] sm:$0xf]
      %v2085 = vld [vmem:[#allocation2 + $0x38] sm:$0xf]
      %v2086 = vld [vmem:[#allocation2 + $0x3c] sm:$0xf]
      %v2087 = vld [vmem:[#allocation2 + $0x40] sm:$0xf]
      %v2088 = vld [vmem:[#allocation2 + $0x44] sm:$0xf]
      %v2089 = vld [vmem:[#allocation2 + $0x48] sm:$0xf]
      %v2090 = vld [vmem:[#allocation2 + $0x4c] sm:$0xf]
      %v2091 = vld [vmem:[#allocation2 + $0x50] sm:$0xf]
      %v2092 = vld [vmem:[#allocation2 + $0x54] sm:$0xf]
      %v2093 = vld [vmem:[#allocation2 + $0x58] sm:$0xf]
      %v2094 = vld [vmem:[#allocation2 + $0x5c] sm:$0xf]
      %v2095 = vld [vmem:[#allocation2 + $0x60] sm:$0xf]
      %v2096 = vld [vmem:[#allocation2 + $0x64] sm:$0xf]
      %v2097 = vld [vmem:[#allocation2 + $0x68] sm:$0xf]
      %v2098 = vld [vmem:[#allocation2 + $0x6c] sm:$0x1]
      %s2099 = scalar_lea.vmem %s2, 224
      %v2100 = vld [vmem:[%s2099] sm:$0xf]
      %v2101 = vld [vmem:[%s2099 + $0x4] sm:$0xf]
      %v2102 = vld [vmem:[%s2099 + $0x8] sm:$0xf]
      %v2103 = vld [vmem:[%s2099 + $0xc] sm:$0xf]
      %v2104 = vld [vmem:[%s2099 + $0x10] sm:$0xf]
      %v2105 = vld [vmem:[%s2099 + $0x14] sm:$0xf]
      %v2106 = vld [vmem:[%s2099 + $0x18] sm:$0xf]
      %v2107 = vld [vmem:[%s2099 + $0x1c] sm:$0xf]
      %v2132 = vunpack.c.l.b16 %v2075
      %v2133 = vunpack.c.l.b16 %v2076
      %v2134 = vunpack.c.l.b16 %v2077
      %v2135 = vunpack.c.l.b16 %v2078
      %v2136 = vunpack.c.l.b16 %v2079
      %v2137 = vunpack.c.l.b16 %v2080
      %v2138 = vunpack.c.l.b16 %v2081
      %v2139 = vunpack.c.l.b16 %v2082
      %v2140 = vunpack.c.l.b16 %v2083
      %v2141 = vunpack.c.l.b16 %v2084
      %v2142 = vunpack.c.l.b16 %v2085
      %v2143 = vunpack.c.l.b16 %v2086
      %v2144 = vunpack.c.l.b16 %v2087
      %v2145 = vunpack.c.l.b16 %v2088
      %v2146 = vunpack.c.l.b16 %v2089
      %v2147 = vunpack.c.l.b16 %v2090
      %v2148 = vunpack.c.l.b16 %v2091
      %v2149 = vunpack.c.l.b16 %v2092
      %v2150 = vunpack.c.l.b16 %v2093
      %v2151 = vunpack.c.l.b16 %v2094
      %v2152 = vunpack.c.l.b16 %v2095
      %v2153 = vunpack.c.l.b16 %v2096
      %v2154 = vunpack.c.l.b16 %v2097
      %v2155 = vunpack.c.l.b16 %v2098
      %v2156 = vpack.c.b16 %v2133, %v2132
      %v2157 = vpack.c.b16 %v2135, %v2134
      %v2158 = vpack.c.b16 %v2137, %v2136
      %v2159 = vpack.c.b16 %v2139, %v2138
      %v2160 = vpack.c.b16 %v2141, %v2140
      %v2161 = vpack.c.b16 %v2143, %v2142
      %v2162 = vpack.c.b16 %v2145, %v2144
      %v2163 = vpack.c.b16 %v2147, %v2146
      %v2164 = vpack.c.b16 %v2149, %v2148
      %v2165 = vpack.c.b16 %v2151, %v2150
      %v2166 = vpack.c.b16 %v2153, %v2152
      %v2167 = vpack.c.b16 %v2155, %v2154
      %vm2168 = vsmask.f32 5376
      %v2170 = vshrl.u32 %v2156, 16
      %v2172 = vrot.slane %v2170, 2
      %v2173 = vshll.u32 %v2156, 16
      %v2175 = vrot.slane %v2173, 3
      %v2176 = vor.u32 %v2172, %v2175
      %v2178 = vshrl.u32 %v2157, 16
      %v2180 = vrot.slane %v2178, 2
      %v2181 = vshll.u32 %v2157, 16
      %v2183 = vrot.slane %v2181, 3
      %v2184 = vor.u32 %v2180, %v2183
      %v2185 = vsel %vm2168, %v2176, %v2184
      %v2187 = vshrl.u32 %v2158, 16
      %v2189 = vrot.slane %v2187, 2
      %v2190 = vshll.u32 %v2158, 16
      %v2192 = vrot.slane %v2190, 3
      %v2193 = vor.u32 %v2189, %v2192
      %v2194 = vsel %vm2168, %v2184, %v2193
      %v2196 = vshrl.u32 %v2159, 16
      %v2198 = vrot.slane %v2196, 2
      %v2199 = vshll.u32 %v2159, 16
      %v2201 = vrot.slane %v2199, 3
      %v2202 = vor.u32 %v2198, %v2201
      %v2203 = vsel %vm2168, %v2193, %v2202
      %v2205 = vshrl.u32 %v2160, 16
      %v2207 = vrot.slane %v2205, 2
      %v2208 = vshll.u32 %v2160, 16
      %v2210 = vrot.slane %v2208, 3
      %v2211 = vor.u32 %v2207, %v2210
      %v2212 = vsel %vm2168, %v2202, %v2211
      %v2214 = vshrl.u32 %v2161, 16
      %v2216 = vrot.slane %v2214, 2
      %v2217 = vshll.u32 %v2161, 16
      %v2219 = vrot.slane %v2217, 3
      %v2220 = vor.u32 %v2216, %v2219
      %v2221 = vsel %vm2168, %v2211, %v2220
      %v2223 = vshrl.u32 %v2162, 16
      %v2225 = vrot.slane %v2223, 2
      %v2226 = vshll.u32 %v2162, 16
      %v2228 = vrot.slane %v2226, 3
      %v2229 = vor.u32 %v2225, %v2228
      %v2230 = vsel %vm2168, %v2220, %v2229
      %v2232 = vshrl.u32 %v2163, 16
      %v2234 = vrot.slane %v2232, 2
      %v2235 = vshll.u32 %v2163, 16
      %v2237 = vrot.slane %v2235, 3
      %v2238 = vor.u32 %v2234, %v2237
      %v2239 = vsel %vm2168, %v2229, %v2238
      %v2241 = vshrl.u32 %v2164, 16
      %v2243 = vrot.slane %v2241, 2
      %v2244 = vshll.u32 %v2164, 16
      %v2246 = vrot.slane %v2244, 3
      %v2247 = vor.u32 %v2243, %v2246
      %v2248 = vsel %vm2168, %v2238, %v2247
      %v2250 = vshrl.u32 %v2165, 16
      %v2252 = vrot.slane %v2250, 2
      %v2253 = vshll.u32 %v2165, 16
      %v2255 = vrot.slane %v2253, 3
      %v2256 = vor.u32 %v2252, %v2255
      %v2257 = vsel %vm2168, %v2247, %v2256
      %v2259 = vshrl.u32 %v2166, 16
      %v2261 = vrot.slane %v2259, 2
      %v2262 = vshll.u32 %v2166, 16
      %v2264 = vrot.slane %v2262, 3
      %v2265 = vor.u32 %v2261, %v2264
      %v2266 = vsel %vm2168, %v2256, %v2265
      %v2268 = vshrl.u32 %v2167, 16
      %v2270 = vrot.slane %v2268, 2
      %v2271 = vshll.u32 %v2167, 16
      %v2273 = vrot.slane %v2271, 3
      %v2274 = vor.u32 %v2270, %v2273
      %v2275 = vsel %vm2168, %v2265, %v2274
      %v2284 = vunpack.c.l.b16 %v2100
      %v2285 = vunpack.c.l.b16 %v2101
      %v2286 = vunpack.c.l.b16 %v2102
      %v2287 = vunpack.c.l.b16 %v2103
      %v2288 = vunpack.c.l.b16 %v2104
      %v2289 = vunpack.c.l.b16 %v2105
      %v2290 = vunpack.c.l.b16 %v2106
      %v2291 = vunpack.c.l.b16 %v2107
      %v2292 = vpack.c.b16 %v2285, %v2284
      %v2293 = vpack.c.b16 %v2287, %v2286
      %v2294 = vpack.c.b16 %v2289, %v2288
      %v2295 = vpack.c.b16 %v2291, %v2290
      %v2301 = vsel %vm674, %v2185, 0
      %v2304 = vsel %vm674, %v2194, 0
      %v2307 = vsel %vm674, %v2203, 0
      %v2310 = vsel %vm674, %v2212, 0
      %v2313 = vsel %vm674, %v2221, 0
      %v2316 = vsel %vm674, %v2230, 0
      %v2319 = vsel %vm674, %v2239, 0
      %v2322 = vsel %vm674, %v2248, 0
      %v2325 = vsel %vm674, %v2257, 0
      %v2328 = vsel %vm674, %v2266, 0
      %v2331 = vsel %vm674, %v2275, 0
      %v2334 = vsel %vm674, %v2274, 0
      %2336 = vmatpush.bf16.msra.mxu0 0
      %2337 = vmatpush.bf16.msra.mxu0 0
      %2338 = vmatpush.bf16.msra.mxu0 0
      %2339 = vmatpush.bf16.msra.mxu0 0
      %2340 = vmatpush.bf16.msra.mxu0 %v2295
      %2341 = vmatpush.bf16.msra.mxu0 %v2294
      %2342 = vmatpush.bf16.msra.mxu0 %v2293
      %2343 = vmatpush.bf16.msra.mxu0 %v2292
      %2344 = vmatmul.bf16.gmra.mxu0 %v2301
      %v2345 = vpop.f32.mrf.mxu0
      %v2346 = vadd.f32 0.0, %v2345
      %v2347 = vpop.f32.mrf.mxu0
      %v2348 = vadd.f32 0.0, %v2347
      %2349 = vmatmul.bf16.gmra.mxu0 %v2304
      %v2350 = vpop.f32.mrf.mxu0
      %v2351 = vadd.f32 0.0, %v2350
      %v2352 = vpop.f32.mrf.mxu0
      %v2353 = vadd.f32 0.0, %v2352
      %2354 = vmatmul.bf16.gmra.mxu0 %v2307
      %v2355 = vpop.f32.mrf.mxu0
      %v2356 = vadd.f32 0.0, %v2355
      %v2357 = vpop.f32.mrf.mxu0
      %v2358 = vadd.f32 0.0, %v2357
      %2359 = vmatmul.bf16.gmra.mxu0 %v2310
      %v2360 = vpop.f32.mrf.mxu0
      %v2361 = vadd.f32 0.0, %v2360
      %v2362 = vpop.f32.mrf.mxu0
      %v2363 = vadd.f32 0.0, %v2362
      %2364 = vmatmul.bf16.gmra.mxu0 %v2313
      %v2365 = vpop.f32.mrf.mxu0
      %v2366 = vadd.f32 0.0, %v2365
      %v2367 = vpop.f32.mrf.mxu0
      %v2368 = vadd.f32 0.0, %v2367
      %2369 = vmatmul.bf16.gmra.mxu0 %v2316
      %v2370 = vpop.f32.mrf.mxu0
      %v2371 = vadd.f32 0.0, %v2370
      %v2372 = vpop.f32.mrf.mxu0
      %v2373 = vadd.f32 0.0, %v2372
      %2374 = vmatmul.bf16.gmra.mxu0 %v2319
      %v2375 = vpop.f32.mrf.mxu0
      %v2376 = vadd.f32 0.0, %v2375
      %v2377 = vpop.f32.mrf.mxu0
      %v2378 = vadd.f32 0.0, %v2377
      %2379 = vmatmul.bf16.gmra.mxu0 %v2322
      %v2380 = vpop.f32.mrf.mxu0
      %v2381 = vadd.f32 0.0, %v2380
      %v2382 = vpop.f32.mrf.mxu0
      %v2383 = vadd.f32 0.0, %v2382
      %2384 = vmatmul.bf16.gmra.mxu0 %v2325
      %v2385 = vpop.f32.mrf.mxu0
      %v2386 = vadd.f32 0.0, %v2385
      %v2387 = vpop.f32.mrf.mxu0
      %v2388 = vadd.f32 0.0, %v2387
      %2389 = vmatmul.bf16.gmra.mxu0 %v2328
      %v2390 = vpop.f32.mrf.mxu0
      %v2391 = vadd.f32 0.0, %v2390
      %v2392 = vpop.f32.mrf.mxu0
      %v2393 = vadd.f32 0.0, %v2392
      %2394 = vmatmul.bf16.gmra.mxu0 %v2331
      %v2395 = vpop.f32.mrf.mxu0
      %v2396 = vadd.f32 0.0, %v2395
      %v2397 = vpop.f32.mrf.mxu0
      %v2398 = vadd.f32 0.0, %v2397
      %2399 = vmatmul.bf16.gmra.mxu0 %v2334
      %v2400 = vpop.f32.mrf.mxu0
      %v2401 = vadd.f32 0.0, %v2400
      %v2402 = vpop.f32.mrf.mxu0
      %2403 = vdwg.mxu0
      %v2404 = vadd.f32 %v2052, %v2346
      %v2405 = vadd.f32 %v2053, %v2348
      %v2406 = vadd.f32 %v2054, %v2351
      %v2407 = vadd.f32 %v2055, %v2353
      %v2408 = vadd.f32 %v2056, %v2356
      %v2409 = vadd.f32 %v2057, %v2358
      %v2410 = vadd.f32 %v2058, %v2361
      %v2411 = vadd.f32 %v2059, %v2363
      %v2412 = vadd.f32 %v2060, %v2366
      %v2413 = vadd.f32 %v2061, %v2368
      %v2414 = vadd.f32 %v2062, %v2371
      %v2415 = vadd.f32 %v2063, %v2373
      %v2416 = vadd.f32 %v2064, %v2376
      %v2417 = vadd.f32 %v2065, %v2378
      %v2418 = vadd.f32 %v2066, %v2381
      %v2419 = vadd.f32 %v2067, %v2383
      %v2420 = vadd.f32 %v2068, %v2386
      %v2421 = vadd.f32 %v2069, %v2388
      %v2422 = vadd.f32 %v2070, %v2391
      %v2423 = vadd.f32 %v2071, %v2393
      %v2424 = vadd.f32 %v2072, %v2396
      %v2425 = vadd.f32 %v2073, %v2398
      %v2426 = vadd.f32 %v2074, %v2401
      %v2427 = vld [vmem:[#allocation2 + $0x10] sm:$0x8]
      %s2428 = scalar_lea.vmem %s2, 256
      %v2429 = vld [vmem:[%s2428] sm:$0xf]
      %v2430 = vld [vmem:[%s2428 + $0x4] sm:$0xf]
      %v2431 = vld [vmem:[%s2428 + $0x8] sm:$0xf]
      %v2432 = vld [vmem:[%s2428 + $0xc] sm:$0xf]
      %v2433 = vld [vmem:[%s2428 + $0x10] sm:$0xf]
      %v2434 = vld [vmem:[%s2428 + $0x14] sm:$0xf]
      %v2435 = vld [vmem:[%s2428 + $0x18] sm:$0xf]
      %v2436 = vld [vmem:[%s2428 + $0x1c] sm:$0xf]
      %v2438 = vunpack.c.l.b16 %v2427
      %v2439 = vpack.c.b16 %v2133, %v2438
      %vm2440 = vcmask 1044480
      %v2441 = vrot.slane %v2439, 3
      %v2442 = vrot.slane %v2157, 3
      %v2443 = vsel %vm2440, %v2441, %v2442
      %v2444 = vrot.slane %v2158, 3
      %v2445 = vsel %vm2440, %v2442, %v2444
      %v2446 = vrot.slane %v2159, 3
      %v2447 = vsel %vm2440, %v2444, %v2446
      %v2448 = vrot.slane %v2160, 3
      %v2449 = vsel %vm2440, %v2446, %v2448
      %v2450 = vrot.slane %v2161, 3
      %v2451 = vsel %vm2440, %v2448, %v2450
      %v2452 = vrot.slane %v2162, 3
      %v2453 = vsel %vm2440, %v2450, %v2452
      %v2454 = vrot.slane %v2163, 3
      %v2455 = vsel %vm2440, %v2452, %v2454
      %v2456 = vrot.slane %v2164, 3
      %v2457 = vsel %vm2440, %v2454, %v2456
      %v2458 = vrot.slane %v2165, 3
      %v2459 = vsel %vm2440, %v2456, %v2458
      %v2460 = vrot.slane %v2166, 3
      %v2461 = vsel %vm2440, %v2458, %v2460
      %v2462 = vrot.slane %v2167, 3
      %v2463 = vsel %vm2440, %v2460, %v2462
      %v2472 = vunpack.c.l.b16 %v2429
      %v2473 = vunpack.c.l.b16 %v2430
      %v2474 = vunpack.c.l.b16 %v2431
      %v2475 = vunpack.c.l.b16 %v2432
      %v2476 = vunpack.c.l.b16 %v2433
      %v2477 = vunpack.c.l.b16 %v2434
      %v2478 = vunpack.c.l.b16 %v2435
      %v2479 = vunpack.c.l.b16 %v2436
      %v2480 = vpack.c.b16 %v2473, %v2472
      %v2481 = vpack.c.b16 %v2475, %v2474
      %v2482 = vpack.c.b16 %v2477, %v2476
      %v2483 = vpack.c.b16 %v2479, %v2478
      %v2489 = vsel %vm674, %v2443, 0
      %v2492 = vsel %vm674, %v2445, 0
      %v2495 = vsel %vm674, %v2447, 0
      %v2498 = vsel %vm674, %v2449, 0
      %v2501 = vsel %vm674, %v2451, 0
      %v2504 = vsel %vm674, %v2453, 0
      %v2507 = vsel %vm674, %v2455, 0
      %v2510 = vsel %vm674, %v2457, 0
      %v2513 = vsel %vm674, %v2459, 0
      %v2516 = vsel %vm674, %v2461, 0
      %v2519 = vsel %vm674, %v2463, 0
      %v2522 = vsel %vm674, %v2462, 0
      %2524 = vmatpush.bf16.msra.mxu0 0
      %2525 = vmatpush.bf16.msra.mxu0 0
      %2526 = vmatpush.bf16.msra.mxu0 0
      %2527 = vmatpush.bf16.msra.mxu0 0
      %2528 = vmatpush.bf16.msra.mxu0 %v2483
      %2529 = vmatpush.bf16.msra.mxu0 %v2482
      %2530 = vmatpush.bf16.msra.mxu0 %v2481
      %2531 = vmatpush.bf16.msra.mxu0 %v2480
      %2532 = vmatmul.bf16.gmra.mxu0 %v2489
      %v2533 = vpop.f32.mrf.mxu0
      %v2534 = vadd.f32 0.0, %v2533
      %v2535 = vpop.f32.mrf.mxu0
      %v2536 = vadd.f32 0.0, %v2535
      %2537 = vmatmul.bf16.gmra.mxu0 %v2492
      %v2538 = vpop.f32.mrf.mxu0
      %v2539 = vadd.f32 0.0, %v2538
      %v2540 = vpop.f32.mrf.mxu0
      %v2541 = vadd.f32 0.0, %v2540
      %2542 = vmatmul.bf16.gmra.mxu0 %v2495
      %v2543 = vpop.f32.mrf.mxu0
      %v2544 = vadd.f32 0.0, %v2543
      %v2545 = vpop.f32.mrf.mxu0
      %v2546 = vadd.f32 0.0, %v2545
      %2547 = vmatmul.bf16.gmra.mxu0 %v2498
      %v2548 = vpop.f32.mrf.mxu0
      %v2549 = vadd.f32 0.0, %v2548
      %v2550 = vpop.f32.mrf.mxu0
      %v2551 = vadd.f32 0.0, %v2550
      %2552 = vmatmul.bf16.gmra.mxu0 %v2501
      %v2553 = vpop.f32.mrf.mxu0
      %v2554 = vadd.f32 0.0, %v2553
      %v2555 = vpop.f32.mrf.mxu0
      %v2556 = vadd.f32 0.0, %v2555
      %2557 = vmatmul.bf16.gmra.mxu0 %v2504
      %v2558 = vpop.f32.mrf.mxu0
      %v2559 = vadd.f32 0.0, %v2558
      %v2560 = vpop.f32.mrf.mxu0
      %v2561 = vadd.f32 0.0, %v2560
      %2562 = vmatmul.bf16.gmra.mxu0 %v2507
      %v2563 = vpop.f32.mrf.mxu0
      %v2564 = vadd.f32 0.0, %v2563
      %v2565 = vpop.f32.mrf.mxu0
      %v2566 = vadd.f32 0.0, %v2565
      %2567 = vmatmul.bf16.gmra.mxu0 %v2510
      %v2568 = vpop.f32.mrf.mxu0
      %v2569 = vadd.f32 0.0, %v2568
      %v2570 = vpop.f32.mrf.mxu0
      %v2571 = vadd.f32 0.0, %v2570
      %2572 = vmatmul.bf16.gmra.mxu0 %v2513
      %v2573 = vpop.f32.mrf.mxu0
      %v2574 = vadd.f32 0.0, %v2573
      %v2575 = vpop.f32.mrf.mxu0
      %v2576 = vadd.f32 0.0, %v2575
      %2577 = vmatmul.bf16.gmra.mxu0 %v2516
      %v2578 = vpop.f32.mrf.mxu0
      %v2579 = vadd.f32 0.0, %v2578
      %v2580 = vpop.f32.mrf.mxu0
      %v2581 = vadd.f32 0.0, %v2580
      %2582 = vmatmul.bf16.gmra.mxu0 %v2519
      %v2583 = vpop.f32.mrf.mxu0
      %v2584 = vadd.f32 0.0, %v2583
      %v2585 = vpop.f32.mrf.mxu0
      %v2586 = vadd.f32 0.0, %v2585
      %2587 = vmatmul.bf16.gmra.mxu0 %v2522
      %v2588 = vpop.f32.mrf.mxu0
      %v2589 = vadd.f32 0.0, %v2588
      %v2590 = vpop.f32.mrf.mxu0
      %2591 = vdwg.mxu0
      %v2592 = vadd.f32 %v2404, %v2534
      %v2593 = vadd.f32 %v2405, %v2536
      %v2594 = vadd.f32 %v2406, %v2539
      %v2595 = vadd.f32 %v2407, %v2541
      %v2596 = vadd.f32 %v2408, %v2544
      %v2597 = vadd.f32 %v2409, %v2546
      %v2598 = vadd.f32 %v2410, %v2549
      %v2599 = vadd.f32 %v2411, %v2551
      %v2600 = vadd.f32 %v2412, %v2554
      %v2601 = vadd.f32 %v2413, %v2556
      %v2602 = vadd.f32 %v2414, %v2559
      %v2603 = vadd.f32 %v2415, %v2561
      %v2604 = vadd.f32 %v2416, %v2564
      %v2605 = vadd.f32 %v2417, %v2566
      %v2606 = vadd.f32 %v2418, %v2569
      %v2607 = vadd.f32 %v2419, %v2571
      %v2608 = vadd.f32 %v2420, %v2574
      %v2609 = vadd.f32 %v2421, %v2576
      %v2610 = vadd.f32 %v2422, %v2579
      %v2611 = vadd.f32 %v2423, %v2581
      %v2612 = vadd.f32 %v2424, %v2584
      %v2613 = vadd.f32 %v2425, %v2586
      %v2614 = vadd.f32 %v2426, %v2589
      %v2615 = vld [vmem:[%s3] sm:$0x1]
      %v2617 = vperm.slane %v2615, 0
      %v2619 = vadd.f32 %v2592, %v2617
      %v2620 = vadd.f32 %v2593, %v2617
      %v2621 = vadd.f32 %v2594, %v2617
      %v2622 = vadd.f32 %v2595, %v2617
      %v2623 = vadd.f32 %v2596, %v2617
      %v2624 = vadd.f32 %v2597, %v2617
      %v2625 = vadd.f32 %v2598, %v2617
      %v2626 = vadd.f32 %v2599, %v2617
      %v2627 = vadd.f32 %v2600, %v2617
      %v2628 = vadd.f32 %v2601, %v2617
      %v2629 = vadd.f32 %v2602, %v2617
      %v2630 = vadd.f32 %v2603, %v2617
      %v2631 = vadd.f32 %v2604, %v2617
      %v2632 = vadd.f32 %v2605, %v2617
      %v2633 = vadd.f32 %v2606, %v2617
      %v2634 = vadd.f32 %v2607, %v2617
      %v2635 = vadd.f32 %v2608, %v2617
      %v2636 = vadd.f32 %v2609, %v2617
      %v2637 = vadd.f32 %v2610, %v2617
      %v2638 = vadd.f32 %v2611, %v2617
      %v2639 = vadd.f32 %v2612, %v2617
      %v2640 = vadd.f32 %v2613, %v2617
      %v2641 = vadd.f32 %v2614, %v2617
      %v2642 = vmax.f32 %v2619, 0.0
      %v2643 = vmax.f32 %v2620, 0.0
      %v2644 = vmax.f32 %v2621, 0.0
      %v2645 = vmax.f32 %v2622, 0.0
      %v2646 = vmax.f32 %v2623, 0.0
      %v2647 = vmax.f32 %v2624, 0.0
      %v2648 = vmax.f32 %v2625, 0.0
      %v2649 = vmax.f32 %v2626, 0.0
      %v2650 = vmax.f32 %v2627, 0.0
      %v2651 = vmax.f32 %v2628, 0.0
      %v2652 = vmax.f32 %v2629, 0.0
      %v2653 = vmax.f32 %v2630, 0.0
      %v2654 = vmax.f32 %v2631, 0.0
      %v2655 = vmax.f32 %v2632, 0.0
      %v2656 = vmax.f32 %v2633, 0.0
      %v2657 = vmax.f32 %v2634, 0.0
      %v2658 = vmax.f32 %v2635, 0.0
      %v2659 = vmax.f32 %v2636, 0.0
      %v2660 = vmax.f32 %v2637, 0.0
      %v2661 = vmax.f32 %v2638, 0.0
      %v2662 = vmax.f32 %v2639, 0.0
      %v2663 = vmax.f32 %v2640, 0.0
      %v2664 = vmax.f32 %v2641, 0.0
      %v2665 = vld [vmem:[%s370] sm:$0xff]
      %v2666 = vld [vmem:[%s370 + $0x8] sm:$0xff]
      %v2667 = vld [vmem:[%s370 + $0x10] sm:$0xff]
      %v2668 = vld [vmem:[%s370 + $0x18] sm:$0xff]
      %v2669 = vld [vmem:[%s370 + $0x20] sm:$0xff]
      %v2670 = vld [vmem:[%s370 + $0x28] sm:$0xff]
      %v2671 = vld [vmem:[%s370 + $0x30] sm:$0xff]
      %v2672 = vld [vmem:[%s370 + $0x38] sm:$0xff]
      %v2673 = vld [vmem:[%s370 + $0x40] sm:$0xff]
      %v2674 = vld [vmem:[%s370 + $0x48] sm:$0xff]
      %v2675 = vld [vmem:[%s370 + $0x50] sm:$0xff]
      %v2676 = vld [vmem:[%s370 + $0x58] sm:$0xff]
      %v2677 = vld [vmem:[%s370 + $0x60] sm:$0xff]
      %v2678 = vld [vmem:[%s370 + $0x68] sm:$0xff]
      %v2679 = vld [vmem:[%s370 + $0x70] sm:$0xff]
      %v2680 = vld [vmem:[%s370 + $0x78] sm:$0xff]
      %v2681 = vld [vmem:[%s370 + $0x80] sm:$0xff]
      %v2682 = vld [vmem:[%s370 + $0x88] sm:$0xff]
      %v2683 = vld [vmem:[%s370 + $0x90] sm:$0xff]
      %v2684 = vld [vmem:[%s370 + $0x98] sm:$0xff]
      %v2685 = vld [vmem:[%s370 + $0xa0] sm:$0xff]
      %v2686 = vld [vmem:[%s370 + $0xa8] sm:$0xff]
      %v2687 = vld [vmem:[%s370 + $0xb0] sm:$0xf]
      %2689 = vset.pattern.permute.xlu0 0
      %2690 = vperm.xlu0 %2689, %v2665
      %v2691 = vpop.permute.xlu0 %2690
      %2694 = vset.pattern.permute.xlu0 0
      %2695 = vperm.xlu0 %2694, %v2666
      %v2696 = vpop.permute.xlu0 %2695
      %2699 = vset.pattern.permute.xlu0 0
      %2700 = vperm.xlu0 %2699, %v2667
      %v2701 = vpop.permute.xlu0 %2700
      %2704 = vset.pattern.permute.xlu0 0
      %2705 = vperm.xlu0 %2704, %v2668
      %v2706 = vpop.permute.xlu0 %2705
      %2709 = vset.pattern.permute.xlu0 0
      %2710 = vperm.xlu0 %2709, %v2669
      %v2711 = vpop.permute.xlu0 %2710
      %2714 = vset.pattern.permute.xlu0 0
      %2715 = vperm.xlu0 %2714, %v2670
      %v2716 = vpop.permute.xlu0 %2715
      %2719 = vset.pattern.permute.xlu0 0
      %2720 = vperm.xlu0 %2719, %v2671
      %v2721 = vpop.permute.xlu0 %2720
      %2724 = vset.pattern.permute.xlu0 0
      %2725 = vperm.xlu0 %2724, %v2672
      %v2726 = vpop.permute.xlu0 %2725
      %2729 = vset.pattern.permute.xlu0 0
      %2730 = vperm.xlu0 %2729, %v2673
      %v2731 = vpop.permute.xlu0 %2730
      %2734 = vset.pattern.permute.xlu0 0
      %2735 = vperm.xlu0 %2734, %v2674
      %v2736 = vpop.permute.xlu0 %2735
      %2739 = vset.pattern.permute.xlu0 0
      %2740 = vperm.xlu0 %2739, %v2675
      %v2741 = vpop.permute.xlu0 %2740
      %2744 = vset.pattern.permute.xlu0 0
      %2745 = vperm.xlu0 %2744, %v2676
      %v2746 = vpop.permute.xlu0 %2745
      %2749 = vset.pattern.permute.xlu0 0
      %2750 = vperm.xlu0 %2749, %v2677
      %v2751 = vpop.permute.xlu0 %2750
      %2754 = vset.pattern.permute.xlu0 0
      %2755 = vperm.xlu0 %2754, %v2678
      %v2756 = vpop.permute.xlu0 %2755
      %2759 = vset.pattern.permute.xlu0 0
      %2760 = vperm.xlu0 %2759, %v2679
      %v2761 = vpop.permute.xlu0 %2760
      %2764 = vset.pattern.permute.xlu0 0
      %2765 = vperm.xlu0 %2764, %v2680
      %v2766 = vpop.permute.xlu0 %2765
      %2769 = vset.pattern.permute.xlu0 0
      %2770 = vperm.xlu0 %2769, %v2681
      %v2771 = vpop.permute.xlu0 %2770
      %2774 = vset.pattern.permute.xlu0 0
      %2775 = vperm.xlu0 %2774, %v2682
      %v2776 = vpop.permute.xlu0 %2775
      %2779 = vset.pattern.permute.xlu0 0
      %2780 = vperm.xlu0 %2779, %v2683
      %v2781 = vpop.permute.xlu0 %2780
      %2784 = vset.pattern.permute.xlu0 0
      %2785 = vperm.xlu0 %2784, %v2684
      %v2786 = vpop.permute.xlu0 %2785
      %2789 = vset.pattern.permute.xlu0 0
      %2790 = vperm.xlu0 %2789, %v2685
      %v2791 = vpop.permute.xlu0 %2790
      %2794 = vset.pattern.permute.xlu0 0
      %2795 = vperm.xlu0 %2794, %v2686
      %v2796 = vpop.permute.xlu0 %2795
      %2799 = vset.pattern.permute.xlu0 0
      %2800 = vperm.xlu0 %2799, %v2687
      %v2801 = vpop.permute.xlu0 %2800
      %v2803 = vmul.f32 %v2642, %v2691
      %v2804 = vmul.f32 %v2643, %v2696
      %v2805 = vmul.f32 %v2644, %v2701
      %v2806 = vmul.f32 %v2645, %v2706
      %v2807 = vmul.f32 %v2646, %v2711
      %v2808 = vmul.f32 %v2647, %v2716
      %v2809 = vmul.f32 %v2648, %v2721
      %v2810 = vmul.f32 %v2649, %v2726
      %v2811 = vmul.f32 %v2650, %v2731
      %v2812 = vmul.f32 %v2651, %v2736
      %v2813 = vmul.f32 %v2652, %v2741
      %v2814 = vmul.f32 %v2653, %v2746
      %v2815 = vmul.f32 %v2654, %v2751
      %v2816 = vmul.f32 %v2655, %v2756
      %v2817 = vmul.f32 %v2656, %v2761
      %v2818 = vmul.f32 %v2657, %v2766
      %v2819 = vmul.f32 %v2658, %v2771
      %v2820 = vmul.f32 %v2659, %v2776
      %v2821 = vmul.f32 %v2660, %v2781
      %v2822 = vmul.f32 %v2661, %v2786
      %v2823 = vmul.f32 %v2662, %v2791
      %v2824 = vmul.f32 %v2663, %v2796
      %v2825 = vmul.f32 %v2664, %v2801
      %v2826 = vpack.c.bf16 %v2803, %v2803
      %v2827 = vpack.c.bf16 %v2804, %v2804
      %v2828 = vpack.c.bf16 %v2805, %v2805
      %v2829 = vpack.c.bf16 %v2806, %v2806
      %v2830 = vpack.c.bf16 %v2807, %v2807
      %v2831 = vpack.c.bf16 %v2808, %v2808
      %v2832 = vpack.c.bf16 %v2809, %v2809
      %v2833 = vpack.c.bf16 %v2810, %v2810
      %v2834 = vpack.c.bf16 %v2811, %v2811
      %v2835 = vpack.c.bf16 %v2812, %v2812
      %v2836 = vpack.c.bf16 %v2813, %v2813
      %v2837 = vpack.c.bf16 %v2814, %v2814
      %v2838 = vpack.c.bf16 %v2815, %v2815
      %v2839 = vpack.c.bf16 %v2816, %v2816
      %v2840 = vpack.c.bf16 %v2817, %v2817
      %v2841 = vpack.c.bf16 %v2818, %v2818
      %v2842 = vpack.c.bf16 %v2819, %v2819
      %v2843 = vpack.c.bf16 %v2820, %v2820
      %v2844 = vpack.c.bf16 %v2821, %v2821
      %v2845 = vpack.c.bf16 %v2822, %v2822
      %v2846 = vpack.c.bf16 %v2823, %v2823
      %v2847 = vpack.c.bf16 %v2824, %v2824
      %v2848 = vpack.c.bf16 %v2825, %v2825
      %2849 = vst.msk [vmem:[#allocation3] sm:$0xf] %vm400, 0
      %2850 = vst.msk [vmem:[#allocation3 + $0x4] sm:$0xf] %vm400, 0
      %vm2851 = vcmask 519170
      %2852 = vst.msk [vmem:[#allocation3 + $0x60] sm:$0xc] %vm2851, 0
      %2853 = vst.msk [vmem:[#allocation3 + $0x64] sm:$0xf] %vm400, 0
      %vm2854 = vcmask 517120
      %2855 = vst.msk [vmem:[#allocation3 + $0x68] sm:$0x3] %vm2854, 0
      %2856 = vst.msk [vmem:[#allocation3 + $0x8] sm:$0xf] %vm400, %v2826
      %2857 = vst.msk [vmem:[#allocation3 + $0xc] sm:$0xf] %vm400, %v2827
      %2858 = vst.msk [vmem:[#allocation3 + $0x10] sm:$0xf] %vm400, %v2828
      %2859 = vst.msk [vmem:[#allocation3 + $0x14] sm:$0xf] %vm400, %v2829
      %2860 = vst.msk [vmem:[#allocation3 + $0x18] sm:$0xf] %vm400, %v2830
      %2861 = vst.msk [vmem:[#allocation3 + $0x1c] sm:$0xf] %vm400, %v2831
      %2862 = vst.msk [vmem:[#allocation3 + $0x20] sm:$0xf] %vm400, %v2832
      %2863 = vst.msk [vmem:[#allocation3 + $0x24] sm:$0xf] %vm400, %v2833
      %2864 = vst.msk [vmem:[#allocation3 + $0x28] sm:$0xf] %vm400, %v2834
      %2865 = vst.msk [vmem:[#allocation3 + $0x2c] sm:$0xf] %vm400, %v2835
      %2866 = vst.msk [vmem:[#allocation3 + $0x30] sm:$0xf] %vm400, %v2836
      %2867 = vst.msk [vmem:[#allocation3 + $0x34] sm:$0xf] %vm400, %v2837
      %2868 = vst.msk [vmem:[#allocation3 + $0x38] sm:$0xf] %vm400, %v2838
      %2869 = vst.msk [vmem:[#allocation3 + $0x3c] sm:$0xf] %vm400, %v2839
      %2870 = vst.msk [vmem:[#allocation3 + $0x40] sm:$0xf] %vm400, %v2840
      %2871 = vst.msk [vmem:[#allocation3 + $0x44] sm:$0xf] %vm400, %v2841
      %2872 = vst.msk [vmem:[#allocation3 + $0x48] sm:$0xf] %vm400, %v2842
      %2873 = vst.msk [vmem:[#allocation3 + $0x4c] sm:$0xf] %vm400, %v2843
      %2874 = vst.msk [vmem:[#allocation3 + $0x50] sm:$0xf] %vm400, %v2844
      %2875 = vst.msk [vmem:[#allocation3 + $0x54] sm:$0xf] %vm400, %v2845
      %2876 = vst.msk [vmem:[#allocation3 + $0x58] sm:$0xf] %vm400, %v2846
      %2877 = vst.msk [vmem:[#allocation3 + $0x5c] sm:$0xf] %vm400, %v2847
      %2878 = vst.msk [vmem:[#allocation3 + $0x60] sm:$0x3] %vm2854, %v2848
      %v2879 = vld [vmem:[#allocation3 + $0x4] sm:$0x8]
      %v2880 = vld [vmem:[#allocation3 + $0x8] sm:$0xf]
      %v2881 = vld [vmem:[#allocation3 + $0xc] sm:$0xf]
      %v2882 = vld [vmem:[#allocation3 + $0x10] sm:$0xf]
      %v2883 = vld [vmem:[#allocation3 + $0x14] sm:$0xf]
      %v2884 = vld [vmem:[#allocation3 + $0x18] sm:$0xf]
      %v2885 = vld [vmem:[#allocation3 + $0x1c] sm:$0xf]
      %v2886 = vld [vmem:[#allocation3 + $0x20] sm:$0xf]
      %v2887 = vld [vmem:[#allocation3 + $0x24] sm:$0xf]
      %v2888 = vld [vmem:[#allocation3 + $0x28] sm:$0xf]
      %v2889 = vld [vmem:[#allocation3 + $0x2c] sm:$0xf]
      %v2890 = vld [vmem:[#allocation3 + $0x30] sm:$0xf]
      %v2891 = vld [vmem:[#allocation3 + $0x34] sm:$0xf]
      %v2892 = vld [vmem:[#allocation3 + $0x38] sm:$0xf]
      %v2893 = vld [vmem:[#allocation3 + $0x3c] sm:$0xf]
      %v2894 = vld [vmem:[#allocation3 + $0x40] sm:$0xf]
      %v2895 = vld [vmem:[#allocation3 + $0x44] sm:$0xf]
      %v2896 = vld [vmem:[#allocation3 + $0x48] sm:$0xf]
      %v2897 = vld [vmem:[#allocation3 + $0x4c] sm:$0xf]
      %v2898 = vld [vmem:[%s4] sm:$0xf]
      %v2899 = vld [vmem:[%s4 + $0x4] sm:$0xf]
      %v2900 = vld [vmem:[%s4 + $0x8] sm:$0xf]
      %v2901 = vld [vmem:[%s4 + $0xc] sm:$0xf]
      %v2902 = vld [vmem:[%s4 + $0x10] sm:$0xf]
      %v2903 = vld [vmem:[%s4 + $0x14] sm:$0xf]
      %v2904 = vld [vmem:[%s4 + $0x18] sm:$0xf]
      %v2905 = vld [vmem:[%s4 + $0x1c] sm:$0xf]
      %s2906 = scalar_lea.vmem %s4, 32
      %v2907 = vld [vmem:[%s2906] sm:$0xf]
      %v2908 = vld [vmem:[%s2906 + $0x4] sm:$0xf]
      %v2909 = vld [vmem:[%s2906 + $0x8] sm:$0xf]
      %v2910 = vld [vmem:[%s2906 + $0xc] sm:$0xf]
      %v2911 = vld [vmem:[%s2906 + $0x10] sm:$0xf]
      %v2912 = vld [vmem:[%s2906 + $0x14] sm:$0xf]
      %v2913 = vld [vmem:[%s2906 + $0x18] sm:$0xf]
      %v2914 = vld [vmem:[%s2906 + $0x1c] sm:$0xf]
      %v2933 = vunpack.c.l.b16 %v2880
      %v2934 = vunpack.c.l.b16 %v2881
      %v2935 = vunpack.c.l.b16 %v2882
      %v2936 = vunpack.c.l.b16 %v2883
      %v2937 = vunpack.c.l.b16 %v2884
      %v2938 = vunpack.c.l.b16 %v2885
      %v2939 = vunpack.c.l.b16 %v2886
      %v2940 = vunpack.c.l.b16 %v2887
      %v2941 = vunpack.c.l.b16 %v2888
      %v2942 = vunpack.c.l.b16 %v2889
      %v2943 = vunpack.c.l.b16 %v2890
      %v2944 = vunpack.c.l.b16 %v2891
      %v2945 = vunpack.c.l.b16 %v2892
      %v2946 = vunpack.c.l.b16 %v2893
      %v2947 = vunpack.c.l.b16 %v2894
      %v2948 = vunpack.c.l.b16 %v2895
      %v2949 = vunpack.c.l.b16 %v2896
      %v2950 = vunpack.c.l.b16 %v2897
      %v2951 = vpack.c.b16 %v2934, %v2933
      %v2952 = vpack.c.b16 %v2936, %v2935
      %v2953 = vpack.c.b16 %v2938, %v2937
      %v2954 = vpack.c.b16 %v2940, %v2939
      %v2955 = vpack.c.b16 %v2942, %v2941
      %v2956 = vpack.c.b16 %v2944, %v2943
      %v2957 = vpack.c.b16 %v2946, %v2945
      %v2958 = vpack.c.b16 %v2948, %v2947
      %v2959 = vpack.c.b16 %v2950, %v2949
      %v2968 = vunpack.c.l.b16 %v2907
      %v2969 = vunpack.c.l.b16 %v2908
      %v2970 = vunpack.c.l.b16 %v2909
      %v2971 = vunpack.c.l.b16 %v2910
      %v2972 = vunpack.c.l.b16 %v2911
      %v2973 = vunpack.c.l.b16 %v2912
      %v2974 = vunpack.c.l.b16 %v2913
      %v2975 = vunpack.c.l.b16 %v2914
      %v2976 = vpack.c.b16 %v2969, %v2968
      %v2977 = vpack.c.b16 %v2971, %v2970
      %v2978 = vpack.c.b16 %v2973, %v2972
      %v2979 = vpack.c.b16 %v2975, %v2974
      %v2985 = vsel %vm674, %v2951, 0
      %v2988 = vsel %vm674, %v2952, 0
      %v2991 = vsel %vm674, %v2953, 0
      %v2994 = vsel %vm674, %v2954, 0
      %v2997 = vsel %vm674, %v2955, 0
      %v3000 = vsel %vm674, %v2956, 0
      %v3003 = vsel %vm674, %v2957, 0
      %v3006 = vsel %vm674, %v2958, 0
      %v3009 = vsel %vm674, %v2959, 0
      %3011 = vmatpush.bf16.msra.mxu0 0
      %3012 = vmatpush.bf16.msra.mxu0 0
      %3013 = vmatpush.bf16.msra.mxu0 0
      %3014 = vmatpush.bf16.msra.mxu0 0
      %3015 = vmatpush.bf16.msra.mxu0 %v2979
      %3016 = vmatpush.bf16.msra.mxu0 %v2978
      %3017 = vmatpush.bf16.msra.mxu0 %v2977
      %3018 = vmatpush.bf16.msra.mxu0 %v2976
      %3019 = vmatmul.bf16.gmra.mxu0 %v2985
      %v3020 = vpop.f32.mrf.mxu0
      %v3021 = vadd.f32 0.0, %v3020
      %v3022 = vpop.f32.mrf.mxu0
      %v3023 = vadd.f32 0.0, %v3022
      %3024 = vmatmul.bf16.gmra.mxu0 %v2988
      %v3025 = vpop.f32.mrf.mxu0
      %v3026 = vadd.f32 0.0, %v3025
      %v3027 = vpop.f32.mrf.mxu0
      %v3028 = vadd.f32 0.0, %v3027
      %3029 = vmatmul.bf16.gmra.mxu0 %v2991
      %v3030 = vpop.f32.mrf.mxu0
      %v3031 = vadd.f32 0.0, %v3030
      %v3032 = vpop.f32.mrf.mxu0
      %v3033 = vadd.f32 0.0, %v3032
      %3034 = vmatmul.bf16.gmra.mxu0 %v2994
      %v3035 = vpop.f32.mrf.mxu0
      %v3036 = vadd.f32 0.0, %v3035
      %v3037 = vpop.f32.mrf.mxu0
      %v3038 = vadd.f32 0.0, %v3037
      %3039 = vmatmul.bf16.gmra.mxu0 %v2997
      %v3040 = vpop.f32.mrf.mxu0
      %v3041 = vadd.f32 0.0, %v3040
      %v3042 = vpop.f32.mrf.mxu0
      %v3043 = vadd.f32 0.0, %v3042
      %3044 = vmatmul.bf16.gmra.mxu0 %v3000
      %v3045 = vpop.f32.mrf.mxu0
      %v3046 = vadd.f32 0.0, %v3045
      %v3047 = vpop.f32.mrf.mxu0
      %v3048 = vadd.f32 0.0, %v3047
      %3049 = vmatmul.bf16.gmra.mxu0 %v3003
      %v3050 = vpop.f32.mrf.mxu0
      %v3051 = vadd.f32 0.0, %v3050
      %v3052 = vpop.f32.mrf.mxu0
      %v3053 = vadd.f32 0.0, %v3052
      %3054 = vmatmul.bf16.gmra.mxu0 %v3006
      %v3055 = vpop.f32.mrf.mxu0
      %v3056 = vadd.f32 0.0, %v3055
      %v3057 = vpop.f32.mrf.mxu0
      %v3058 = vadd.f32 0.0, %v3057
      %3059 = vmatmul.bf16.gmra.mxu0 %v3009
      %v3060 = vpop.f32.mrf.mxu0
      %v3061 = vadd.f32 0.0, %v3060
      %v3062 = vpop.f32.mrf.mxu0
      %v3063 = vadd.f32 0.0, %v3062
      %3064 = vdwg.mxu0
      %v3066 = vunpack.c.l.b16 %v2879
      %v3067 = vpack.c.b16 %v2933, %v3066
      %v3068 = vpack.c.b16 %v2935, %v2934
      %v3069 = vpack.c.b16 %v2937, %v2936
      %v3070 = vpack.c.b16 %v2939, %v2938
      %v3071 = vpack.c.b16 %v2941, %v2940
      %v3072 = vpack.c.b16 %v2943, %v2942
      %v3073 = vpack.c.b16 %v2945, %v2944
      %v3074 = vpack.c.b16 %v2947, %v2946
      %v3075 = vpack.c.b16 %v2949, %v2948
      %v3076 = vpack.c.b16 %v2950, %v2950
      %vm3077 = vsmask.f32 4352
      %v3079 = vshrl.u32 %v3067, 16
      %v3081 = vrot.slane %v3079, 3
      %v3082 = vshll.u32 %v3067, 16
      %v3084 = vrot.slane %v3082, 4
      %v3085 = vor.u32 %v3081, %v3084
      %v3087 = vshrl.u32 %v3068, 16
      %v3089 = vrot.slane %v3087, 3
      %v3090 = vshll.u32 %v3068, 16
      %v3092 = vrot.slane %v3090, 4
      %v3093 = vor.u32 %v3089, %v3092
      %v3094 = vsel %vm3077, %v3085, %v3093
      %v3096 = vshrl.u32 %v3069, 16
      %v3098 = vrot.slane %v3096, 3
      %v3099 = vshll.u32 %v3069, 16
      %v3101 = vrot.slane %v3099, 4
      %v3102 = vor.u32 %v3098, %v3101
      %v3103 = vsel %vm3077, %v3093, %v3102
      %v3105 = vshrl.u32 %v3070, 16
      %v3107 = vrot.slane %v3105, 3
      %v3108 = vshll.u32 %v3070, 16
      %v3110 = vrot.slane %v3108, 4
      %v3111 = vor.u32 %v3107, %v3110
      %v3112 = vsel %vm3077, %v3102, %v3111
      %v3114 = vshrl.u32 %v3071, 16
      %v3116 = vrot.slane %v3114, 3
      %v3117 = vshll.u32 %v3071, 16
      %v3119 = vrot.slane %v3117, 4
      %v3120 = vor.u32 %v3116, %v3119
      %v3121 = vsel %vm3077, %v3111, %v3120
      %v3123 = vshrl.u32 %v3072, 16
      %v3125 = vrot.slane %v3123, 3
      %v3126 = vshll.u32 %v3072, 16
      %v3128 = vrot.slane %v3126, 4
      %v3129 = vor.u32 %v3125, %v3128
      %v3130 = vsel %vm3077, %v3120, %v3129
      %v3132 = vshrl.u32 %v3073, 16
      %v3134 = vrot.slane %v3132, 3
      %v3135 = vshll.u32 %v3073, 16
      %v3137 = vrot.slane %v3135, 4
      %v3138 = vor.u32 %v3134, %v3137
      %v3139 = vsel %vm3077, %v3129, %v3138
      %v3141 = vshrl.u32 %v3074, 16
      %v3143 = vrot.slane %v3141, 3
      %v3144 = vshll.u32 %v3074, 16
      %v3146 = vrot.slane %v3144, 4
      %v3147 = vor.u32 %v3143, %v3146
      %v3148 = vsel %vm3077, %v3138, %v3147
      %v3150 = vshrl.u32 %v3075, 16
      %v3152 = vrot.slane %v3150, 3
      %v3153 = vshll.u32 %v3075, 16
      %v3155 = vrot.slane %v3153, 4
      %v3156 = vor.u32 %v3152, %v3155
      %v3157 = vsel %vm3077, %v3147, %v3156
      %v3159 = vshrl.u32 %v3076, 16
      %v3161 = vrot.slane %v3159, 3
      %v3162 = vshll.u32 %v3076, 16
      %v3164 = vrot.slane %v3162, 4
      %v3165 = vor.u32 %v3161, %v3164
      %v3166 = vsel %vm3077, %v3156, %v3165
      %v3175 = vunpack.c.l.b16 %v2898
      %v3176 = vunpack.c.l.b16 %v2899
      %v3177 = vunpack.c.l.b16 %v2900
      %v3178 = vunpack.c.l.b16 %v2901
      %v3179 = vunpack.c.l.b16 %v2902
      %v3180 = vunpack.c.l.b16 %v2903
      %v3181 = vunpack.c.l.b16 %v2904
      %v3182 = vunpack.c.l.b16 %v2905
      %v3183 = vpack.c.b16 %v3176, %v3175
      %v3184 = vpack.c.b16 %v3178, %v3177
      %v3185 = vpack.c.b16 %v3180, %v3179
      %v3186 = vpack.c.b16 %v3182, %v3181
      %v3192 = vsel %vm674, %v3094, 0
      %v3195 = vsel %vm674, %v3103, 0
      %v3198 = vsel %vm674, %v3112, 0
      %v3201 = vsel %vm674, %v3121, 0
      %v3204 = vsel %vm674, %v3130, 0
      %v3207 = vsel %vm674, %v3139, 0
      %v3210 = vsel %vm674, %v3148, 0
      %v3213 = vsel %vm674, %v3157, 0
      %v3216 = vsel %vm674, %v3166, 0
      %3218 = vmatpush.bf16.msra.mxu0 0
      %3219 = vmatpush.bf16.msra.mxu0 0
      %3220 = vmatpush.bf16.msra.mxu0 0
      %3221 = vmatpush.bf16.msra.mxu0 0
      %3222 = vmatpush.bf16.msra.mxu0 %v3186
      %3223 = vmatpush.bf16.msra.mxu0 %v3185
      %3224 = vmatpush.bf16.msra.mxu0 %v3184
      %3225 = vmatpush.bf16.msra.mxu0 %v3183
      %3226 = vmatmul.bf16.gmra.mxu0 %v3192
      %v3227 = vpop.f32.mrf.mxu0
      %v3228 = vadd.f32 %v3021, %v3227
      %v3229 = vpop.f32.mrf.mxu0
      %v3230 = vadd.f32 %v3023, %v3229
      %3231 = vmatmul.bf16.gmra.mxu0 %v3195
      %v3232 = vpop.f32.mrf.mxu0
      %v3233 = vadd.f32 %v3026, %v3232
      %v3234 = vpop.f32.mrf.mxu0
      %v3235 = vadd.f32 %v3028, %v3234
      %3236 = vmatmul.bf16.gmra.mxu0 %v3198
      %v3237 = vpop.f32.mrf.mxu0
      %v3238 = vadd.f32 %v3031, %v3237
      %v3239 = vpop.f32.mrf.mxu0
      %v3240 = vadd.f32 %v3033, %v3239
      %3241 = vmatmul.bf16.gmra.mxu0 %v3201
      %v3242 = vpop.f32.mrf.mxu0
      %v3243 = vadd.f32 %v3036, %v3242
      %v3244 = vpop.f32.mrf.mxu0
      %v3245 = vadd.f32 %v3038, %v3244
      %3246 = vmatmul.bf16.gmra.mxu0 %v3204
      %v3247 = vpop.f32.mrf.mxu0
      %v3248 = vadd.f32 %v3041, %v3247
      %v3249 = vpop.f32.mrf.mxu0
      %v3250 = vadd.f32 %v3043, %v3249
      %3251 = vmatmul.bf16.gmra.mxu0 %v3207
      %v3252 = vpop.f32.mrf.mxu0
      %v3253 = vadd.f32 %v3046, %v3252
      %v3254 = vpop.f32.mrf.mxu0
      %v3255 = vadd.f32 %v3048, %v3254
      %3256 = vmatmul.bf16.gmra.mxu0 %v3210
      %v3257 = vpop.f32.mrf.mxu0
      %v3258 = vadd.f32 %v3051, %v3257
      %v3259 = vpop.f32.mrf.mxu0
      %v3260 = vadd.f32 %v3053, %v3259
      %3261 = vmatmul.bf16.gmra.mxu0 %v3213
      %v3262 = vpop.f32.mrf.mxu0
      %v3263 = vadd.f32 %v3056, %v3262
      %v3264 = vpop.f32.mrf.mxu0
      %v3265 = vadd.f32 %v3058, %v3264
      %3266 = vmatmul.bf16.gmra.mxu0 %v3216
      %v3267 = vpop.f32.mrf.mxu0
      %v3268 = vadd.f32 %v3061, %v3267
      %v3269 = vpop.f32.mrf.mxu0
      %v3270 = vadd.f32 %v3063, %v3269
      %3271 = vdwg.mxu0
      %v3272 = vld [vmem:[#allocation3 + $0x8] sm:$0xf]
      %v3273 = vld [vmem:[#allocation3 + $0xc] sm:$0xf]
      %v3274 = vld [vmem:[#allocation3 + $0x10] sm:$0xf]
      %v3275 = vld [vmem:[#allocation3 + $0x14] sm:$0xf]
      %v3276 = vld [vmem:[#allocation3 + $0x18] sm:$0xf]
      %v3277 = vld [vmem:[#allocation3 + $0x1c] sm:$0xf]
      %v3278 = vld [vmem:[#allocation3 + $0x20] sm:$0xf]
      %v3279 = vld [vmem:[#allocation3 + $0x24] sm:$0xf]
      %v3280 = vld [vmem:[#allocation3 + $0x28] sm:$0xf]
      %v3281 = vld [vmem:[#allocation3 + $0x2c] sm:$0xf]
      %v3282 = vld [vmem:[#allocation3 + $0x30] sm:$0xf]
      %v3283 = vld [vmem:[#allocation3 + $0x34] sm:$0xf]
      %v3284 = vld [vmem:[#allocation3 + $0x38] sm:$0xf]
      %v3285 = vld [vmem:[#allocation3 + $0x3c] sm:$0xf]
      %v3286 = vld [vmem:[#allocation3 + $0x40] sm:$0xf]
      %v3287 = vld [vmem:[#allocation3 + $0x44] sm:$0xf]
      %v3288 = vld [vmem:[#allocation3 + $0x48] sm:$0xf]
      %v3289 = vld [vmem:[#allocation3 + $0x4c] sm:$0xf]
      %v3290 = vld [vmem:[#allocation3 + $0x50] sm:$0x1]
      %s3291 = scalar_lea.vmem %s4, 64
      %v3292 = vld [vmem:[%s3291] sm:$0xf]
      %v3293 = vld [vmem:[%s3291 + $0x4] sm:$0xf]
      %v3294 = vld [vmem:[%s3291 + $0x8] sm:$0xf]
      %v3295 = vld [vmem:[%s3291 + $0xc] sm:$0xf]
      %v3296 = vld [vmem:[%s3291 + $0x10] sm:$0xf]
      %v3297 = vld [vmem:[%s3291 + $0x14] sm:$0xf]
      %v3298 = vld [vmem:[%s3291 + $0x18] sm:$0xf]
      %v3299 = vld [vmem:[%s3291 + $0x1c] sm:$0xf]
      %v3319 = vunpack.c.l.b16 %v3272
      %v3320 = vunpack.c.l.b16 %v3273
      %v3321 = vunpack.c.l.b16 %v3274
      %v3322 = vunpack.c.l.b16 %v3275
      %v3323 = vunpack.c.l.b16 %v3276
      %v3324 = vunpack.c.l.b16 %v3277
      %v3325 = vunpack.c.l.b16 %v3278
      %v3326 = vunpack.c.l.b16 %v3279
      %v3327 = vunpack.c.l.b16 %v3280
      %v3328 = vunpack.c.l.b16 %v3281
      %v3329 = vunpack.c.l.b16 %v3282
      %v3330 = vunpack.c.l.b16 %v3283
      %v3331 = vunpack.c.l.b16 %v3284
      %v3332 = vunpack.c.l.b16 %v3285
      %v3333 = vunpack.c.l.b16 %v3286
      %v3334 = vunpack.c.l.b16 %v3287
      %v3335 = vunpack.c.l.b16 %v3288
      %v3336 = vunpack.c.l.b16 %v3289
      %v3337 = vunpack.c.l.b16 %v3290
      %v3338 = vpack.c.b16 %v3320, %v3319
      %v3339 = vpack.c.b16 %v3322, %v3321
      %v3340 = vpack.c.b16 %v3324, %v3323
      %v3341 = vpack.c.b16 %v3326, %v3325
      %v3342 = vpack.c.b16 %v3328, %v3327
      %v3343 = vpack.c.b16 %v3330, %v3329
      %v3344 = vpack.c.b16 %v3332, %v3331
      %v3345 = vpack.c.b16 %v3334, %v3333
      %v3346 = vpack.c.b16 %v3336, %v3335
      %v3347 = vpack.c.b16 %v3337, %v3337
      %v3349 = vshrl.u32 %v3338, 16
      %v3351 = vshll.u32 %v3338, 16
      %v3353 = vrot.slane %v3351, 1
      %v3354 = vor.u32 %v3349, %v3353
      %v3356 = vshll.u32 %v3339, 16
      %v3358 = vrot.slane %v3356, 1
      %v3359 = vsel %vm554, %v3354, %v3358
      %v3360 = vshrl.u32 %v3339, 16
      %v3362 = vor.u32 %v3360, %v3358
      %v3364 = vshll.u32 %v3340, 16
      %v3366 = vrot.slane %v3364, 1
      %v3367 = vsel %vm554, %v3362, %v3366
      %v3368 = vshrl.u32 %v3340, 16
      %v3370 = vor.u32 %v3368, %v3366
      %v3372 = vshll.u32 %v3341, 16
      %v3374 = vrot.slane %v3372, 1
      %v3375 = vsel %vm554, %v3370, %v3374
      %v3376 = vshrl.u32 %v3341, 16
      %v3378 = vor.u32 %v3376, %v3374
      %v3380 = vshll.u32 %v3342, 16
      %v3382 = vrot.slane %v3380, 1
      %v3383 = vsel %vm554, %v3378, %v3382
      %v3384 = vshrl.u32 %v3342, 16
      %v3386 = vor.u32 %v3384, %v3382
      %v3388 = vshll.u32 %v3343, 16
      %v3390 = vrot.slane %v3388, 1
      %v3391 = vsel %vm554, %v3386, %v3390
      %v3392 = vshrl.u32 %v3343, 16
      %v3394 = vor.u32 %v3392, %v3390
      %v3396 = vshll.u32 %v3344, 16
      %v3398 = vrot.slane %v3396, 1
      %v3399 = vsel %vm554, %v3394, %v3398
      %v3400 = vshrl.u32 %v3344, 16
      %v3402 = vor.u32 %v3400, %v3398
      %v3404 = vshll.u32 %v3345, 16
      %v3406 = vrot.slane %v3404, 1
      %v3407 = vsel %vm554, %v3402, %v3406
      %v3408 = vshrl.u32 %v3345, 16
      %v3410 = vor.u32 %v3408, %v3406
      %v3412 = vshll.u32 %v3346, 16
      %v3414 = vrot.slane %v3412, 1
      %v3415 = vsel %vm554, %v3410, %v3414
      %v3416 = vshrl.u32 %v3346, 16
      %v3418 = vor.u32 %v3416, %v3414
      %v3420 = vshll.u32 %v3347, 16
      %v3422 = vrot.slane %v3420, 1
      %v3423 = vsel %vm554, %v3418, %v3422
      %v3432 = vunpack.c.l.b16 %v3292
      %v3433 = vunpack.c.l.b16 %v3293
      %v3434 = vunpack.c.l.b16 %v3294
      %v3435 = vunpack.c.l.b16 %v3295
      %v3436 = vunpack.c.l.b16 %v3296
      %v3437 = vunpack.c.l.b16 %v3297
      %v3438 = vunpack.c.l.b16 %v3298
      %v3439 = vunpack.c.l.b16 %v3299
      %v3440 = vpack.c.b16 %v3433, %v3432
      %v3441 = vpack.c.b16 %v3435, %v3434
      %v3442 = vpack.c.b16 %v3437, %v3436
      %v3443 = vpack.c.b16 %v3439, %v3438
      %v3449 = vsel %vm674, %v3359, 0
      %v3452 = vsel %vm674, %v3367, 0
      %v3455 = vsel %vm674, %v3375, 0
      %v3458 = vsel %vm674, %v3383, 0
      %v3461 = vsel %vm674, %v3391, 0
      %v3464 = vsel %vm674, %v3399, 0
      %v3467 = vsel %vm674, %v3407, 0
      %v3470 = vsel %vm674, %v3415, 0
      %v3473 = vsel %vm674, %v3423, 0
      %3475 = vmatpush.bf16.msra.mxu0 0
      %3476 = vmatpush.bf16.msra.mxu0 0
      %3477 = vmatpush.bf16.msra.mxu0 0
      %3478 = vmatpush.bf16.msra.mxu0 0
      %3479 = vmatpush.bf16.msra.mxu0 %v3443
      %3480 = vmatpush.bf16.msra.mxu0 %v3442
      %3481 = vmatpush.bf16.msra.mxu0 %v3441
      %3482 = vmatpush.bf16.msra.mxu0 %v3440
      %3483 = vmatmul.bf16.gmra.mxu0 %v3449
      %v3484 = vpop.f32.mrf.mxu0
      %v3485 = vadd.f32 0.0, %v3484
      %v3486 = vpop.f32.mrf.mxu0
      %v3487 = vadd.f32 0.0, %v3486
      %3488 = vmatmul.bf16.gmra.mxu0 %v3452
      %v3489 = vpop.f32.mrf.mxu0
      %v3490 = vadd.f32 0.0, %v3489
      %v3491 = vpop.f32.mrf.mxu0
      %v3492 = vadd.f32 0.0, %v3491
      %3493 = vmatmul.bf16.gmra.mxu0 %v3455
      %v3494 = vpop.f32.mrf.mxu0
      %v3495 = vadd.f32 0.0, %v3494
      %v3496 = vpop.f32.mrf.mxu0
      %v3497 = vadd.f32 0.0, %v3496
      %3498 = vmatmul.bf16.gmra.mxu0 %v3458
      %v3499 = vpop.f32.mrf.mxu0
      %v3500 = vadd.f32 0.0, %v3499
      %v3501 = vpop.f32.mrf.mxu0
      %v3502 = vadd.f32 0.0, %v3501
      %3503 = vmatmul.bf16.gmra.mxu0 %v3461
      %v3504 = vpop.f32.mrf.mxu0
      %v3505 = vadd.f32 0.0, %v3504
      %v3506 = vpop.f32.mrf.mxu0
      %v3507 = vadd.f32 0.0, %v3506
      %3508 = vmatmul.bf16.gmra.mxu0 %v3464
      %v3509 = vpop.f32.mrf.mxu0
      %v3510 = vadd.f32 0.0, %v3509
      %v3511 = vpop.f32.mrf.mxu0
      %v3512 = vadd.f32 0.0, %v3511
      %3513 = vmatmul.bf16.gmra.mxu0 %v3467
      %v3514 = vpop.f32.mrf.mxu0
      %v3515 = vadd.f32 0.0, %v3514
      %v3516 = vpop.f32.mrf.mxu0
      %v3517 = vadd.f32 0.0, %v3516
      %3518 = vmatmul.bf16.gmra.mxu0 %v3470
      %v3519 = vpop.f32.mrf.mxu0
      %v3520 = vadd.f32 0.0, %v3519
      %v3521 = vpop.f32.mrf.mxu0
      %v3522 = vadd.f32 0.0, %v3521
      %3523 = vmatmul.bf16.gmra.mxu0 %v3473
      %v3524 = vpop.f32.mrf.mxu0
      %v3525 = vadd.f32 0.0, %v3524
      %v3526 = vpop.f32.mrf.mxu0
      %v3527 = vadd.f32 0.0, %v3526
      %3528 = vdwg.mxu0
      %v3529 = vadd.f32 %v3228, %v3485
      %v3530 = vadd.f32 %v3230, %v3487
      %v3531 = vadd.f32 %v3233, %v3490
      %v3532 = vadd.f32 %v3235, %v3492
      %v3533 = vadd.f32 %v3238, %v3495
      %v3534 = vadd.f32 %v3240, %v3497
      %v3535 = vadd.f32 %v3243, %v3500
      %v3536 = vadd.f32 %v3245, %v3502
      %v3537 = vadd.f32 %v3248, %v3505
      %v3538 = vadd.f32 %v3250, %v3507
      %v3539 = vadd.f32 %v3253, %v3510
      %v3540 = vadd.f32 %v3255, %v3512
      %v3541 = vadd.f32 %v3258, %v3515
      %v3542 = vadd.f32 %v3260, %v3517
      %v3543 = vadd.f32 %v3263, %v3520
      %v3544 = vadd.f32 %v3265, %v3522
      %v3545 = vadd.f32 %v3268, %v3525
      %v3546 = vadd.f32 %v3270, %v3527
      %v3547 = vld [vmem:[#allocation3 + $0x10] sm:$0xf]
      %v3548 = vld [vmem:[#allocation3 + $0x14] sm:$0xf]
      %v3549 = vld [vmem:[#allocation3 + $0x18] sm:$0xf]
      %v3550 = vld [vmem:[#allocation3 + $0x1c] sm:$0xf]
      %v3551 = vld [vmem:[#allocation3 + $0x20] sm:$0xf]
      %v3552 = vld [vmem:[#allocation3 + $0x24] sm:$0xf]
      %v3553 = vld [vmem:[#allocation3 + $0x28] sm:$0xf]
      %v3554 = vld [vmem:[#allocation3 + $0x2c] sm:$0xf]
      %v3555 = vld [vmem:[#allocation3 + $0x30] sm:$0xf]
      %v3556 = vld [vmem:[#allocation3 + $0x34] sm:$0xf]
      %v3557 = vld [vmem:[#allocation3 + $0x38] sm:$0xf]
      %v3558 = vld [vmem:[#allocation3 + $0x3c] sm:$0xf]
      %v3559 = vld [vmem:[#allocation3 + $0x40] sm:$0xf]
      %v3560 = vld [vmem:[#allocation3 + $0x44] sm:$0xf]
      %v3561 = vld [vmem:[#allocation3 + $0x48] sm:$0xf]
      %v3562 = vld [vmem:[#allocation3 + $0x4c] sm:$0xf]
      %v3563 = vld [vmem:[#allocation3 + $0x50] sm:$0xf]
      %v3564 = vld [vmem:[#allocation3 + $0x54] sm:$0xf]
      %v3565 = vld [vmem:[#allocation3 + $0x58] sm:$0x1]
      %s3566 = scalar_lea.vmem %s4, 96
      %v3567 = vld [vmem:[%s3566] sm:$0xf]
      %v3568 = vld [vmem:[%s3566 + $0x4] sm:$0xf]
      %v3569 = vld [vmem:[%s3566 + $0x8] sm:$0xf]
      %v3570 = vld [vmem:[%s3566 + $0xc] sm:$0xf]
      %v3571 = vld [vmem:[%s3566 + $0x10] sm:$0xf]
      %v3572 = vld [vmem:[%s3566 + $0x14] sm:$0xf]
      %v3573 = vld [vmem:[%s3566 + $0x18] sm:$0xf]
      %v3574 = vld [vmem:[%s3566 + $0x1c] sm:$0xf]
      %v3594 = vunpack.c.l.b16 %v3547
      %v3595 = vunpack.c.l.b16 %v3548
      %v3596 = vunpack.c.l.b16 %v3549
      %v3597 = vunpack.c.l.b16 %v3550
      %v3598 = vunpack.c.l.b16 %v3551
      %v3599 = vunpack.c.l.b16 %v3552
      %v3600 = vunpack.c.l.b16 %v3553
      %v3601 = vunpack.c.l.b16 %v3554
      %v3602 = vunpack.c.l.b16 %v3555
      %v3603 = vunpack.c.l.b16 %v3556
      %v3604 = vunpack.c.l.b16 %v3557
      %v3605 = vunpack.c.l.b16 %v3558
      %v3606 = vunpack.c.l.b16 %v3559
      %v3607 = vunpack.c.l.b16 %v3560
      %v3608 = vunpack.c.l.b16 %v3561
      %v3609 = vunpack.c.l.b16 %v3562
      %v3610 = vunpack.c.l.b16 %v3563
      %v3611 = vunpack.c.l.b16 %v3564
      %v3612 = vunpack.c.l.b16 %v3565
      %v3613 = vpack.c.b16 %v3595, %v3594
      %v3614 = vpack.c.b16 %v3597, %v3596
      %v3615 = vpack.c.b16 %v3599, %v3598
      %v3616 = vpack.c.b16 %v3601, %v3600
      %v3617 = vpack.c.b16 %v3603, %v3602
      %v3618 = vpack.c.b16 %v3605, %v3604
      %v3619 = vpack.c.b16 %v3607, %v3606
      %v3620 = vpack.c.b16 %v3609, %v3608
      %v3621 = vpack.c.b16 %v3611, %v3610
      %v3622 = vpack.c.b16 %v3612, %v3612
      %v3624 = vshrl.u32 %v3613, 16
      %v3626 = vshll.u32 %v3613, 16
      %v3628 = vrot.slane %v3626, 1
      %v3629 = vor.u32 %v3624, %v3628
      %v3631 = vshll.u32 %v3614, 16
      %v3633 = vrot.slane %v3631, 1
      %v3634 = vsel %vm554, %v3629, %v3633
      %v3635 = vshrl.u32 %v3614, 16
      %v3637 = vor.u32 %v3635, %v3633
      %v3639 = vshll.u32 %v3615, 16
      %v3641 = vrot.slane %v3639, 1
      %v3642 = vsel %vm554, %v3637, %v3641
      %v3643 = vshrl.u32 %v3615, 16
      %v3645 = vor.u32 %v3643, %v3641
      %v3647 = vshll.u32 %v3616, 16
      %v3649 = vrot.slane %v3647, 1
      %v3650 = vsel %vm554, %v3645, %v3649
      %v3651 = vshrl.u32 %v3616, 16
      %v3653 = vor.u32 %v3651, %v3649
      %v3655 = vshll.u32 %v3617, 16
      %v3657 = vrot.slane %v3655, 1
      %v3658 = vsel %vm554, %v3653, %v3657
      %v3659 = vshrl.u32 %v3617, 16
      %v3661 = vor.u32 %v3659, %v3657
      %v3663 = vshll.u32 %v3618, 16
      %v3665 = vrot.slane %v3663, 1
      %v3666 = vsel %vm554, %v3661, %v3665
      %v3667 = vshrl.u32 %v3618, 16
      %v3669 = vor.u32 %v3667, %v3665
      %v3671 = vshll.u32 %v3619, 16
      %v3673 = vrot.slane %v3671, 1
      %v3674 = vsel %vm554, %v3669, %v3673
      %v3675 = vshrl.u32 %v3619, 16
      %v3677 = vor.u32 %v3675, %v3673
      %v3679 = vshll.u32 %v3620, 16
      %v3681 = vrot.slane %v3679, 1
      %v3682 = vsel %vm554, %v3677, %v3681
      %v3683 = vshrl.u32 %v3620, 16
      %v3685 = vor.u32 %v3683, %v3681
      %v3687 = vshll.u32 %v3621, 16
      %v3689 = vrot.slane %v3687, 1
      %v3690 = vsel %vm554, %v3685, %v3689
      %v3691 = vshrl.u32 %v3621, 16
      %v3693 = vor.u32 %v3691, %v3689
      %v3695 = vshll.u32 %v3622, 16
      %v3697 = vrot.slane %v3695, 1
      %v3698 = vsel %vm554, %v3693, %v3697
      %v3707 = vunpack.c.l.b16 %v3567
      %v3708 = vunpack.c.l.b16 %v3568
      %v3709 = vunpack.c.l.b16 %v3569
      %v3710 = vunpack.c.l.b16 %v3570
      %v3711 = vunpack.c.l.b16 %v3571
      %v3712 = vunpack.c.l.b16 %v3572
      %v3713 = vunpack.c.l.b16 %v3573
      %v3714 = vunpack.c.l.b16 %v3574
      %v3715 = vpack.c.b16 %v3708, %v3707
      %v3716 = vpack.c.b16 %v3710, %v3709
      %v3717 = vpack.c.b16 %v3712, %v3711
      %v3718 = vpack.c.b16 %v3714, %v3713
      %v3724 = vsel %vm674, %v3634, 0
      %v3727 = vsel %vm674, %v3642, 0
      %v3730 = vsel %vm674, %v3650, 0
      %v3733 = vsel %vm674, %v3658, 0
      %v3736 = vsel %vm674, %v3666, 0
      %v3739 = vsel %vm674, %v3674, 0
      %v3742 = vsel %vm674, %v3682, 0
      %v3745 = vsel %vm674, %v3690, 0
      %v3748 = vsel %vm674, %v3698, 0
      %3750 = vmatpush.bf16.msra.mxu0 0
      %3751 = vmatpush.bf16.msra.mxu0 0
      %3752 = vmatpush.bf16.msra.mxu0 0
      %3753 = vmatpush.bf16.msra.mxu0 0
      %3754 = vmatpush.bf16.msra.mxu0 %v3718
      %3755 = vmatpush.bf16.msra.mxu0 %v3717
      %3756 = vmatpush.bf16.msra.mxu0 %v3716
      %3757 = vmatpush.bf16.msra.mxu0 %v3715
      %3758 = vmatmul.bf16.gmra.mxu0 %v3724
      %v3759 = vpop.f32.mrf.mxu0
      %v3760 = vadd.f32 0.0, %v3759
      %v3761 = vpop.f32.mrf.mxu0
      %v3762 = vadd.f32 0.0, %v3761
      %3763 = vmatmul.bf16.gmra.mxu0 %v3727
      %v3764 = vpop.f32.mrf.mxu0
      %v3765 = vadd.f32 0.0, %v3764
      %v3766 = vpop.f32.mrf.mxu0
      %v3767 = vadd.f32 0.0, %v3766
      %3768 = vmatmul.bf16.gmra.mxu0 %v3730
      %v3769 = vpop.f32.mrf.mxu0
      %v3770 = vadd.f32 0.0, %v3769
      %v3771 = vpop.f32.mrf.mxu0
      %v3772 = vadd.f32 0.0, %v3771
      %3773 = vmatmul.bf16.gmra.mxu0 %v3733
      %v3774 = vpop.f32.mrf.mxu0
      %v3775 = vadd.f32 0.0, %v3774
      %v3776 = vpop.f32.mrf.mxu0
      %v3777 = vadd.f32 0.0, %v3776
      %3778 = vmatmul.bf16.gmra.mxu0 %v3736
      %v3779 = vpop.f32.mrf.mxu0
      %v3780 = vadd.f32 0.0, %v3779
      %v3781 = vpop.f32.mrf.mxu0
      %v3782 = vadd.f32 0.0, %v3781
      %3783 = vmatmul.bf16.gmra.mxu0 %v3739
      %v3784 = vpop.f32.mrf.mxu0
      %v3785 = vadd.f32 0.0, %v3784
      %v3786 = vpop.f32.mrf.mxu0
      %v3787 = vadd.f32 0.0, %v3786
      %3788 = vmatmul.bf16.gmra.mxu0 %v3742
      %v3789 = vpop.f32.mrf.mxu0
      %v3790 = vadd.f32 0.0, %v3789
      %v3791 = vpop.f32.mrf.mxu0
      %v3792 = vadd.f32 0.0, %v3791
      %3793 = vmatmul.bf16.gmra.mxu0 %v3745
      %v3794 = vpop.f32.mrf.mxu0
      %v3795 = vadd.f32 0.0, %v3794
      %v3796 = vpop.f32.mrf.mxu0
      %v3797 = vadd.f32 0.0, %v3796
      %3798 = vmatmul.bf16.gmra.mxu0 %v3748
      %v3799 = vpop.f32.mrf.mxu0
      %v3800 = vadd.f32 0.0, %v3799
      %v3801 = vpop.f32.mrf.mxu0
      %v3802 = vadd.f32 0.0, %v3801
      %3803 = vdwg.mxu0
      %v3804 = vadd.f32 %v3529, %v3760
      %v3805 = vadd.f32 %v3530, %v3762
      %v3806 = vadd.f32 %v3531, %v3765
      %v3807 = vadd.f32 %v3532, %v3767
      %v3808 = vadd.f32 %v3533, %v3770
      %v3809 = vadd.f32 %v3534, %v3772
      %v3810 = vadd.f32 %v3535, %v3775
      %v3811 = vadd.f32 %v3536, %v3777
      %v3812 = vadd.f32 %v3537, %v3780
      %v3813 = vadd.f32 %v3538, %v3782
      %v3814 = vadd.f32 %v3539, %v3785
      %v3815 = vadd.f32 %v3540, %v3787
      %v3816 = vadd.f32 %v3541, %v3790
      %v3817 = vadd.f32 %v3542, %v3792
      %v3818 = vadd.f32 %v3543, %v3795
      %v3819 = vadd.f32 %v3544, %v3797
      %v3820 = vadd.f32 %v3545, %v3800
      %v3821 = vadd.f32 %v3546, %v3802
      %v3822 = vld [vmem:[#allocation3 + $0x10] sm:$0xe]
      %s3823 = scalar_lea.vmem %s4, 128
      %v3824 = vld [vmem:[%s3823] sm:$0xf]
      %v3825 = vld [vmem:[%s3823 + $0x4] sm:$0xf]
      %v3826 = vld [vmem:[%s3823 + $0x8] sm:$0xf]
      %v3827 = vld [vmem:[%s3823 + $0xc] sm:$0xf]
      %v3828 = vld [vmem:[%s3823 + $0x10] sm:$0xf]
      %v3829 = vld [vmem:[%s3823 + $0x14] sm:$0xf]
      %v3830 = vld [vmem:[%s3823 + $0x18] sm:$0xf]
      %v3831 = vld [vmem:[%s3823 + $0x1c] sm:$0xf]
      %v3833 = vunpack.c.l.b16 %v3822
      %v3834 = vpack.c.b16 %v3595, %v3833
      %v3835 = vrot.slane %v3834, 1
      %v3836 = vrot.slane %v3614, 1
      %v3837 = vsel %vm912, %v3835, %v3836
      %v3838 = vrot.slane %v3615, 1
      %v3839 = vsel %vm912, %v3836, %v3838
      %v3840 = vrot.slane %v3616, 1
      %v3841 = vsel %vm912, %v3838, %v3840
      %v3842 = vrot.slane %v3617, 1
      %v3843 = vsel %vm912, %v3840, %v3842
      %v3844 = vrot.slane %v3618, 1
      %v3845 = vsel %vm912, %v3842, %v3844
      %v3846 = vrot.slane %v3619, 1
      %v3847 = vsel %vm912, %v3844, %v3846
      %v3848 = vrot.slane %v3620, 1
      %v3849 = vsel %vm912, %v3846, %v3848
      %v3850 = vrot.slane %v3621, 1
      %v3851 = vsel %vm912, %v3848, %v3850
      %v3852 = vrot.slane %v3622, 1
      %v3853 = vsel %vm912, %v3850, %v3852
      %v3862 = vunpack.c.l.b16 %v3824
      %v3863 = vunpack.c.l.b16 %v3825
      %v3864 = vunpack.c.l.b16 %v3826
      %v3865 = vunpack.c.l.b16 %v3827
      %v3866 = vunpack.c.l.b16 %v3828
      %v3867 = vunpack.c.l.b16 %v3829
      %v3868 = vunpack.c.l.b16 %v3830
      %v3869 = vunpack.c.l.b16 %v3831
      %v3870 = vpack.c.b16 %v3863, %v3862
      %v3871 = vpack.c.b16 %v3865, %v3864
      %v3872 = vpack.c.b16 %v3867, %v3866
      %v3873 = vpack.c.b16 %v3869, %v3868
      %v3879 = vsel %vm674, %v3837, 0
      %v3882 = vsel %vm674, %v3839, 0
      %v3885 = vsel %vm674, %v3841, 0
      %v3888 = vsel %vm674, %v3843, 0
      %v3891 = vsel %vm674, %v3845, 0
      %v3894 = vsel %vm674, %v3847, 0
      %v3897 = vsel %vm674, %v3849, 0
      %v3900 = vsel %vm674, %v3851, 0
      %v3903 = vsel %vm674, %v3853, 0
      %3905 = vmatpush.bf16.msra.mxu0 0
      %3906 = vmatpush.bf16.msra.mxu0 0
      %3907 = vmatpush.bf16.msra.mxu0 0
      %3908 = vmatpush.bf16.msra.mxu0 0
      %3909 = vmatpush.bf16.msra.mxu0 %v3873
      %3910 = vmatpush.bf16.msra.mxu0 %v3872
      %3911 = vmatpush.bf16.msra.mxu0 %v3871
      %3912 = vmatpush.bf16.msra.mxu0 %v3870
      %3913 = vmatmul.bf16.gmra.mxu0 %v3879
      %v3914 = vpop.f32.mrf.mxu0
      %v3915 = vadd.f32 0.0, %v3914
      %v3916 = vpop.f32.mrf.mxu0
      %v3917 = vadd.f32 0.0, %v3916
      %3918 = vmatmul.bf16.gmra.mxu0 %v3882
      %v3919 = vpop.f32.mrf.mxu0
      %v3920 = vadd.f32 0.0, %v3919
      %v3921 = vpop.f32.mrf.mxu0
      %v3922 = vadd.f32 0.0, %v3921
      %3923 = vmatmul.bf16.gmra.mxu0 %v3885
      %v3924 = vpop.f32.mrf.mxu0
      %v3925 = vadd.f32 0.0, %v3924
      %v3926 = vpop.f32.mrf.mxu0
      %v3927 = vadd.f32 0.0, %v3926
      %3928 = vmatmul.bf16.gmra.mxu0 %v3888
      %v3929 = vpop.f32.mrf.mxu0
      %v3930 = vadd.f32 0.0, %v3929
      %v3931 = vpop.f32.mrf.mxu0
      %v3932 = vadd.f32 0.0, %v3931
      %3933 = vmatmul.bf16.gmra.mxu0 %v3891
      %v3934 = vpop.f32.mrf.mxu0
      %v3935 = vadd.f32 0.0, %v3934
      %v3936 = vpop.f32.mrf.mxu0
      %v3937 = vadd.f32 0.0, %v3936
      %3938 = vmatmul.bf16.gmra.mxu0 %v3894
      %v3939 = vpop.f32.mrf.mxu0
      %v3940 = vadd.f32 0.0, %v3939
      %v3941 = vpop.f32.mrf.mxu0
      %v3942 = vadd.f32 0.0, %v3941
      %3943 = vmatmul.bf16.gmra.mxu0 %v3897
      %v3944 = vpop.f32.mrf.mxu0
      %v3945 = vadd.f32 0.0, %v3944
      %v3946 = vpop.f32.mrf.mxu0
      %v3947 = vadd.f32 0.0, %v3946
      %3948 = vmatmul.bf16.gmra.mxu0 %v3900
      %v3949 = vpop.f32.mrf.mxu0
      %v3950 = vadd.f32 0.0, %v3949
      %v3951 = vpop.f32.mrf.mxu0
      %v3952 = vadd.f32 0.0, %v3951
      %3953 = vmatmul.bf16.gmra.mxu0 %v3903
      %v3954 = vpop.f32.mrf.mxu0
      %v3955 = vadd.f32 0.0, %v3954
      %v3956 = vpop.f32.mrf.mxu0
      %v3957 = vadd.f32 0.0, %v3956
      %3958 = vdwg.mxu0
      %v3959 = vadd.f32 %v3804, %v3915
      %v3960 = vadd.f32 %v3805, %v3917
      %v3961 = vadd.f32 %v3806, %v3920
      %v3962 = vadd.f32 %v3807, %v3922
      %v3963 = vadd.f32 %v3808, %v3925
      %v3964 = vadd.f32 %v3809, %v3927
      %v3965 = vadd.f32 %v3810, %v3930
      %v3966 = vadd.f32 %v3811, %v3932
      %v3967 = vadd.f32 %v3812, %v3935
      %v3968 = vadd.f32 %v3813, %v3937
      %v3969 = vadd.f32 %v3814, %v3940
      %v3970 = vadd.f32 %v3815, %v3942
      %v3971 = vadd.f32 %v3816, %v3945
      %v3972 = vadd.f32 %v3817, %v3947
      %v3973 = vadd.f32 %v3818, %v3950
      %v3974 = vadd.f32 %v3819, %v3952
      %v3975 = vadd.f32 %v3820, %v3955
      %v3976 = vadd.f32 %v3821, %v3957
      %v3977 = vld [vmem:[#allocation3 + $0x58] sm:$0x3]
      %s3978 = scalar_lea.vmem %s4, 160
      %v3979 = vld [vmem:[%s3978] sm:$0xf]
      %v3980 = vld [vmem:[%s3978 + $0x4] sm:$0xf]
      %v3981 = vld [vmem:[%s3978 + $0x8] sm:$0xf]
      %v3982 = vld [vmem:[%s3978 + $0xc] sm:$0xf]
      %v3983 = vld [vmem:[%s3978 + $0x10] sm:$0xf]
      %v3984 = vld [vmem:[%s3978 + $0x14] sm:$0xf]
      %v3985 = vld [vmem:[%s3978 + $0x18] sm:$0xf]
      %v3986 = vld [vmem:[%s3978 + $0x1c] sm:$0xf]
      %v3988 = vunpack.c.l.b16 %v3977
      %v3989 = vpack.c.b16 %v3988, %v3988
      %v3991 = vshrl.u32 %v3834, 16
      %v3993 = vrot.slane %v3991, 1
      %v3994 = vshll.u32 %v3834, 16
      %v3996 = vrot.slane %v3994, 2
      %v3997 = vor.u32 %v3993, %v3996
      %v3998 = vrot.slane %v3635, 1
      %v3999 = vrot.slane %v3631, 2
      %v4000 = vor.u32 %v3998, %v3999
      %v4001 = vsel %vm1364, %v3997, %v4000
      %v4002 = vrot.slane %v3643, 1
      %v4003 = vrot.slane %v3639, 2
      %v4004 = vor.u32 %v4002, %v4003
      %v4005 = vsel %vm1364, %v4000, %v4004
      %v4006 = vrot.slane %v3651, 1
      %v4007 = vrot.slane %v3647, 2
      %v4008 = vor.u32 %v4006, %v4007
      %v4009 = vsel %vm1364, %v4004, %v4008
      %v4010 = vrot.slane %v3659, 1
      %v4011 = vrot.slane %v3655, 2
      %v4012 = vor.u32 %v4010, %v4011
      %v4013 = vsel %vm1364, %v4008, %v4012
      %v4014 = vrot.slane %v3667, 1
      %v4015 = vrot.slane %v3663, 2
      %v4016 = vor.u32 %v4014, %v4015
      %v4017 = vsel %vm1364, %v4012, %v4016
      %v4018 = vrot.slane %v3675, 1
      %v4019 = vrot.slane %v3671, 2
      %v4020 = vor.u32 %v4018, %v4019
      %v4021 = vsel %vm1364, %v4016, %v4020
      %v4022 = vrot.slane %v3683, 1
      %v4023 = vrot.slane %v3679, 2
      %v4024 = vor.u32 %v4022, %v4023
      %v4025 = vsel %vm1364, %v4020, %v4024
      %v4026 = vrot.slane %v3691, 1
      %v4027 = vrot.slane %v3687, 2
      %v4028 = vor.u32 %v4026, %v4027
      %v4029 = vsel %vm1364, %v4024, %v4028
      %v4031 = vshrl.u32 %v3989, 16
      %v4033 = vrot.slane %v4031, 1
      %v4034 = vshll.u32 %v3989, 16
      %v4036 = vrot.slane %v4034, 2
      %v4037 = vor.u32 %v4033, %v4036
      %v4038 = vsel %vm1364, %v4028, %v4037
      %v4047 = vunpack.c.l.b16 %v3979
      %v4048 = vunpack.c.l.b16 %v3980
      %v4049 = vunpack.c.l.b16 %v3981
      %v4050 = vunpack.c.l.b16 %v3982
      %v4051 = vunpack.c.l.b16 %v3983
      %v4052 = vunpack.c.l.b16 %v3984
      %v4053 = vunpack.c.l.b16 %v3985
      %v4054 = vunpack.c.l.b16 %v3986
      %v4055 = vpack.c.b16 %v4048, %v4047
      %v4056 = vpack.c.b16 %v4050, %v4049
      %v4057 = vpack.c.b16 %v4052, %v4051
      %v4058 = vpack.c.b16 %v4054, %v4053
      %v4064 = vsel %vm674, %v4001, 0
      %v4067 = vsel %vm674, %v4005, 0
      %v4070 = vsel %vm674, %v4009, 0
      %v4073 = vsel %vm674, %v4013, 0
      %v4076 = vsel %vm674, %v4017, 0
      %v4079 = vsel %vm674, %v4021, 0
      %v4082 = vsel %vm674, %v4025, 0
      %v4085 = vsel %vm674, %v4029, 0
      %v4088 = vsel %vm674, %v4038, 0
      %4090 = vmatpush.bf16.msra.mxu0 0
      %4091 = vmatpush.bf16.msra.mxu0 0
      %4092 = vmatpush.bf16.msra.mxu0 0
      %4093 = vmatpush.bf16.msra.mxu0 0
      %4094 = vmatpush.bf16.msra.mxu0 %v4058
      %4095 = vmatpush.bf16.msra.mxu0 %v4057
      %4096 = vmatpush.bf16.msra.mxu0 %v4056
      %4097 = vmatpush.bf16.msra.mxu0 %v4055
      %4098 = vmatmul.bf16.gmra.mxu0 %v4064
      %v4099 = vpop.f32.mrf.mxu0
      %v4100 = vadd.f32 0.0, %v4099
      %v4101 = vpop.f32.mrf.mxu0
      %v4102 = vadd.f32 0.0, %v4101
      %4103 = vmatmul.bf16.gmra.mxu0 %v4067
      %v4104 = vpop.f32.mrf.mxu0
      %v4105 = vadd.f32 0.0, %v4104
      %v4106 = vpop.f32.mrf.mxu0
      %v4107 = vadd.f32 0.0, %v4106
      %4108 = vmatmul.bf16.gmra.mxu0 %v4070
      %v4109 = vpop.f32.mrf.mxu0
      %v4110 = vadd.f32 0.0, %v4109
      %v4111 = vpop.f32.mrf.mxu0
      %v4112 = vadd.f32 0.0, %v4111
      %4113 = vmatmul.bf16.gmra.mxu0 %v4073
      %v4114 = vpop.f32.mrf.mxu0
      %v4115 = vadd.f32 0.0, %v4114
      %v4116 = vpop.f32.mrf.mxu0
      %v4117 = vadd.f32 0.0, %v4116
      %4118 = vmatmul.bf16.gmra.mxu0 %v4076
      %v4119 = vpop.f32.mrf.mxu0
      %v4120 = vadd.f32 0.0, %v4119
      %v4121 = vpop.f32.mrf.mxu0
      %v4122 = vadd.f32 0.0, %v4121
      %4123 = vmatmul.bf16.gmra.mxu0 %v4079
      %v4124 = vpop.f32.mrf.mxu0
      %v4125 = vadd.f32 0.0, %v4124
      %v4126 = vpop.f32.mrf.mxu0
      %v4127 = vadd.f32 0.0, %v4126
      %4128 = vmatmul.bf16.gmra.mxu0 %v4082
      %v4129 = vpop.f32.mrf.mxu0
      %v4130 = vadd.f32 0.0, %v4129
      %v4131 = vpop.f32.mrf.mxu0
      %v4132 = vadd.f32 0.0, %v4131
      %4133 = vmatmul.bf16.gmra.mxu0 %v4085
      %v4134 = vpop.f32.mrf.mxu0
      %v4135 = vadd.f32 0.0, %v4134
      %v4136 = vpop.f32.mrf.mxu0
      %v4137 = vadd.f32 0.0, %v4136
      %4138 = vmatmul.bf16.gmra.mxu0 %v4088
      %v4139 = vpop.f32.mrf.mxu0
      %v4140 = vadd.f32 0.0, %v4139
      %v4141 = vpop.f32.mrf.mxu0
      %v4142 = vadd.f32 0.0, %v4141
      %4143 = vdwg.mxu0
      %v4144 = vadd.f32 %v3959, %v4100
      %v4145 = vadd.f32 %v3960, %v4102
      %v4146 = vadd.f32 %v3961, %v4105
      %v4147 = vadd.f32 %v3962, %v4107
      %v4148 = vadd.f32 %v3963, %v4110
      %v4149 = vadd.f32 %v3964, %v4112
      %v4150 = vadd.f32 %v3965, %v4115
      %v4151 = vadd.f32 %v3966, %v4117
      %v4152 = vadd.f32 %v3967, %v4120
      %v4153 = vadd.f32 %v3968, %v4122
      %v4154 = vadd.f32 %v3969, %v4125
      %v4155 = vadd.f32 %v3970, %v4127
      %v4156 = vadd.f32 %v3971, %v4130
      %v4157 = vadd.f32 %v3972, %v4132
      %v4158 = vadd.f32 %v3973, %v4135
      %v4159 = vadd.f32 %v3974, %v4137
      %v4160 = vadd.f32 %v3975, %v4140
      %v4161 = vadd.f32 %v3976, %v4142
      %v4162 = vld [vmem:[#allocation3 + $0x18] sm:$0xe]
      %v4163 = vld [vmem:[#allocation3 + $0x1c] sm:$0xf]
      %v4164 = vld [vmem:[#allocation3 + $0x20] sm:$0xf]
      %v4165 = vld [vmem:[#allocation3 + $0x24] sm:$0xf]
      %v4166 = vld [vmem:[#allocation3 + $0x28] sm:$0xf]
      %v4167 = vld [vmem:[#allocation3 + $0x2c] sm:$0xf]
      %v4168 = vld [vmem:[#allocation3 + $0x30] sm:$0xf]
      %v4169 = vld [vmem:[#allocation3 + $0x34] sm:$0xf]
      %v4170 = vld [vmem:[#allocation3 + $0x38] sm:$0xf]
      %v4171 = vld [vmem:[#allocation3 + $0x3c] sm:$0xf]
      %v4172 = vld [vmem:[#allocation3 + $0x40] sm:$0xf]
      %v4173 = vld [vmem:[#allocation3 + $0x44] sm:$0xf]
      %v4174 = vld [vmem:[#allocation3 + $0x48] sm:$0xf]
      %v4175 = vld [vmem:[#allocation3 + $0x4c] sm:$0xf]
      %v4176 = vld [vmem:[#allocation3 + $0x50] sm:$0xf]
      %v4177 = vld [vmem:[#allocation3 + $0x54] sm:$0xf]
      %v4178 = vld [vmem:[#allocation3 + $0x58] sm:$0xf]
      %v4179 = vld [vmem:[#allocation3 + $0x5c] sm:$0xf]
      %v4180 = vld [vmem:[#allocation3 + $0x60] sm:$0x3]
      %s4181 = scalar_lea.vmem %s4, 192
      %v4182 = vld [vmem:[%s4181] sm:$0xf]
      %v4183 = vld [vmem:[%s4181 + $0x4] sm:$0xf]
      %v4184 = vld [vmem:[%s4181 + $0x8] sm:$0xf]
      %v4185 = vld [vmem:[%s4181 + $0xc] sm:$0xf]
      %v4186 = vld [vmem:[%s4181 + $0x10] sm:$0xf]
      %v4187 = vld [vmem:[%s4181 + $0x14] sm:$0xf]
      %v4188 = vld [vmem:[%s4181 + $0x18] sm:$0xf]
      %v4189 = vld [vmem:[%s4181 + $0x1c] sm:$0xf]
      %v4209 = vunpack.c.l.b16 %v4162
      %v4210 = vunpack.c.l.b16 %v4163
      %v4211 = vunpack.c.l.b16 %v4164
      %v4212 = vunpack.c.l.b16 %v4165
      %v4213 = vunpack.c.l.b16 %v4166
      %v4214 = vunpack.c.l.b16 %v4167
      %v4215 = vunpack.c.l.b16 %v4168
      %v4216 = vunpack.c.l.b16 %v4169
      %v4217 = vunpack.c.l.b16 %v4170
      %v4218 = vunpack.c.l.b16 %v4171
      %v4219 = vunpack.c.l.b16 %v4172
      %v4220 = vunpack.c.l.b16 %v4173
      %v4221 = vunpack.c.l.b16 %v4174
      %v4222 = vunpack.c.l.b16 %v4175
      %v4223 = vunpack.c.l.b16 %v4176
      %v4224 = vunpack.c.l.b16 %v4177
      %v4225 = vunpack.c.l.b16 %v4178
      %v4226 = vunpack.c.l.b16 %v4179
      %v4227 = vunpack.c.l.b16 %v4180
      %v4228 = vpack.c.b16 %v4210, %v4209
      %v4229 = vpack.c.b16 %v4212, %v4211
      %v4230 = vpack.c.b16 %v4214, %v4213
      %v4231 = vpack.c.b16 %v4216, %v4215
      %v4232 = vpack.c.b16 %v4218, %v4217
      %v4233 = vpack.c.b16 %v4220, %v4219
      %v4234 = vpack.c.b16 %v4222, %v4221
      %v4235 = vpack.c.b16 %v4224, %v4223
      %v4236 = vpack.c.b16 %v4226, %v4225
      %v4237 = vpack.c.b16 %v4227, %v4227
      %v4239 = vshrl.u32 %v4228, 16
      %v4241 = vrot.slane %v4239, 1
      %v4242 = vshll.u32 %v4228, 16
      %v4244 = vrot.slane %v4242, 2
      %v4245 = vor.u32 %v4241, %v4244
      %v4247 = vshrl.u32 %v4229, 16
      %v4249 = vrot.slane %v4247, 1
      %v4250 = vshll.u32 %v4229, 16
      %v4252 = vrot.slane %v4250, 2
      %v4253 = vor.u32 %v4249, %v4252
      %v4254 = vsel %vm1364, %v4245, %v4253
      %v4256 = vshrl.u32 %v4230, 16
      %v4258 = vrot.slane %v4256, 1
      %v4259 = vshll.u32 %v4230, 16
      %v4261 = vrot.slane %v4259, 2
      %v4262 = vor.u32 %v4258, %v4261
      %v4263 = vsel %vm1364, %v4253, %v4262
      %v4265 = vshrl.u32 %v4231, 16
      %v4267 = vrot.slane %v4265, 1
      %v4268 = vshll.u32 %v4231, 16
      %v4270 = vrot.slane %v4268, 2
      %v4271 = vor.u32 %v4267, %v4270
      %v4272 = vsel %vm1364, %v4262, %v4271
      %v4274 = vshrl.u32 %v4232, 16
      %v4276 = vrot.slane %v4274, 1
      %v4277 = vshll.u32 %v4232, 16
      %v4279 = vrot.slane %v4277, 2
      %v4280 = vor.u32 %v4276, %v4279
      %v4281 = vsel %vm1364, %v4271, %v4280
      %v4283 = vshrl.u32 %v4233, 16
      %v4285 = vrot.slane %v4283, 1
      %v4286 = vshll.u32 %v4233, 16
      %v4288 = vrot.slane %v4286, 2
      %v4289 = vor.u32 %v4285, %v4288
      %v4290 = vsel %vm1364, %v4280, %v4289
      %v4292 = vshrl.u32 %v4234, 16
      %v4294 = vrot.slane %v4292, 1
      %v4295 = vshll.u32 %v4234, 16
      %v4297 = vrot.slane %v4295, 2
      %v4298 = vor.u32 %v4294, %v4297
      %v4299 = vsel %vm1364, %v4289, %v4298
      %v4301 = vshrl.u32 %v4235, 16
      %v4303 = vrot.slane %v4301, 1
      %v4304 = vshll.u32 %v4235, 16
      %v4306 = vrot.slane %v4304, 2
      %v4307 = vor.u32 %v4303, %v4306
      %v4308 = vsel %vm1364, %v4298, %v4307
      %v4310 = vshrl.u32 %v4236, 16
      %v4312 = vrot.slane %v4310, 1
      %v4313 = vshll.u32 %v4236, 16
      %v4315 = vrot.slane %v4313, 2
      %v4316 = vor.u32 %v4312, %v4315
      %v4317 = vsel %vm1364, %v4307, %v4316
      %v4319 = vshrl.u32 %v4237, 16
      %v4321 = vrot.slane %v4319, 1
      %v4322 = vshll.u32 %v4237, 16
      %v4324 = vrot.slane %v4322, 2
      %v4325 = vor.u32 %v4321, %v4324
      %v4326 = vsel %vm1364, %v4316, %v4325
      %v4335 = vunpack.c.l.b16 %v4182
      %v4336 = vunpack.c.l.b16 %v4183
      %v4337 = vunpack.c.l.b16 %v4184
      %v4338 = vunpack.c.l.b16 %v4185
      %v4339 = vunpack.c.l.b16 %v4186
      %v4340 = vunpack.c.l.b16 %v4187
      %v4341 = vunpack.c.l.b16 %v4188
      %v4342 = vunpack.c.l.b16 %v4189
      %v4343 = vpack.c.b16 %v4336, %v4335
      %v4344 = vpack.c.b16 %v4338, %v4337
      %v4345 = vpack.c.b16 %v4340, %v4339
      %v4346 = vpack.c.b16 %v4342, %v4341
      %v4352 = vsel %vm674, %v4254, 0
      %v4355 = vsel %vm674, %v4263, 0
      %v4358 = vsel %vm674, %v4272, 0
      %v4361 = vsel %vm674, %v4281, 0
      %v4364 = vsel %vm674, %v4290, 0
      %v4367 = vsel %vm674, %v4299, 0
      %v4370 = vsel %vm674, %v4308, 0
      %v4373 = vsel %vm674, %v4317, 0
      %v4376 = vsel %vm674, %v4326, 0
      %4378 = vmatpush.bf16.msra.mxu0 0
      %4379 = vmatpush.bf16.msra.mxu0 0
      %4380 = vmatpush.bf16.msra.mxu0 0
      %4381 = vmatpush.bf16.msra.mxu0 0
      %4382 = vmatpush.bf16.msra.mxu0 %v4346
      %4383 = vmatpush.bf16.msra.mxu0 %v4345
      %4384 = vmatpush.bf16.msra.mxu0 %v4344
      %4385 = vmatpush.bf16.msra.mxu0 %v4343
      %4386 = vmatmul.bf16.gmra.mxu0 %v4352
      %v4387 = vpop.f32.mrf.mxu0
      %v4388 = vadd.f32 0.0, %v4387
      %v4389 = vpop.f32.mrf.mxu0
      %v4390 = vadd.f32 0.0, %v4389
      %4391 = vmatmul.bf16.gmra.mxu0 %v4355
      %v4392 = vpop.f32.mrf.mxu0
      %v4393 = vadd.f32 0.0, %v4392
      %v4394 = vpop.f32.mrf.mxu0
      %v4395 = vadd.f32 0.0, %v4394
      %4396 = vmatmul.bf16.gmra.mxu0 %v4358
      %v4397 = vpop.f32.mrf.mxu0
      %v4398 = vadd.f32 0.0, %v4397
      %v4399 = vpop.f32.mrf.mxu0
      %v4400 = vadd.f32 0.0, %v4399
      %4401 = vmatmul.bf16.gmra.mxu0 %v4361
      %v4402 = vpop.f32.mrf.mxu0
      %v4403 = vadd.f32 0.0, %v4402
      %v4404 = vpop.f32.mrf.mxu0
      %v4405 = vadd.f32 0.0, %v4404
      %4406 = vmatmul.bf16.gmra.mxu0 %v4364
      %v4407 = vpop.f32.mrf.mxu0
      %v4408 = vadd.f32 0.0, %v4407
      %v4409 = vpop.f32.mrf.mxu0
      %v4410 = vadd.f32 0.0, %v4409
      %4411 = vmatmul.bf16.gmra.mxu0 %v4367
      %v4412 = vpop.f32.mrf.mxu0
      %v4413 = vadd.f32 0.0, %v4412
      %v4414 = vpop.f32.mrf.mxu0
      %v4415 = vadd.f32 0.0, %v4414
      %4416 = vmatmul.bf16.gmra.mxu0 %v4370
      %v4417 = vpop.f32.mrf.mxu0
      %v4418 = vadd.f32 0.0, %v4417
      %v4419 = vpop.f32.mrf.mxu0
      %v4420 = vadd.f32 0.0, %v4419
      %4421 = vmatmul.bf16.gmra.mxu0 %v4373
      %v4422 = vpop.f32.mrf.mxu0
      %v4423 = vadd.f32 0.0, %v4422
      %v4424 = vpop.f32.mrf.mxu0
      %v4425 = vadd.f32 0.0, %v4424
      %4426 = vmatmul.bf16.gmra.mxu0 %v4376
      %v4427 = vpop.f32.mrf.mxu0
      %v4428 = vadd.f32 0.0, %v4427
      %v4429 = vpop.f32.mrf.mxu0
      %v4430 = vadd.f32 0.0, %v4429
      %4431 = vdwg.mxu0
      %v4432 = vadd.f32 %v4144, %v4388
      %v4433 = vadd.f32 %v4145, %v4390
      %v4434 = vadd.f32 %v4146, %v4393
      %v4435 = vadd.f32 %v4147, %v4395
      %v4436 = vadd.f32 %v4148, %v4398
      %v4437 = vadd.f32 %v4149, %v4400
      %v4438 = vadd.f32 %v4150, %v4403
      %v4439 = vadd.f32 %v4151, %v4405
      %v4440 = vadd.f32 %v4152, %v4408
      %v4441 = vadd.f32 %v4153, %v4410
      %v4442 = vadd.f32 %v4154, %v4413
      %v4443 = vadd.f32 %v4155, %v4415
      %v4444 = vadd.f32 %v4156, %v4418
      %v4445 = vadd.f32 %v4157, %v4420
      %v4446 = vadd.f32 %v4158, %v4423
      %v4447 = vadd.f32 %v4159, %v4425
      %v4448 = vadd.f32 %v4160, %v4428
      %v4449 = vadd.f32 %v4161, %v4430
      %v4450 = vld [vmem:[#allocation3 + $0x18] sm:$0xc]
      %s4451 = scalar_lea.vmem %s4, 224
      %v4452 = vld [vmem:[%s4451] sm:$0xf]
      %v4453 = vld [vmem:[%s4451 + $0x4] sm:$0xf]
      %v4454 = vld [vmem:[%s4451 + $0x8] sm:$0xf]
      %v4455 = vld [vmem:[%s4451 + $0xc] sm:$0xf]
      %v4456 = vld [vmem:[%s4451 + $0x10] sm:$0xf]
      %v4457 = vld [vmem:[%s4451 + $0x14] sm:$0xf]
      %v4458 = vld [vmem:[%s4451 + $0x18] sm:$0xf]
      %v4459 = vld [vmem:[%s4451 + $0x1c] sm:$0xf]
      %v4461 = vunpack.c.l.b16 %v4450
      %v4462 = vpack.c.b16 %v4210, %v4461
      %v4463 = vrot.slane %v4462, 2
      %v4464 = vrot.slane %v4229, 2
      %v4465 = vsel %vm1636, %v4463, %v4464
      %v4466 = vrot.slane %v4230, 2
      %v4467 = vsel %vm1636, %v4464, %v4466
      %v4468 = vrot.slane %v4231, 2
      %v4469 = vsel %vm1636, %v4466, %v4468
      %v4470 = vrot.slane %v4232, 2
      %v4471 = vsel %vm1636, %v4468, %v4470
      %v4472 = vrot.slane %v4233, 2
      %v4473 = vsel %vm1636, %v4470, %v4472
      %v4474 = vrot.slane %v4234, 2
      %v4475 = vsel %vm1636, %v4472, %v4474
      %v4476 = vrot.slane %v4235, 2
      %v4477 = vsel %vm1636, %v4474, %v4476
      %v4478 = vrot.slane %v4236, 2
      %v4479 = vsel %vm1636, %v4476, %v4478
      %v4480 = vrot.slane %v4237, 2
      %v4481 = vsel %vm1636, %v4478, %v4480
      %v4490 = vunpack.c.l.b16 %v4452
      %v4491 = vunpack.c.l.b16 %v4453
      %v4492 = vunpack.c.l.b16 %v4454
      %v4493 = vunpack.c.l.b16 %v4455
      %v4494 = vunpack.c.l.b16 %v4456
      %v4495 = vunpack.c.l.b16 %v4457
      %v4496 = vunpack.c.l.b16 %v4458
      %v4497 = vunpack.c.l.b16 %v4459
      %v4498 = vpack.c.b16 %v4491, %v4490
      %v4499 = vpack.c.b16 %v4493, %v4492
      %v4500 = vpack.c.b16 %v4495, %v4494
      %v4501 = vpack.c.b16 %v4497, %v4496
      %v4507 = vsel %vm674, %v4465, 0
      %v4510 = vsel %vm674, %v4467, 0
      %v4513 = vsel %vm674, %v4469, 0
      %v4516 = vsel %vm674, %v4471, 0
      %v4519 = vsel %vm674, %v4473, 0
      %v4522 = vsel %vm674, %v4475, 0
      %v4525 = vsel %vm674, %v4477, 0
      %v4528 = vsel %vm674, %v4479, 0
      %v4531 = vsel %vm674, %v4481, 0
      %4533 = vmatpush.bf16.msra.mxu0 0
      %4534 = vmatpush.bf16.msra.mxu0 0
      %4535 = vmatpush.bf16.msra.mxu0 0
      %4536 = vmatpush.bf16.msra.mxu0 0
      %4537 = vmatpush.bf16.msra.mxu0 %v4501
      %4538 = vmatpush.bf16.msra.mxu0 %v4500
      %4539 = vmatpush.bf16.msra.mxu0 %v4499
      %4540 = vmatpush.bf16.msra.mxu0 %v4498
      %4541 = vmatmul.bf16.gmra.mxu0 %v4507
      %v4542 = vpop.f32.mrf.mxu0
      %v4543 = vadd.f32 0.0, %v4542
      %v4544 = vpop.f32.mrf.mxu0
      %v4545 = vadd.f32 0.0, %v4544
      %4546 = vmatmul.bf16.gmra.mxu0 %v4510
      %v4547 = vpop.f32.mrf.mxu0
      %v4548 = vadd.f32 0.0, %v4547
      %v4549 = vpop.f32.mrf.mxu0
      %v4550 = vadd.f32 0.0, %v4549
      %4551 = vmatmul.bf16.gmra.mxu0 %v4513
      %v4552 = vpop.f32.mrf.mxu0
      %v4553 = vadd.f32 0.0, %v4552
      %v4554 = vpop.f32.mrf.mxu0
      %v4555 = vadd.f32 0.0, %v4554
      %4556 = vmatmul.bf16.gmra.mxu0 %v4516
      %v4557 = vpop.f32.mrf.mxu0
      %v4558 = vadd.f32 0.0, %v4557
      %v4559 = vpop.f32.mrf.mxu0
      %v4560 = vadd.f32 0.0, %v4559
      %4561 = vmatmul.bf16.gmra.mxu0 %v4519
      %v4562 = vpop.f32.mrf.mxu0
      %v4563 = vadd.f32 0.0, %v4562
      %v4564 = vpop.f32.mrf.mxu0
      %v4565 = vadd.f32 0.0, %v4564
      %4566 = vmatmul.bf16.gmra.mxu0 %v4522
      %v4567 = vpop.f32.mrf.mxu0
      %v4568 = vadd.f32 0.0, %v4567
      %v4569 = vpop.f32.mrf.mxu0
      %v4570 = vadd.f32 0.0, %v4569
      %4571 = vmatmul.bf16.gmra.mxu0 %v4525
      %v4572 = vpop.f32.mrf.mxu0
      %v4573 = vadd.f32 0.0, %v4572
      %v4574 = vpop.f32.mrf.mxu0
      %v4575 = vadd.f32 0.0, %v4574
      %4576 = vmatmul.bf16.gmra.mxu0 %v4528
      %v4577 = vpop.f32.mrf.mxu0
      %v4578 = vadd.f32 0.0, %v4577
      %v4579 = vpop.f32.mrf.mxu0
      %v4580 = vadd.f32 0.0, %v4579
      %4581 = vmatmul.bf16.gmra.mxu0 %v4531
      %v4582 = vpop.f32.mrf.mxu0
      %v4583 = vadd.f32 0.0, %v4582
      %v4584 = vpop.f32.mrf.mxu0
      %v4585 = vadd.f32 0.0, %v4584
      %4586 = vdwg.mxu0
      %v4587 = vadd.f32 %v4432, %v4543
      %v4588 = vadd.f32 %v4433, %v4545
      %v4589 = vadd.f32 %v4434, %v4548
      %v4590 = vadd.f32 %v4435, %v4550
      %v4591 = vadd.f32 %v4436, %v4553
      %v4592 = vadd.f32 %v4437, %v4555
      %v4593 = vadd.f32 %v4438, %v4558
      %v4594 = vadd.f32 %v4439, %v4560
      %v4595 = vadd.f32 %v4440, %v4563
      %v4596 = vadd.f32 %v4441, %v4565
      %v4597 = vadd.f32 %v4442, %v4568
      %v4598 = vadd.f32 %v4443, %v4570
      %v4599 = vadd.f32 %v4444, %v4573
      %v4600 = vadd.f32 %v4445, %v4575
      %v4601 = vadd.f32 %v4446, %v4578
      %v4602 = vadd.f32 %v4447, %v4580
      %v4603 = vadd.f32 %v4448, %v4583
      %v4604 = vadd.f32 %v4449, %v4585
      %v4605 = vld [vmem:[#allocation3 + $0x60] sm:$0x7]
      %s4606 = scalar_lea.vmem %s4, 256
      %v4607 = vld [vmem:[%s4606] sm:$0xf]
      %v4608 = vld [vmem:[%s4606 + $0x4] sm:$0xf]
      %v4609 = vld [vmem:[%s4606 + $0x8] sm:$0xf]
      %v4610 = vld [vmem:[%s4606 + $0xc] sm:$0xf]
      %v4611 = vld [vmem:[%s4606 + $0x10] sm:$0xf]
      %v4612 = vld [vmem:[%s4606 + $0x14] sm:$0xf]
      %v4613 = vld [vmem:[%s4606 + $0x18] sm:$0xf]
      %v4614 = vld [vmem:[%s4606 + $0x1c] sm:$0xf]
      %v4616 = vunpack.c.l.b16 %v4605
      %v4617 = vpack.c.b16 %v4616, %v4616
      %v4619 = vshrl.u32 %v4462, 16
      %v4621 = vrot.slane %v4619, 2
      %v4622 = vshll.u32 %v4462, 16
      %v4624 = vrot.slane %v4622, 3
      %v4625 = vor.u32 %v4621, %v4624
      %v4626 = vrot.slane %v4247, 2
      %v4627 = vrot.slane %v4250, 3
      %v4628 = vor.u32 %v4626, %v4627
      %v4629 = vsel %vm2168, %v4625, %v4628
      %v4630 = vrot.slane %v4256, 2
      %v4631 = vrot.slane %v4259, 3
      %v4632 = vor.u32 %v4630, %v4631
      %v4633 = vsel %vm2168, %v4628, %v4632
      %v4634 = vrot.slane %v4265, 2
      %v4635 = vrot.slane %v4268, 3
      %v4636 = vor.u32 %v4634, %v4635
      %v4637 = vsel %vm2168, %v4632, %v4636
      %v4638 = vrot.slane %v4274, 2
      %v4639 = vrot.slane %v4277, 3
      %v4640 = vor.u32 %v4638, %v4639
      %v4641 = vsel %vm2168, %v4636, %v4640
      %v4642 = vrot.slane %v4283, 2
      %v4643 = vrot.slane %v4286, 3
      %v4644 = vor.u32 %v4642, %v4643
      %v4645 = vsel %vm2168, %v4640, %v4644
      %v4646 = vrot.slane %v4292, 2
      %v4647 = vrot.slane %v4295, 3
      %v4648 = vor.u32 %v4646, %v4647
      %v4649 = vsel %vm2168, %v4644, %v4648
      %v4650 = vrot.slane %v4301, 2
      %v4651 = vrot.slane %v4304, 3
      %v4652 = vor.u32 %v4650, %v4651
      %v4653 = vsel %vm2168, %v4648, %v4652
      %v4654 = vrot.slane %v4310, 2
      %v4655 = vrot.slane %v4313, 3
      %v4656 = vor.u32 %v4654, %v4655
      %v4657 = vsel %vm2168, %v4652, %v4656
      %v4659 = vshrl.u32 %v4617, 16
      %v4661 = vrot.slane %v4659, 2
      %v4662 = vshll.u32 %v4617, 16
      %v4664 = vrot.slane %v4662, 3
      %v4665 = vor.u32 %v4661, %v4664
      %v4666 = vsel %vm2168, %v4656, %v4665
      %v4675 = vunpack.c.l.b16 %v4607
      %v4676 = vunpack.c.l.b16 %v4608
      %v4677 = vunpack.c.l.b16 %v4609
      %v4678 = vunpack.c.l.b16 %v4610
      %v4679 = vunpack.c.l.b16 %v4611
      %v4680 = vunpack.c.l.b16 %v4612
      %v4681 = vunpack.c.l.b16 %v4613
      %v4682 = vunpack.c.l.b16 %v4614
      %v4683 = vpack.c.b16 %v4676, %v4675
      %v4684 = vpack.c.b16 %v4678, %v4677
      %v4685 = vpack.c.b16 %v4680, %v4679
      %v4686 = vpack.c.b16 %v4682, %v4681
      %v4692 = vsel %vm674, %v4629, 0
      %v4695 = vsel %vm674, %v4633, 0
      %v4698 = vsel %vm674, %v4637, 0
      %v4701 = vsel %vm674, %v4641, 0
      %v4704 = vsel %vm674, %v4645, 0
      %v4707 = vsel %vm674, %v4649, 0
      %v4710 = vsel %vm674, %v4653, 0
      %v4713 = vsel %vm674, %v4657, 0
      %v4716 = vsel %vm674, %v4666, 0
      %4718 = vmatpush.bf16.msra.mxu0 0
      %4719 = vmatpush.bf16.msra.mxu0 0
      %4720 = vmatpush.bf16.msra.mxu0 0
      %4721 = vmatpush.bf16.msra.mxu0 0
      %4722 = vmatpush.bf16.msra.mxu0 %v4686
      %4723 = vmatpush.bf16.msra.mxu0 %v4685
      %4724 = vmatpush.bf16.msra.mxu0 %v4684
      %4725 = vmatpush.bf16.msra.mxu0 %v4683
      %4726 = vmatmul.bf16.gmra.mxu0 %v4692
      %v4727 = vpop.f32.mrf.mxu0
      %v4728 = vadd.f32 0.0, %v4727
      %v4729 = vpop.f32.mrf.mxu0
      %v4730 = vadd.f32 0.0, %v4729
      %4731 = vmatmul.bf16.gmra.mxu0 %v4695
      %v4732 = vpop.f32.mrf.mxu0
      %v4733 = vadd.f32 0.0, %v4732
      %v4734 = vpop.f32.mrf.mxu0
      %v4735 = vadd.f32 0.0, %v4734
      %4736 = vmatmul.bf16.gmra.mxu0 %v4698
      %v4737 = vpop.f32.mrf.mxu0
      %v4738 = vadd.f32 0.0, %v4737
      %v4739 = vpop.f32.mrf.mxu0
      %v4740 = vadd.f32 0.0, %v4739
      %4741 = vmatmul.bf16.gmra.mxu0 %v4701
      %v4742 = vpop.f32.mrf.mxu0
      %v4743 = vadd.f32 0.0, %v4742
      %v4744 = vpop.f32.mrf.mxu0
      %v4745 = vadd.f32 0.0, %v4744
      %4746 = vmatmul.bf16.gmra.mxu0 %v4704
      %v4747 = vpop.f32.mrf.mxu0
      %v4748 = vadd.f32 0.0, %v4747
      %v4749 = vpop.f32.mrf.mxu0
      %v4750 = vadd.f32 0.0, %v4749
      %4751 = vmatmul.bf16.gmra.mxu0 %v4707
      %v4752 = vpop.f32.mrf.mxu0
      %v4753 = vadd.f32 0.0, %v4752
      %v4754 = vpop.f32.mrf.mxu0
      %v4755 = vadd.f32 0.0, %v4754
      %4756 = vmatmul.bf16.gmra.mxu0 %v4710
      %v4757 = vpop.f32.mrf.mxu0
      %v4758 = vadd.f32 0.0, %v4757
      %v4759 = vpop.f32.mrf.mxu0
      %v4760 = vadd.f32 0.0, %v4759
      %4761 = vmatmul.bf16.gmra.mxu0 %v4713
      %v4762 = vpop.f32.mrf.mxu0
      %v4763 = vadd.f32 0.0, %v4762
      %v4764 = vpop.f32.mrf.mxu0
      %v4765 = vadd.f32 0.0, %v4764
      %4766 = vmatmul.bf16.gmra.mxu0 %v4716
      %v4767 = vpop.f32.mrf.mxu0
      %v4768 = vadd.f32 0.0, %v4767
      %v4769 = vpop.f32.mrf.mxu0
      %v4770 = vadd.f32 0.0, %v4769
      %4771 = vdwg.mxu0
      %v4772 = vadd.f32 %v4587, %v4728
      %v4773 = vadd.f32 %v4588, %v4730
      %v4774 = vadd.f32 %v4589, %v4733
      %v4775 = vadd.f32 %v4590, %v4735
      %v4776 = vadd.f32 %v4591, %v4738
      %v4777 = vadd.f32 %v4592, %v4740
      %v4778 = vadd.f32 %v4593, %v4743
      %v4779 = vadd.f32 %v4594, %v4745
      %v4780 = vadd.f32 %v4595, %v4748
      %v4781 = vadd.f32 %v4596, %v4750
      %v4782 = vadd.f32 %v4597, %v4753
      %v4783 = vadd.f32 %v4598, %v4755
      %v4784 = vadd.f32 %v4599, %v4758
      %v4785 = vadd.f32 %v4600, %v4760
      %v4786 = vadd.f32 %v4601, %v4763
      %v4787 = vadd.f32 %v4602, %v4765
      %v4788 = vadd.f32 %v4603, %v4768
      %v4789 = vadd.f32 %v4604, %v4770
      %v4790 = vld [vmem:[#allocation2 + $0x10] sm:$0xc]
      %v4791 = vld [vmem:[#allocation2 + $0x14] sm:$0xf]
      %v4792 = vld [vmem:[#allocation2 + $0x18] sm:$0xf]
      %v4793 = vld [vmem:[#allocation2 + $0x1c] sm:$0xf]
      %v4794 = vld [vmem:[#allocation2 + $0x20] sm:$0xf]
      %v4795 = vld [vmem:[#allocation2 + $0x24] sm:$0xf]
      %v4796 = vld [vmem:[#allocation2 + $0x28] sm:$0xf]
      %v4797 = vld [vmem:[#allocation2 + $0x2c] sm:$0xf]
      %v4798 = vld [vmem:[#allocation2 + $0x30] sm:$0xf]
      %v4799 = vld [vmem:[#allocation2 + $0x34] sm:$0xf]
      %v4800 = vld [vmem:[#allocation2 + $0x38] sm:$0xf]
      %v4801 = vld [vmem:[#allocation2 + $0x3c] sm:$0xf]
      %v4802 = vld [vmem:[#allocation2 + $0x40] sm:$0xf]
      %v4803 = vld [vmem:[#allocation2 + $0x44] sm:$0xf]
      %v4804 = vld [vmem:[#allocation2 + $0x48] sm:$0xf]
      %v4805 = vld [vmem:[#allocation2 + $0x4c] sm:$0xf]
      %v4806 = vld [vmem:[#allocation2 + $0x50] sm:$0xf]
      %v4807 = vld [vmem:[#allocation2 + $0x54] sm:$0xf]
      %v4808 = vld [vmem:[#allocation2 + $0x58] sm:$0x7]
      %v4809 = vunpack.c.l.bf16 %v4790
      %v4810 = vunpack.c.l.bf16 %v4791
      %v4811 = vunpack.c.l.bf16 %v4792
      %v4812 = vunpack.c.l.bf16 %v4793
      %v4813 = vunpack.c.l.bf16 %v4794
      %v4814 = vunpack.c.l.bf16 %v4795
      %v4815 = vunpack.c.l.bf16 %v4796
      %v4816 = vunpack.c.l.bf16 %v4797
      %v4817 = vunpack.c.l.bf16 %v4798
      %v4818 = vunpack.c.l.bf16 %v4799
      %v4819 = vunpack.c.l.bf16 %v4800
      %v4820 = vunpack.c.l.bf16 %v4801
      %v4821 = vunpack.c.l.bf16 %v4802
      %v4822 = vunpack.c.l.bf16 %v4803
      %v4823 = vunpack.c.l.bf16 %v4804
      %v4824 = vunpack.c.l.bf16 %v4805
      %v4825 = vunpack.c.l.bf16 %v4806
      %v4826 = vunpack.c.l.bf16 %v4807
      %v4827 = vunpack.c.l.bf16 %v4808
      %vm4847 = vcmask 1042432
      %v4848 = vrot.slane %v4809, 5
      %v4849 = vrot.slane %v4810, 5
      %v4850 = vsel %vm4847, %v4848, %v4849
      %v4851 = vrot.slane %v4811, 5
      %v4852 = vsel %vm4847, %v4849, %v4851
      %v4853 = vrot.slane %v4812, 5
      %v4854 = vsel %vm4847, %v4851, %v4853
      %v4855 = vrot.slane %v4813, 5
      %v4856 = vsel %vm4847, %v4853, %v4855
      %v4857 = vrot.slane %v4814, 5
      %v4858 = vsel %vm4847, %v4855, %v4857
      %v4859 = vrot.slane %v4815, 5
      %v4860 = vsel %vm4847, %v4857, %v4859
      %v4861 = vrot.slane %v4816, 5
      %v4862 = vsel %vm4847, %v4859, %v4861
      %v4863 = vrot.slane %v4817, 5
      %v4864 = vsel %vm4847, %v4861, %v4863
      %v4865 = vrot.slane %v4818, 5
      %v4866 = vsel %vm4847, %v4863, %v4865
      %v4867 = vrot.slane %v4819, 5
      %v4868 = vsel %vm4847, %v4865, %v4867
      %v4869 = vrot.slane %v4820, 5
      %v4870 = vsel %vm4847, %v4867, %v4869
      %v4871 = vrot.slane %v4821, 5
      %v4872 = vsel %vm4847, %v4869, %v4871
      %v4873 = vrot.slane %v4822, 5
      %v4874 = vsel %vm4847, %v4871, %v4873
      %v4875 = vrot.slane %v4823, 5
      %v4876 = vsel %vm4847, %v4873, %v4875
      %v4877 = vrot.slane %v4824, 5
      %v4878 = vsel %vm4847, %v4875, %v4877
      %v4879 = vrot.slane %v4825, 5
      %v4880 = vsel %vm4847, %v4877, %v4879
      %v4881 = vrot.slane %v4826, 5
      %v4882 = vsel %vm4847, %v4879, %v4881
      %v4883 = vrot.slane %v4827, 5
      %v4884 = vsel %vm4847, %v4881, %v4883
      %v4903 = vadd.f32 %v4772, %v4850
      %v4904 = vadd.f32 %v4773, %v4852
      %v4905 = vadd.f32 %v4774, %v4854
      %v4906 = vadd.f32 %v4775, %v4856
      %v4907 = vadd.f32 %v4776, %v4858
      %v4908 = vadd.f32 %v4777, %v4860
      %v4909 = vadd.f32 %v4778, %v4862
      %v4910 = vadd.f32 %v4779, %v4864
      %v4911 = vadd.f32 %v4780, %v4866
      %v4912 = vadd.f32 %v4781, %v4868
      %v4913 = vadd.f32 %v4782, %v4870
      %v4914 = vadd.f32 %v4783, %v4872
      %v4915 = vadd.f32 %v4784, %v4874
      %v4916 = vadd.f32 %v4785, %v4876
      %v4917 = vadd.f32 %v4786, %v4878
      %v4918 = vadd.f32 %v4787, %v4880
      %v4919 = vadd.f32 %v4788, %v4882
      %v4920 = vadd.f32 %v4789, %v4884
      %v4921 = vld [vmem:[%s5] sm:$0x1]
      %v4923 = vperm.slane %v4921, 0
      %v4925 = vadd.f32 %v4903, %v4923
      %v4926 = vadd.f32 %v4904, %v4923
      %v4927 = vadd.f32 %v4905, %v4923
      %v4928 = vadd.f32 %v4906, %v4923
      %v4929 = vadd.f32 %v4907, %v4923
      %v4930 = vadd.f32 %v4908, %v4923
      %v4931 = vadd.f32 %v4909, %v4923
      %v4932 = vadd.f32 %v4910, %v4923
      %v4933 = vadd.f32 %v4911, %v4923
      %v4934 = vadd.f32 %v4912, %v4923
      %v4935 = vadd.f32 %v4913, %v4923
      %v4936 = vadd.f32 %v4914, %v4923
      %v4937 = vadd.f32 %v4915, %v4923
      %v4938 = vadd.f32 %v4916, %v4923
      %v4939 = vadd.f32 %v4917, %v4923
      %v4940 = vadd.f32 %v4918, %v4923
      %v4941 = vadd.f32 %v4919, %v4923
      %v4942 = vadd.f32 %v4920, %v4923
      %v4943 = vmax.f32 %v4925, 0.0
      %v4944 = vmax.f32 %v4926, 0.0
      %v4945 = vmax.f32 %v4927, 0.0
      %v4946 = vmax.f32 %v4928, 0.0
      %v4947 = vmax.f32 %v4929, 0.0
      %v4948 = vmax.f32 %v4930, 0.0
      %v4949 = vmax.f32 %v4931, 0.0
      %v4950 = vmax.f32 %v4932, 0.0
      %v4951 = vmax.f32 %v4933, 0.0
      %v4952 = vmax.f32 %v4934, 0.0
      %v4953 = vmax.f32 %v4935, 0.0
      %v4954 = vmax.f32 %v4936, 0.0
      %v4955 = vmax.f32 %v4937, 0.0
      %v4956 = vmax.f32 %v4938, 0.0
      %v4957 = vmax.f32 %v4939, 0.0
      %v4958 = vmax.f32 %v4940, 0.0
      %v4959 = vmax.f32 %v4941, 0.0
      %v4960 = vmax.f32 %v4942, 0.0
      %v4961 = vpack.c.bf16 %v4943, %v4943
      %v4962 = vpack.c.bf16 %v4944, %v4944
      %v4963 = vpack.c.bf16 %v4945, %v4945
      %v4964 = vpack.c.bf16 %v4946, %v4946
      %v4965 = vpack.c.bf16 %v4947, %v4947
      %v4966 = vpack.c.bf16 %v4948, %v4948
      %v4967 = vpack.c.bf16 %v4949, %v4949
      %v4968 = vpack.c.bf16 %v4950, %v4950
      %v4969 = vpack.c.bf16 %v4951, %v4951
      %v4970 = vpack.c.bf16 %v4952, %v4952
      %v4971 = vpack.c.bf16 %v4953, %v4953
      %v4972 = vpack.c.bf16 %v4954, %v4954
      %v4973 = vpack.c.bf16 %v4955, %v4955
      %v4974 = vpack.c.bf16 %v4956, %v4956
      %v4975 = vpack.c.bf16 %v4957, %v4957
      %v4976 = vpack.c.bf16 %v4958, %v4958
      %v4977 = vpack.c.bf16 %v4959, %v4959
      %v4978 = vpack.c.bf16 %v4960, %v4960
      %4979 = vst.msk [vmem:[%s379] sm:$0xf] %vm400, %v4961
      %4980 = vst.msk [vmem:[%s379 + $0x4] sm:$0xf] %vm400, %v4962
      %4981 = vst.msk [vmem:[%s379 + $0x8] sm:$0xf] %vm400, %v4963
      %4982 = vst.msk [vmem:[%s379 + $0xc] sm:$0xf] %vm400, %v4964
      %4983 = vst.msk [vmem:[%s379 + $0x10] sm:$0xf] %vm400, %v4965
      %4984 = vst.msk [vmem:[%s379 + $0x14] sm:$0xf] %vm400, %v4966
      %4985 = vst.msk [vmem:[%s379 + $0x18] sm:$0xf] %vm400, %v4967
      %4986 = vst.msk [vmem:[%s379 + $0x1c] sm:$0xf] %vm400, %v4968
      %4987 = vst.msk [vmem:[%s379 + $0x20] sm:$0xf] %vm400, %v4969
      %4988 = vst.msk [vmem:[%s379 + $0x24] sm:$0xf] %vm400, %v4970
      %4989 = vst.msk [vmem:[%s379 + $0x28] sm:$0xf] %vm400, %v4971
      %4990 = vst.msk [vmem:[%s379 + $0x2c] sm:$0xf] %vm400, %v4972
      %4991 = vst.msk [vmem:[%s379 + $0x30] sm:$0xf] %vm400, %v4973
      %4992 = vst.msk [vmem:[%s379 + $0x34] sm:$0xf] %vm400, %v4974
      %4993 = vst.msk [vmem:[%s379 + $0x38] sm:$0xf] %vm400, %v4975
      %4994 = vst.msk [vmem:[%s379 + $0x3c] sm:$0xf] %vm400, %v4976
      %4995 = vst.msk [vmem:[%s379 + $0x40] sm:$0xf] %vm400, %v4977
      %4996 = vst.msk [vmem:[%s379 + $0x44] sm:$0xf] %vm400, %v4978
      %s4997 = smul.u32 18, %s23
      %p4998 = scmp.lt.s32.totalorder %s22, 1
      %s4999 = scalar_select %p4998, %s22, 1
      %p5000 = scmp.lt.s32.totalorder %s4997, 35
      %s5001 = scalar_select %p5000, %s4997, 35
      %s5002 = smul.addr %s4999, 36
      %s5003 = sadd.s32 %s5001, %s5002
      %s5004 = smul.addr %s5003, 4
      %s5005 = scalar_lea.vmem %s7, %s5004
      // Predicated region
      $region49: #{tpu_custom_call.1} parent=47 // pred_check
        %p5006 = pneg %p218
      $region50: #{tpu_custom_call.1} parent=47 // pred_check_branch
        %5008 = sbr.rel (%p5006) target = $region52
      $region51: #{tpu_custom_call.1} parent=47 // pred_region
        %s5009 = smul.u32 18, %s23
      $region52: #{tpu_custom_call.1} parent=47 // pred_fallthru
        _
    $region48: #{tpu_custom_call.1} parent=5 // pred_fallthru
      _
    %p5010 = scmp.le.s32.totalorder 2, %s13
    // Predicated region
    $region53: #{tpu_custom_call.1} parent=5 // pred_check
      %p5011 = pneg %p5010
    $region54: #{tpu_custom_call.1} parent=5 // pred_check_branch
      %5013 = sbr.rel (%p5011) target = $region56
    $region55: #{tpu_custom_call.1} parent=5 // pred_region
      %s5014 = ssub.s32 %s13, 2
      // Predicated region
      $region57: #{tpu_custom_call.1} parent=55 // pred_check
        %p5015 = pneg %p224
      $region58: #{tpu_custom_call.1} parent=55 // pred_check_branch
        %5017 = sbr.rel (%p5015) target = $region60
      $region59: #{tpu_custom_call.1} parent=55 // pred_region
        %s5018 = smul.u32 18, %s25
        %p5019 = scmp.lt.s32.totalorder %s24, 1
        %s5020 = scalar_select %p5019, %s24, 1
        %p5021 = scmp.lt.s32.totalorder %s5018, 35
        %s5022 = scalar_select %p5021, %s5018, 35
        %s5023 = smul.addr %s5020, 36
        %s5024 = sadd.s32 %s5022, %s5023
        %s5025 = smul.addr %s5024, 4
        %s5026 = scalar_lea.vmem %s7, %s5025
      $region60: #{tpu_custom_call.1} parent=55 // pred_fallthru
        _
    $region56: #{tpu_custom_call.1} parent=5 // pred_fallthru
      _
  $region6: #{tpu_custom_call.1} parent=0 // loop_footer
    %s17 = sadd.s32 1, %s13
  $region7: #{tpu_custom_call.1} parent=0 // loop_footer_branch
    %12 = sbr.rel target = $region3
  $region8: #{tpu_custom_call.1} parent=0 // loop_exit
    _

</llo_original>
